<compile_context>
chip_gen: v6e
topology: v6e:2x2x1
jax: 0.10.0
libtpu: 0.0.40
codegen_flags: <defaults>
</compile_context>

<pallas_src>
import jax
import jax.numpy as jnp
from jax.experimental import pallas as pl
from jax.experimental.pallas import tpu as pltpu

# ---------------- synthetic config (small shapes) ----------------
B = 2            # batch
LONG_LEN = 16    # long-term memory frames
WORK_LEN = 8     # short-term (work) memory frames
T_TOTAL = LONG_LEN + WORK_LEN
D_RGB = 32       # rgb feature dim
D_FLOW = 32      # flow feature dim
D_MODEL = 32     # transformer width
N_QUERIES = 8    # learnable long-memory compression queries
D_FFN = 64       # feed-forward hidden dim
N_CLASSES = 10   # action classes
CLS_PAD = 128    # lane-dense padded classifier width (sliced to N_CLASSES outside)
LANES = 128      # slab lane width

_ATTN_SCALE = 1.0 / float(D_MODEL) ** 0.5


# ---------------- parameter slab layout (static, module-level) ----------------
# Every parameter lives at lane offset 0 in its own row range; row offsets are
# padded to multiples of 8 so all in-kernel slices are sublane-aligned.
_PARAM_SHAPES = (
    ('fuse_wr', (D_RGB, D_MODEL)),
    ('fuse_wf', (D_FLOW, D_MODEL)),
    ('fuse_b', (1, D_MODEL)),
    ('enc_q_tok', (N_QUERIES, D_MODEL)),
    ('enc_qw', (D_MODEL, D_MODEL)), ('enc_qb', (1, D_MODEL)),
    ('enc_kw', (D_MODEL, D_MODEL)), ('enc_kb', (1, D_MODEL)),
    ('enc_vw', (D_MODEL, D_MODEL)), ('enc_vb', (1, D_MODEL)),
    ('enc_ow', (D_MODEL, D_MODEL)), ('enc_ob', (1, D_MODEL)),
    ('enc_ln1g', (1, D_MODEL)), ('enc_ln1b', (1, D_MODEL)),
    ('enc_f1w', (D_MODEL, D_FFN)), ('enc_f1b', (1, D_FFN)),
    ('enc_f2w', (D_FFN, D_MODEL)), ('enc_f2b', (1, D_MODEL)),
    ('enc_ln2g', (1, D_MODEL)), ('enc_ln2b', (1, D_MODEL)),
    ('dec_sqw', (D_MODEL, D_MODEL)), ('dec_sqb', (1, D_MODEL)),
    ('dec_skw', (D_MODEL, D_MODEL)), ('dec_skb', (1, D_MODEL)),
    ('dec_svw', (D_MODEL, D_MODEL)), ('dec_svb', (1, D_MODEL)),
    ('dec_sow', (D_MODEL, D_MODEL)), ('dec_sob', (1, D_MODEL)),
    ('dec_ln1g', (1, D_MODEL)), ('dec_ln1b', (1, D_MODEL)),
    ('dec_cqw', (D_MODEL, D_MODEL)), ('dec_cqb', (1, D_MODEL)),
    ('dec_ckw', (D_MODEL, D_MODEL)), ('dec_ckb', (1, D_MODEL)),
    ('dec_cvw', (D_MODEL, D_MODEL)), ('dec_cvb', (1, D_MODEL)),
    ('dec_cow', (D_MODEL, D_MODEL)), ('dec_cob', (1, D_MODEL)),
    ('dec_ln2g', (1, D_MODEL)), ('dec_ln2b', (1, D_MODEL)),
    ('dec_f1w', (D_MODEL, D_FFN)), ('dec_f1b', (1, D_FFN)),
    ('dec_f2w', (D_FFN, D_MODEL)), ('dec_f2b', (1, D_MODEL)),
    ('dec_ln3g', (1, D_MODEL)), ('dec_ln3b', (1, D_MODEL)),
    ('cls_w', (D_MODEL, CLS_PAD)), ('cls_b', (1, CLS_PAD)),
)
_SHAPE = dict(_PARAM_SHAPES)


def _build_layout():
    offs, row = {}, 0
    for name, (r, _) in _PARAM_SHAPES:
        offs[name] = row
        row += ((r + 7) // 8) * 8        # sublane-aligned row allocation
    return offs, row


_SLAB_OFF, _SLAB_ROWS = _build_layout()   # 904 rows for the shapes above


def _param(slab_ref, name):
    """Static, sublane-aligned, lane-offset-0 slice of the parameter slab."""
    r0 = _SLAB_OFF[name]
    r, c = _SHAPE[name]
    return slab_ref[r0:r0 + r, 0:c]


# ---------------- in-kernel helpers (operate on traced values) ----------------
def _ln(x, g, b, eps=1e-5):
    mu = jnp.mean(x, axis=-1, keepdims=True)
    var = jnp.mean((x - mu) ** 2, axis=-1, keepdims=True)
    return (x - mu) * jax.lax.rsqrt(var + eps) * g + b


def _attn(q, k, v):
    """q:(B,Tq,D), k/v:(B,Tk,D) -> (B,Tq,D).  Scale is pre-folded into q."""
    s = jnp.einsum('bqd,bkd->bqk', q, k, preferred_element_type=jnp.float32)
    s = s - jnp.max(s, axis=-1, keepdims=True)      # keep max-sub for numerics
    p = jnp.exp(s)
    p = p * pl.reciprocal(jnp.sum(p, axis=-1, keepdims=True), approx=True)
    return jnp.einsum('bqk,bkd->bqd', p, v, preferred_element_type=jnp.float32)


# ---------------- the single fused kernel ----------------
def _lstr_fused_kernel(rgb_ref, flow_ref, slab_ref, out_ref):
    f32 = jnp.float32
    Bk = rgb_ref.shape[0]                 # local batch (1 with grid, B without)

    def w(name):
        return _param(slab_ref, name)

    # ----- feature fusion head: rgb|flow -> d_model, + ReLU -----
    rgb = rgb_ref[...].reshape(Bk * T_TOTAL, D_RGB)
    flow = flow_ref[...].reshape(Bk * T_TOTAL, D_FLOW)
    x = (jnp.dot(rgb, w('fuse_wr'), preferred_element_type=f32)
         + jnp.dot(flow, w('fuse_wf'), preferred_element_type=f32)
         + w('fuse_b'))
    x = jnp.maximum(x, 0.0)
    x3 = x.reshape(Bk, T_TOTAL, D_MODEL)
    long_mem = x3[:, :LONG_LEN]           # (Bk, L, D)  (split at sublane-aligned 16)
    work_mem = x3[:, LONG_LEN:]           # (Bk, S, D)

    # ----- long-term memory compression: learnable-query cross-attention -----
    q_tok = w('enc_q_tok')                                            # (NQ, D)
    # enc_qw / enc_qb are pre-scaled by 1/sqrt(D) at pack time.
    q = jnp.dot(q_tok, w('enc_qw'), preferred_element_type=f32) + w('enc_qb')
    qb = jnp.broadcast_to(q[None], (Bk, N_QUERIES, D_MODEL))
    lm2 = long_mem.reshape(Bk * LONG_LEN, D_MODEL)
    k = (jnp.dot(lm2, w('enc_kw'), preferred_element_type=f32)
         + w('enc_kb')).reshape(Bk, LONG_LEN, D_MODEL)
    v = (jnp.dot(lm2, w('enc_vw'), preferred_element_type=f32)
         + w('enc_vb')).reshape(Bk, LONG_LEN, D_MODEL)
    attn = _attn(qb, k, v).reshape(Bk * N_QUERIES, D_MODEL)
    ca = jnp.dot(attn, w('enc_ow'), preferred_element_type=f32) + w('enc_ob')
    q_res = jnp.broadcast_to(q_tok[None], (Bk, N_QUERIES, D_MODEL)).reshape(
        Bk * N_QUERIES, D_MODEL)
    mem = _ln(q_res + ca, w('enc_ln1g'), w('enc_ln1b'))
    h1 = jnp.maximum(
        jnp.dot(mem, w('enc_f1w'), preferred_element_type=f32) + w('enc_f1b'), 0.0)
    ffo = jnp.dot(h1, w('enc_f2w'), preferred_element_type=f32) + w('enc_f2b')
    mem = _ln(mem + ffo, w('enc_ln2g'), w('enc_ln2b'))                # (Bk*NQ, D)

    # ----- work (short-term) memory decoder: self-attention -----
    wflat = work_mem.reshape(Bk * WORK_LEN, D_MODEL)
    # dec_sqw / dec_sqb pre-scaled by 1/sqrt(D).
    qs = (jnp.dot(wflat, w('dec_sqw'), preferred_element_type=f32)
          + w('dec_sqb')).reshape(Bk, WORK_LEN, D_MODEL)
    ks = (jnp.dot(wflat, w('dec_skw'), preferred_element_type=f32)
          + w('dec_skb')).reshape(Bk, WORK_LEN, D_MODEL)
    vs = (jnp.dot(wflat, w('dec_svw'), preferred_element_type=f32)
          + w('dec_svb')).reshape(Bk, WORK_LEN, D_MODEL)
    sa = _attn(qs, ks, vs).reshape(Bk * WORK_LEN, D_MODEL)
    sa = jnp.dot(sa, w('dec_sow'), preferred_element_type=f32) + w('dec_sob')
    h = _ln(wflat + sa, w('dec_ln1g'), w('dec_ln1b'))

    # ----- cross-attention over the compressed long-term memory -----
    # dec_cqw / dec_cqb pre-scaled by 1/sqrt(D).
    qc = (jnp.dot(h, w('dec_cqw'), preferred_element_type=f32)
          + w('dec_cqb')).reshape(Bk, WORK_LEN, D_MODEL)
    kc = (jnp.dot(mem, w('dec_ckw'), preferred_element_type=f32)
          + w('dec_ckb')).reshape(Bk, N_QUERIES, D_MODEL)
    vc = (jnp.dot(mem, w('dec_cvw'), preferred_element_type=f32)
          + w('dec_cvb')).reshape(Bk, N_QUERIES, D_MODEL)
    cc = _attn(qc, kc, vc).reshape(Bk * WORK_LEN, D_MODEL)
    cc = jnp.dot(cc, w('dec_cow'), preferred_element_type=f32) + w('dec_cob')
    h = _ln(h + cc, w('dec_ln2g'), w('dec_ln2b'))

    # ----- decoder FFN -----
    h1 = jnp.maximum(
        jnp.dot(h, w('dec_f1w'), preferred_element_type=f32) + w('dec_f1b'), 0.0)
    ffo = jnp.dot(h1, w('dec_f2w'), preferred_element_type=f32) + w('dec_f2b')
    h = _ln(h + ffo, w('dec_ln3g'), w('dec_ln3b'))

    # ----- per-frame classifier: lane-dense 2-D slab store -----
    logits = jnp.dot(h, w('cls_w'), preferred_element_type=f32) + w('cls_b')
    out_ref[...] = logits                  # (Bk*WORK_LEN, CLS_PAD)


# ---------------- parameters (deterministic, in-script) ----------------
def init_params(key):
    def dense(k, din, dout):
        return (jax.random.normal(k, (din, dout), jnp.float32) * 0.02,
                jnp.zeros((dout,), jnp.float32))

    keys = jax.random.split(key, 20)
    p = {}
    p['fuse_w'], p['fuse_b'] = dense(keys[0], D_RGB + D_FLOW, D_MODEL)
    p['enc_queries'] = jax.random.normal(keys[1], (N_QUERIES, D_MODEL)) * 0.02
    p['enc_q_w'], p['enc_q_b'] = dense(keys[2], D_MODEL, D_MODEL)
    p['enc_k_w'], p['enc_k_b'] = dense(keys[3], D_MODEL, D_MODEL)
    p['enc_v_w'], p['enc_v_b'] = dense(keys[4], D_MODEL, D_MODEL)
    p['enc_o_w'], p['enc_o_b'] = dense(keys[5], D_MODEL, D_MODEL)
    p['enc_ln1_g'] = jnp.ones((D_MODEL,)); p['enc_ln1_b'] = jnp.zeros((D_MODEL,))
    p['enc_ffn_w1'], p['enc_ffn_b1'] = dense(keys[6], D_MODEL, D_FFN)
    p['enc_ffn_w2'], p['enc_ffn_b2'] = dense(keys[7], D_FFN, D_MODEL)
    p['enc_ln2_g'] = jnp.ones((D_MODEL,)); p['enc_ln2_b'] = jnp.zeros((D_MODEL,))
    p['dec_sq_w'], p['dec_sq_b'] = dense(keys[8], D_MODEL, D_MODEL)
    p['dec_sk_w'], p['dec_sk_b'] = dense(keys[9], D_MODEL, D_MODEL)
    p['dec_sv_w'], p['dec_sv_b'] = dense(keys[10], D_MODEL, D_MODEL)
    p['dec_so_w'], p['dec_so_b'] = dense(keys[11], D_MODEL, D_MODEL)
    p['dec_ln1_g'] = jnp.ones((D_MODEL,)); p['dec_ln1_b'] = jnp.zeros((D_MODEL,))
    p['dec_cq_w'], p['dec_cq_b'] = dense(keys[12], D_MODEL, D_MODEL)
    p['dec_ck_w'], p['dec_ck_b'] = dense(keys[13], D_MODEL, D_MODEL)
    p['dec_cv_w'], p['dec_cv_b'] = dense(keys[14], D_MODEL, D_MODEL)
    p['dec_co_w'], p['dec_co_b'] = dense(keys[15], D_MODEL, D_MODEL)
    p['dec_ln2_g'] = jnp.ones((D_MODEL,)); p['dec_ln2_b'] = jnp.zeros((D_MODEL,))
    p['dec_ffn_w1'], p['dec_ffn_b1'] = dense(keys[16], D_MODEL, D_FFN)
    p['dec_ffn_w2'], p['dec_ffn_b2'] = dense(keys[17], D_FFN, D_MODEL)
    p['dec_ln3_g'] = jnp.ones((D_MODEL,)); p['dec_ln3_b'] = jnp.zeros((D_MODEL,))
    p['cls_w'], p['cls_b'] = dense(keys[18], D_MODEL, N_CLASSES)
    return p


def pack_params(p):
    """Build the single lane-dense (rows, 128) parameter slab.
    Attention scale is folded into Q projections; classifier is zero-padded to 128."""
    cls_w = jnp.zeros((D_MODEL, CLS_PAD), jnp.float32).at[:, :N_CLASSES].set(p['cls_w'])
    cls_b = jnp.zeros((CLS_PAD,), jnp.float32).at[:N_CLASSES].set(p['cls_b'])
    entries = {
        'fuse_wr': p['fuse_w'][:D_RGB], 'fuse_wf': p['fuse_w'][D_RGB:],
        'fuse_b': p['fuse_b'],
        'enc_q_tok': p['enc_queries'],
        'enc_qw': p['enc_q_w'] * _ATTN_SCALE, 'enc_qb': p['enc_q_b'] * _ATTN_SCALE,
        'enc_kw': p['enc_k_w'], 'enc_kb': p['enc_k_b'],
        'enc_vw': p['enc_v_w'], 'enc_vb': p['enc_v_b'],
        'enc_ow': p['enc_o_w'], 'enc_ob': p['enc_o_b'],
        'enc_ln1g': p['enc_ln1_g'], 'enc_ln1b': p['enc_ln1_b'],
        'enc_f1w': p['enc_ffn_w1'], 'enc_f1b': p['enc_ffn_b1'],
        'enc_f2w': p['enc_ffn_w2'], 'enc_f2b': p['enc_ffn_b2'],
        'enc_ln2g': p['enc_ln2_g'], 'enc_ln2b': p['enc_ln2_b'],
        'dec_sqw': p['dec_sq_w'] * _ATTN_SCALE, 'dec_sqb': p['dec_sq_b'] * _ATTN_SCALE,
        'dec_skw': p['dec_sk_w'], 'dec_skb': p['dec_sk_b'],
        'dec_svw': p['dec_sv_w'], 'dec_svb': p['dec_sv_b'],
        'dec_sow': p['dec_so_w'], 'dec_sob': p['dec_so_b'],
        'dec_ln1g': p['dec_ln1_g'], 'dec_ln1b': p['dec_ln1_b'],
        'dec_cqw': p['dec_cq_w'] * _ATTN_SCALE, 'dec_cqb': p['dec_cq_b'] * _ATTN_SCALE,
        'dec_ckw': p['dec_ck_w'], 'dec_ckb': p['dec_ck_b'],
        'dec_cvw': p['dec_cv_w'], 'dec_cvb': p['dec_cv_b'],
        'dec_cow': p['dec_co_w'], 'dec_cob': p['dec_co_b'],
        'dec_ln2g': p['dec_ln2_g'], 'dec_ln2b': p['dec_ln2_b'],
        'dec_f1w': p['dec_ffn_w1'], 'dec_f1b': p['dec_ffn_b1'],
        'dec_f2w': p['dec_ffn_w2'], 'dec_f2b': p['dec_ffn_b2'],
        'dec_ln3g': p['dec_ln3_g'], 'dec_ln3b': p['dec_ln3_b'],
        'cls_w': cls_w, 'cls_b': cls_b,
    }
    slab = jnp.zeros((_SLAB_ROWS, LANES), jnp.float32)
    for name, (r, c) in _PARAM_SHAPES:
        val = jnp.asarray(entries[name], jnp.float32).reshape(r, c)
        off = _SLAB_OFF[name]
        slab = slab.at[off:off + r, :c].set(val)
    return slab


# ---------------- TPU-generation dispatch ----------------
def _on_v7x():
    try:
        kind = jax.devices()[0].device_kind.lower()
    except Exception:
        return False
    return ('v7' in kind) or ('7x' in kind)


# ---------------- LSTR forward (== Lstr.forward(rgb, flow, mask)) ----------------
def lstr_forward(slab, rgb, flow, mask=None):
    # TODO(synk): attention padding `mask` not applied (mask=None in this synthetic example).
    del mask
    out_shape = jax.ShapeDtypeStruct((B * WORK_LEN, CLS_PAD), jnp.float32)
    if _on_v7x():
        # Two TensorCores on v7x: split the batch across cores.
        out2d = pl.pallas_call(
            _lstr_fused_kernel,
            out_shape=out_shape,
            grid=(B,),
            in_specs=[
                pl.BlockSpec((1, T_TOTAL, D_RGB), lambda i: (i, 0, 0)),
                pl.BlockSpec((1, T_TOTAL, D_FLOW), lambda i: (i, 0, 0)),
                pl.BlockSpec((_SLAB_ROWS, LANES), lambda i: (0, 0)),
            ],
            out_specs=pl.BlockSpec((WORK_LEN, CLS_PAD), lambda i: (i, 0)),
            compiler_params=pltpu.CompilerParams(dimension_semantics=("parallel",)),
        )(rgb, flow, slab)
    else:
        # Single TensorCore (v5e/v6e): gridless single-shot call, 3 prologue DMAs.
        out2d = pl.pallas_call(
            _lstr_fused_kernel,
            out_shape=out_shape,
            in_specs=[pl.BlockSpec(memory_space=pltpu.MemorySpace.VMEM)] * 3,
            out_specs=pl.BlockSpec(memory_space=pltpu.MemorySpace.VMEM),
        )(rgb, flow, slab)
    return out2d.reshape(B, WORK_LEN, CLS_PAD)[:, :, :N_CLASSES]


# ---------------- pure-JAX reference (for correctness check) ----------------
def lstr_reference(p, rgb, flow):
    def ln(x, g, b, eps=1e-5):
        mu = jnp.mean(x, axis=-1, keepdims=True)
        var = jnp.mean((x - mu) ** 2, axis=-1, keepdims=True)
        return (x - mu) * jax.lax.rsqrt(var + eps) * g + b

    def attn(q, k, v):
        s = jnp.einsum('bqd,bkd->bqk', q, k) * _ATTN_SCALE
        return jnp.einsum('bqk,bkd->bqd', jax.nn.softmax(s, axis=-1), v)

    B_ = rgb.shape[0]
    fused = jnp.concatenate([rgb, flow], axis=-1)
    x = jax.nn.relu(fused @ p['fuse_w'] + p['fuse_b'])
    long_mem, work_mem = x[:, :LONG_LEN], x[:, LONG_LEN:]

    enc_q = jnp.broadcast_to(p['enc_queries'][None], (B_, N_QUERIES, D_MODEL))
    q = enc_q @ p['enc_q_w'] + p['enc_q_b']
    k = long_mem @ p['enc_k_w'] + p['enc_k_b']
    v = long_mem @ p['enc_v_w'] + p['enc_v_b']
    ca = attn(q, k, v) @ p['enc_o_w'] + p['enc_o_b']
    mem = ln(enc_q + ca, p['enc_ln1_g'], p['enc_ln1_b'])
    f = jax.nn.relu(mem @ p['enc_ffn_w1'] + p['enc_ffn_b1']) @ p['enc_ffn_w2'] + p['enc_ffn_b2']
    mem = ln(mem + f, p['enc_ln2_g'], p['enc_ln2_b'])

    qs = work_mem @ p['dec_sq_w'] + p['dec_sq_b']
    ks = work_mem @ p['dec_sk_w'] + p['dec_sk_b']
    vs = work_mem @ p['dec_sv_w'] + p['dec_sv_b']
    sa = attn(qs, ks, vs) @ p['dec_so_w'] + p['dec_so_b']
    h = ln(work_mem + sa, p['dec_ln1_g'], p['dec_ln1_b'])

    qc = h @ p['dec_cq_w'] + p['dec_cq_b']
    kc = mem @ p['dec_ck_w'] + p['dec_ck_b']
    vc = mem @ p['dec_cv_w'] + p['dec_cv_b']
    cc = attn(qc, kc, vc) @ p['dec_co_w'] + p['dec_co_b']
    h = ln(h + cc, p['dec_ln2_g'], p['dec_ln2_b'])

    f = jax.nn.relu(h @ p['dec_ffn_w1'] + p['dec_ffn_b1']) @ p['dec_ffn_w2'] + p['dec_ffn_b2']
    h = ln(h + f, p['dec_ln3_g'], p['dec_ln3_b'])
    return h @ p['cls_w'] + p['cls_b']


if __name__ == "__main__":
    key = jax.random.PRNGKey(0)
    k_rgb, k_flow, k_params = jax.random.split(key, 3)

    rgb = jax.random.normal(k_rgb, (B, T_TOTAL, D_RGB), jnp.float32)
    flow = jax.random.normal(k_flow, (B, T_TOTAL, D_FLOW), jnp.float32)
    params = init_params(k_params)
    slab = pack_params(params)     # single lane-dense parameter slab (host-side, once)

    out = jax.jit(lstr_forward)(slab, rgb, flow, None)
    out = jax.block_until_ready(out)

    assert out.shape == (B, WORK_LEN, N_CLASSES)
    assert jnp.all(jnp.isfinite(out))
    ref = lstr_reference(params, rgb, flow)
    assert jnp.allclose(out, ref, rtol=5e-2, atol=2e-3), float(jnp.max(jnp.abs(out - ref)))
    print("KERNEL_OK")
</pallas_src>

<mosaic_0001>
module attributes {stable_mosaic.version = 11 : i64} {
  func.func @_lstr_fused_kernel(%arg0: memref<2x24x32xf32, #tpu.memory_space<vmem>>, %arg1: memref<2x24x32xf32, #tpu.memory_space<vmem>>, %arg2: memref<904x128xf32, #tpu.memory_space<vmem>>, %arg3: memref<16x128xf32, #tpu.memory_space<vmem>>) attributes {dimension_semantics = [], scalar_prefetch = 0 : i64, scratch_operands = 0 : i64, tpu.core_type = #tpu.core_type<tc>} {
    %c0 = arith.constant 0 : index
    %c0_0 = arith.constant 0 : index
    %c0_1 = arith.constant 0 : index
    %0 = vector.load %arg0[%c0, %c0_0, %c0_1] : memref<2x24x32xf32, #tpu.memory_space<vmem>>, vector<2x24x32xf32>
    %1 = vector.shape_cast %0 : vector<2x24x32xf32> to vector<48x32xf32>
    %c0_2 = arith.constant 0 : index
    %c0_3 = arith.constant 0 : index
    %c0_4 = arith.constant 0 : index
    %2 = vector.load %arg1[%c0_2, %c0_3, %c0_4] : memref<2x24x32xf32, #tpu.memory_space<vmem>>, vector<2x24x32xf32>
    %3 = vector.shape_cast %2 : vector<2x24x32xf32> to vector<48x32xf32>
    %c0_5 = arith.constant 0 : index
    %c0_6 = arith.constant 0 : index
    %4 = vector.load %arg2[%c0_5, %c0_6] : memref<904x128xf32, #tpu.memory_space<vmem>>, vector<32x32xf32>
    %cst = arith.constant dense<0.000000e+00> : vector<48x32xf32>
    %5 = tpu.matmul %1, %4, %cst {dimension_numbers = #tpu.dot_dimension_numbers<[1], [0], [0], [1], [0, 0, 1, 1], [], []>} : vector<48x32xf32>, vector<32x32xf32>, vector<48x32xf32> -> vector<48x32xf32>
    %c32 = arith.constant 32 : index
    %c0_7 = arith.constant 0 : index
    %6 = vector.load %arg2[%c32, %c0_7] : memref<904x128xf32, #tpu.memory_space<vmem>>, vector<32x32xf32>
    %cst_8 = arith.constant dense<0.000000e+00> : vector<48x32xf32>
    %7 = tpu.matmul %3, %6, %cst_8 {dimension_numbers = #tpu.dot_dimension_numbers<[1], [0], [0], [1], [0, 0, 1, 1], [], []>} : vector<48x32xf32>, vector<32x32xf32>, vector<48x32xf32> -> vector<48x32xf32>
    %8 = arith.addf %5, %7 : vector<48x32xf32>
    %c64 = arith.constant 64 : index
    %c0_9 = arith.constant 0 : index
    %9 = vector.load %arg2[%c64, %c0_9] : memref<904x128xf32, #tpu.memory_space<vmem>>, vector<1x32xf32>
    %10 = vector.broadcast %9 : vector<1x32xf32> to vector<48x32xf32>
    %11 = arith.addf %8, %10 : vector<48x32xf32>
    %cst_10 = arith.constant 0.000000e+00 : f32
    %12 = vector.broadcast %cst_10 : f32 to vector<48x32xf32>
    %13 = arith.maximumf %11, %12 : vector<48x32xf32>
    %14 = vector.shape_cast %13 : vector<48x32xf32> to vector<2x24x32xf32>
    %15 = vector.extract_strided_slice %14 {offsets = [0, 0, 0], sizes = [2, 16, 32], strides = [1, 1, 1]} : vector<2x24x32xf32> to vector<2x16x32xf32>
    %16 = vector.extract_strided_slice %14 {offsets = [0, 16, 0], sizes = [2, 8, 32], strides = [1, 1, 1]} : vector<2x24x32xf32> to vector<2x8x32xf32>
    %c72 = arith.constant 72 : index
    %c0_11 = arith.constant 0 : index
    %17 = vector.load %arg2[%c72, %c0_11] : memref<904x128xf32, #tpu.memory_space<vmem>>, vector<8x32xf32>
    %c80 = arith.constant 80 : index
    %c0_12 = arith.constant 0 : index
    %18 = vector.load %arg2[%c80, %c0_12] : memref<904x128xf32, #tpu.memory_space<vmem>>, vector<32x32xf32>
    %cst_13 = arith.constant dense<0.000000e+00> : vector<8x32xf32>
    %19 = tpu.matmul %17, %18, %cst_13 {dimension_numbers = #tpu.dot_dimension_numbers<[1], [0], [0], [1], [0, 0, 1, 1], [], []>} : vector<8x32xf32>, vector<32x32xf32>, vector<8x32xf32> -> vector<8x32xf32>
    %c112 = arith.constant 112 : index
    %c0_14 = arith.constant 0 : index
    %20 = vector.load %arg2[%c112, %c0_14] : memref<904x128xf32, #tpu.memory_space<vmem>>, vector<1x32xf32>
    %21 = vector.broadcast %20 : vector<1x32xf32> to vector<8x32xf32>
    %22 = arith.addf %19, %21 : vector<8x32xf32>
    %23 = vector.shape_cast %22 : vector<8x32xf32> to vector<1x8x32xf32>
    %24 = vector.shape_cast %23 : vector<1x8x32xf32> to vector<1x8x32xf32>
    %25 = vector.broadcast %24 : vector<1x8x32xf32> to vector<2x8x32xf32>
    %26 = vector.shape_cast %15 : vector<2x16x32xf32> to vector<32x32xf32>
    %c120 = arith.constant 120 : index
    %c0_15 = arith.constant 0 : index
    %27 = vector.load %arg2[%c120, %c0_15] : memref<904x128xf32, #tpu.memory_space<vmem>>, vector<32x32xf32>
    %cst_16 = arith.constant dense<0.000000e+00> : vector<32x32xf32>
    %28 = tpu.matmul %26, %27, %cst_16 {dimension_numbers = #tpu.dot_dimension_numbers<[1], [0], [0], [1], [0, 0, 1, 1], [], []>} : vector<32x32xf32>, vector<32x32xf32>, vector<32x32xf32> -> vector<32x32xf32>
    %c152 = arith.constant 152 : index
    %c0_17 = arith.constant 0 : index
    %29 = vector.load %arg2[%c152, %c0_17] : memref<904x128xf32, #tpu.memory_space<vmem>>, vector<1x32xf32>
    %30 = vector.broadcast %29 : vector<1x32xf32> to vector<32x32xf32>
    %31 = arith.addf %28, %30 : vector<32x32xf32>
    %32 = vector.shape_cast %31 : vector<32x32xf32> to vector<2x16x32xf32>
    %c160 = arith.constant 160 : index
    %c0_18 = arith.constant 0 : index
    %33 = vector.load %arg2[%c160, %c0_18] : memref<904x128xf32, #tpu.memory_space<vmem>>, vector<32x32xf32>
    %cst_19 = arith.constant dense<0.000000e+00> : vector<32x32xf32>
    %34 = tpu.matmul %26, %33, %cst_19 {dimension_numbers = #tpu.dot_dimension_numbers<[1], [0], [0], [1], [0, 0, 1, 1], [], []>} : vector<32x32xf32>, vector<32x32xf32>, vector<32x32xf32> -> vector<32x32xf32>
    %c192 = arith.constant 192 : index
    %c0_20 = arith.constant 0 : index
    %35 = vector.load %arg2[%c192, %c0_20] : memref<904x128xf32, #tpu.memory_space<vmem>>, vector<1x32xf32>
    %36 = vector.broadcast %35 : vector<1x32xf32> to vector<32x32xf32>
    %37 = arith.addf %34, %36 : vector<32x32xf32>
    %38 = vector.shape_cast %37 : vector<32x32xf32> to vector<2x16x32xf32>
    "tpu.trace_start"() <{level = 10 : i32, message = "bqd,bkd->bqk"}> : () -> ()
    %cst_21 = arith.constant dense<0.000000e+00> : vector<2x8x16xf32>
    %39 = tpu.matmul %25, %32, %cst_21 {dimension_numbers = #tpu.dot_dimension_numbers<[2], [2], [1], [1], [0, 0, 0, 1, 1, 1], [0], [0]>} : vector<2x8x32xf32>, vector<2x16x32xf32>, vector<2x8x16xf32> -> vector<2x8x16xf32>
    "tpu.trace_stop"() : () -> ()
    %cst_22 = arith.constant dense<0xFF800000> : vector<2x8xf32>
    %40 = vector.multi_reduction <maximumf>, %39, %cst_22 [2] : vector<2x8x16xf32> to vector<2x8xf32>
    %41 = vector.shape_cast %40 : vector<2x8xf32> to vector<2x8x1xf32>
    %42 = vector.broadcast %41 : vector<2x8x1xf32> to vector<2x8x16xf32>
    %43 = arith.subf %39, %42 : vector<2x8x16xf32>
    %44 = math.exp %43 : vector<2x8x16xf32>
    %cst_23 = arith.constant dense<0.000000e+00> : vector<2x8xf32>
    %45 = vector.multi_reduction <add>, %44, %cst_23 [2] : vector<2x8x16xf32> to vector<2x8xf32>
    %46 = vector.shape_cast %45 : vector<2x8xf32> to vector<2x8x1xf32>
    %47 = tpu.reciprocal %46 {approx = true} : vector<2x8x1xf32> -> vector<2x8x1xf32>
    %48 = vector.broadcast %47 : vector<2x8x1xf32> to vector<2x8x16xf32>
    %49 = arith.mulf %44, %48 : vector<2x8x16xf32>
    "tpu.trace_start"() <{level = 10 : i32, message = "bqk,bkd->bqd"}> : () -> ()
    %cst_24 = arith.constant dense<0.000000e+00> : vector<2x8x32xf32>
    %50 = tpu.matmul %49, %38, %cst_24 {dimension_numbers = #tpu.dot_dimension_numbers<[2], [1], [1], [2], [0, 0, 0, 1, 1, 2], [0], [0]>} : vector<2x8x16xf32>, vector<2x16x32xf32>, vector<2x8x32xf32> -> vector<2x8x32xf32>
    "tpu.trace_stop"() : () -> ()
    %51 = vector.shape_cast %50 : vector<2x8x32xf32> to vector<16x32xf32>
    %c200 = arith.constant 200 : index
    %c0_25 = arith.constant 0 : index
    %52 = vector.load %arg2[%c200, %c0_25] : memref<904x128xf32, #tpu.memory_space<vmem>>, vector<32x32xf32>
    %cst_26 = arith.constant dense<0.000000e+00> : vector<16x32xf32>
    %53 = tpu.matmul %51, %52, %cst_26 {dimension_numbers = #tpu.dot_dimension_numbers<[1], [0], [0], [1], [0, 0, 1, 1], [], []>} : vector<16x32xf32>, vector<32x32xf32>, vector<16x32xf32> -> vector<16x32xf32>
    %c232 = arith.constant 232 : index
    %c0_27 = arith.constant 0 : index
    %54 = vector.load %arg2[%c232, %c0_27] : memref<904x128xf32, #tpu.memory_space<vmem>>, vector<1x32xf32>
    %55 = vector.broadcast %54 : vector<1x32xf32> to vector<16x32xf32>
    %56 = arith.addf %53, %55 : vector<16x32xf32>
    %57 = vector.shape_cast %17 : vector<8x32xf32> to vector<1x8x32xf32>
    %58 = vector.shape_cast %57 : vector<1x8x32xf32> to vector<1x8x32xf32>
    %59 = vector.broadcast %58 : vector<1x8x32xf32> to vector<2x8x32xf32>
    %60 = vector.shape_cast %59 : vector<2x8x32xf32> to vector<16x32xf32>
    %61 = arith.addf %60, %56 : vector<16x32xf32>
    %c240 = arith.constant 240 : index
    %c0_28 = arith.constant 0 : index
    %62 = vector.load %arg2[%c240, %c0_28] : memref<904x128xf32, #tpu.memory_space<vmem>>, vector<1x32xf32>
    %c248 = arith.constant 248 : index
    %c0_29 = arith.constant 0 : index
    %63 = vector.load %arg2[%c248, %c0_29] : memref<904x128xf32, #tpu.memory_space<vmem>>, vector<1x32xf32>
    %cst_30 = arith.constant dense<0.000000e+00> : vector<16xf32>
    %64 = vector.multi_reduction <add>, %61, %cst_30 [1] : vector<16x32xf32> to vector<16xf32>
    %65 = vector.shape_cast %64 : vector<16xf32> to vector<16x1xf32>
    %cst_31 = arith.constant 3.200000e+01 : f32
    %66 = vector.broadcast %cst_31 : f32 to vector<16x1xf32>
    %67 = arith.divf %65, %66 : vector<16x1xf32>
    %68 = vector.broadcast %67 : vector<16x1xf32> to vector<16x32xf32>
    %69 = arith.subf %61, %68 : vector<16x32xf32>
    %70 = arith.mulf %69, %69 : vector<16x32xf32>
    %cst_32 = arith.constant dense<0.000000e+00> : vector<16xf32>
    %71 = vector.multi_reduction <add>, %70, %cst_32 [1] : vector<16x32xf32> to vector<16xf32>
    %72 = vector.shape_cast %71 : vector<16xf32> to vector<16x1xf32>
    %cst_33 = arith.constant 3.200000e+01 : f32
    %73 = vector.broadcast %cst_33 : f32 to vector<16x1xf32>
    %74 = arith.divf %72, %73 : vector<16x1xf32>
    %75 = vector.broadcast %67 : vector<16x1xf32> to vector<16x32xf32>
    %76 = arith.subf %61, %75 : vector<16x32xf32>
    %cst_34 = arith.constant 9.99999974E-6 : f32
    %77 = vector.broadcast %cst_34 : f32 to vector<16x1xf32>
    %78 = arith.addf %74, %77 : vector<16x1xf32>
    %79 = math.rsqrt %78 : vector<16x1xf32>
    %80 = vector.broadcast %79 : vector<16x1xf32> to vector<16x32xf32>
    %81 = arith.mulf %76, %80 : vector<16x32xf32>
    %82 = vector.broadcast %62 : vector<1x32xf32> to vector<16x32xf32>
    %83 = arith.mulf %81, %82 : vector<16x32xf32>
    %84 = vector.broadcast %63 : vector<1x32xf32> to vector<16x32xf32>
    %85 = arith.addf %83, %84 : vector<16x32xf32>
    %c256 = arith.constant 256 : index
    %c0_35 = arith.constant 0 : index
    %86 = vector.load %arg2[%c256, %c0_35] : memref<904x128xf32, #tpu.memory_space<vmem>>, vector<32x64xf32>
    %cst_36 = arith.constant dense<0.000000e+00> : vector<16x64xf32>
    %87 = tpu.matmul %85, %86, %cst_36 {dimension_numbers = #tpu.dot_dimension_numbers<[1], [0], [0], [1], [0, 0, 1, 1], [], []>} : vector<16x32xf32>, vector<32x64xf32>, vector<16x64xf32> -> vector<16x64xf32>
    %c288 = arith.constant 288 : index
    %c0_37 = arith.constant 0 : index
    %88 = vector.load %arg2[%c288, %c0_37] : memref<904x128xf32, #tpu.memory_space<vmem>>, vector<1x64xf32>
    %89 = vector.broadcast %88 : vector<1x64xf32> to vector<16x64xf32>
    %90 = arith.addf %87, %89 : vector<16x64xf32>
    %cst_38 = arith.constant 0.000000e+00 : f32
    %91 = vector.broadcast %cst_38 : f32 to vector<16x64xf32>
    %92 = arith.maximumf %90, %91 : vector<16x64xf32>
    %c296 = arith.constant 296 : index
    %c0_39 = arith.constant 0 : index
    %93 = vector.load %arg2[%c296, %c0_39] : memref<904x128xf32, #tpu.memory_space<vmem>>, vector<64x32xf32>
    %cst_40 = arith.constant dense<0.000000e+00> : vector<16x32xf32>
    %94 = tpu.matmul %92, %93, %cst_40 {dimension_numbers = #tpu.dot_dimension_numbers<[1], [0], [0], [1], [0, 0, 1, 1], [], []>} : vector<16x64xf32>, vector<64x32xf32>, vector<16x32xf32> -> vector<16x32xf32>
    %c360 = arith.constant 360 : index
    %c0_41 = arith.constant 0 : index
    %95 = vector.load %arg2[%c360, %c0_41] : memref<904x128xf32, #tpu.memory_space<vmem>>, vector<1x32xf32>
    %96 = vector.broadcast %95 : vector<1x32xf32> to vector<16x32xf32>
    %97 = arith.addf %94, %96 : vector<16x32xf32>
    %98 = arith.addf %85, %97 : vector<16x32xf32>
    %c368 = arith.constant 368 : index
    %c0_42 = arith.constant 0 : index
    %99 = vector.load %arg2[%c368, %c0_42] : memref<904x128xf32, #tpu.memory_space<vmem>>, vector<1x32xf32>
    %c376 = arith.constant 376 : index
    %c0_43 = arith.constant 0 : index
    %100 = vector.load %arg2[%c376, %c0_43] : memref<904x128xf32, #tpu.memory_space<vmem>>, vector<1x32xf32>
    %cst_44 = arith.constant dense<0.000000e+00> : vector<16xf32>
    %101 = vector.multi_reduction <add>, %98, %cst_44 [1] : vector<16x32xf32> to vector<16xf32>
    %102 = vector.shape_cast %101 : vector<16xf32> to vector<16x1xf32>
    %cst_45 = arith.constant 3.200000e+01 : f32
    %103 = vector.broadcast %cst_45 : f32 to vector<16x1xf32>
    %104 = arith.divf %102, %103 : vector<16x1xf32>
    %105 = vector.broadcast %104 : vector<16x1xf32> to vector<16x32xf32>
    %106 = arith.subf %98, %105 : vector<16x32xf32>
    %107 = arith.mulf %106, %106 : vector<16x32xf32>
    %cst_46 = arith.constant dense<0.000000e+00> : vector<16xf32>
    %108 = vector.multi_reduction <add>, %107, %cst_46 [1] : vector<16x32xf32> to vector<16xf32>
    %109 = vector.shape_cast %108 : vector<16xf32> to vector<16x1xf32>
    %cst_47 = arith.constant 3.200000e+01 : f32
    %110 = vector.broadcast %cst_47 : f32 to vector<16x1xf32>
    %111 = arith.divf %109, %110 : vector<16x1xf32>
    %112 = vector.broadcast %104 : vector<16x1xf32> to vector<16x32xf32>
    %113 = arith.subf %98, %112 : vector<16x32xf32>
    %cst_48 = arith.constant 9.99999974E-6 : f32
    %114 = vector.broadcast %cst_48 : f32 to vector<16x1xf32>
    %115 = arith.addf %111, %114 : vector<16x1xf32>
    %116 = math.rsqrt %115 : vector<16x1xf32>
    %117 = vector.broadcast %116 : vector<16x1xf32> to vector<16x32xf32>
    %118 = arith.mulf %113, %117 : vector<16x32xf32>
    %119 = vector.broadcast %99 : vector<1x32xf32> to vector<16x32xf32>
    %120 = arith.mulf %118, %119 : vector<16x32xf32>
    %121 = vector.broadcast %100 : vector<1x32xf32> to vector<16x32xf32>
    %122 = arith.addf %120, %121 : vector<16x32xf32>
    %123 = vector.shape_cast %16 : vector<2x8x32xf32> to vector<16x32xf32>
    %c384 = arith.constant 384 : index
    %c0_49 = arith.constant 0 : index
    %124 = vector.load %arg2[%c384, %c0_49] : memref<904x128xf32, #tpu.memory_space<vmem>>, vector<32x32xf32>
    %cst_50 = arith.constant dense<0.000000e+00> : vector<16x32xf32>
    %125 = tpu.matmul %123, %124, %cst_50 {dimension_numbers = #tpu.dot_dimension_numbers<[1], [0], [0], [1], [0, 0, 1, 1], [], []>} : vector<16x32xf32>, vector<32x32xf32>, vector<16x32xf32> -> vector<16x32xf32>
    %c416 = arith.constant 416 : index
    %c0_51 = arith.constant 0 : index
    %126 = vector.load %arg2[%c416, %c0_51] : memref<904x128xf32, #tpu.memory_space<vmem>>, vector<1x32xf32>
    %127 = vector.broadcast %126 : vector<1x32xf32> to vector<16x32xf32>
    %128 = arith.addf %125, %127 : vector<16x32xf32>
    %129 = vector.shape_cast %128 : vector<16x32xf32> to vector<2x8x32xf32>
    %c424 = arith.constant 424 : index
    %c0_52 = arith.constant 0 : index
    %130 = vector.load %arg2[%c424, %c0_52] : memref<904x128xf32, #tpu.memory_space<vmem>>, vector<32x32xf32>
    %cst_53 = arith.constant dense<0.000000e+00> : vector<16x32xf32>
    %131 = tpu.matmul %123, %130, %cst_53 {dimension_numbers = #tpu.dot_dimension_numbers<[1], [0], [0], [1], [0, 0, 1, 1], [], []>} : vector<16x32xf32>, vector<32x32xf32>, vector<16x32xf32> -> vector<16x32xf32>
    %c456 = arith.constant 456 : index
    %c0_54 = arith.constant 0 : index
    %132 = vector.load %arg2[%c456, %c0_54] : memref<904x128xf32, #tpu.memory_space<vmem>>, vector<1x32xf32>
    %133 = vector.broadcast %132 : vector<1x32xf32> to vector<16x32xf32>
    %134 = arith.addf %131, %133 : vector<16x32xf32>
    %135 = vector.shape_cast %134 : vector<16x32xf32> to vector<2x8x32xf32>
    %c464 = arith.constant 464 : index
    %c0_55 = arith.constant 0 : index
    %136 = vector.load %arg2[%c464, %c0_55] : memref<904x128xf32, #tpu.memory_space<vmem>>, vector<32x32xf32>
    %cst_56 = arith.constant dense<0.000000e+00> : vector<16x32xf32>
    %137 = tpu.matmul %123, %136, %cst_56 {dimension_numbers = #tpu.dot_dimension_numbers<[1], [0], [0], [1], [0, 0, 1, 1], [], []>} : vector<16x32xf32>, vector<32x32xf32>, vector<16x32xf32> -> vector<16x32xf32>
    %c496 = arith.constant 496 : index
    %c0_57 = arith.constant 0 : index
    %138 = vector.load %arg2[%c496, %c0_57] : memref<904x128xf32, #tpu.memory_space<vmem>>, vector<1x32xf32>
    %139 = vector.broadcast %138 : vector<1x32xf32> to vector<16x32xf32>
    %140 = arith.addf %137, %139 : vector<16x32xf32>
    %141 = vector.shape_cast %140 : vector<16x32xf32> to vector<2x8x32xf32>
    "tpu.trace_start"() <{level = 10 : i32, message = "bqd,bkd->bqk"}> : () -> ()
    %cst_58 = arith.constant dense<0.000000e+00> : vector<2x8x8xf32>
    %142 = tpu.matmul %129, %135, %cst_58 {dimension_numbers = #tpu.dot_dimension_numbers<[2], [2], [1], [1], [0, 0, 0, 1, 1, 1], [0], [0]>} : vector<2x8x32xf32>, vector<2x8x32xf32>, vector<2x8x8xf32> -> vector<2x8x8xf32>
    "tpu.trace_stop"() : () -> ()
    %cst_59 = arith.constant dense<0xFF800000> : vector<2x8xf32>
    %143 = vector.multi_reduction <maximumf>, %142, %cst_59 [2] : vector<2x8x8xf32> to vector<2x8xf32>
    %144 = vector.shape_cast %143 : vector<2x8xf32> to vector<2x8x1xf32>
    %145 = vector.broadcast %144 : vector<2x8x1xf32> to vector<2x8x8xf32>
    %146 = arith.subf %142, %145 : vector<2x8x8xf32>
    %147 = math.exp %146 : vector<2x8x8xf32>
    %cst_60 = arith.constant dense<0.000000e+00> : vector<2x8xf32>
    %148 = vector.multi_reduction <add>, %147, %cst_60 [2] : vector<2x8x8xf32> to vector<2x8xf32>
    %149 = vector.shape_cast %148 : vector<2x8xf32> to vector<2x8x1xf32>
    %150 = tpu.reciprocal %149 {approx = true} : vector<2x8x1xf32> -> vector<2x8x1xf32>
    %151 = vector.broadcast %150 : vector<2x8x1xf32> to vector<2x8x8xf32>
    %152 = arith.mulf %147, %151 : vector<2x8x8xf32>
    "tpu.trace_start"() <{level = 10 : i32, message = "bqk,bkd->bqd"}> : () -> ()
    %cst_61 = arith.constant dense<0.000000e+00> : vector<2x8x32xf32>
    %153 = tpu.matmul %152, %141, %cst_61 {dimension_numbers = #tpu.dot_dimension_numbers<[2], [1], [1], [2], [0, 0, 0, 1, 1, 2], [0], [0]>} : vector<2x8x8xf32>, vector<2x8x32xf32>, vector<2x8x32xf32> -> vector<2x8x32xf32>
    "tpu.trace_stop"() : () -> ()
    %154 = vector.shape_cast %153 : vector<2x8x32xf32> to vector<16x32xf32>
    %c504 = arith.constant 504 : index
    %c0_62 = arith.constant 0 : index
    %155 = vector.load %arg2[%c504, %c0_62] : memref<904x128xf32, #tpu.memory_space<vmem>>, vector<32x32xf32>
    %cst_63 = arith.constant dense<0.000000e+00> : vector<16x32xf32>
    %156 = tpu.matmul %154, %155, %cst_63 {dimension_numbers = #tpu.dot_dimension_numbers<[1], [0], [0], [1], [0, 0, 1, 1], [], []>} : vector<16x32xf32>, vector<32x32xf32>, vector<16x32xf32> -> vector<16x32xf32>
    %c536 = arith.constant 536 : index
    %c0_64 = arith.constant 0 : index
    %157 = vector.load %arg2[%c536, %c0_64] : memref<904x128xf32, #tpu.memory_space<vmem>>, vector<1x32xf32>
    %158 = vector.broadcast %157 : vector<1x32xf32> to vector<16x32xf32>
    %159 = arith.addf %156, %158 : vector<16x32xf32>
    %160 = arith.addf %123, %159 : vector<16x32xf32>
    %c544 = arith.constant 544 : index
    %c0_65 = arith.constant 0 : index
    %161 = vector.load %arg2[%c544, %c0_65] : memref<904x128xf32, #tpu.memory_space<vmem>>, vector<1x32xf32>
    %c552 = arith.constant 552 : index
    %c0_66 = arith.constant 0 : index
    %162 = vector.load %arg2[%c552, %c0_66] : memref<904x128xf32, #tpu.memory_space<vmem>>, vector<1x32xf32>
    %cst_67 = arith.constant dense<0.000000e+00> : vector<16xf32>
    %163 = vector.multi_reduction <add>, %160, %cst_67 [1] : vector<16x32xf32> to vector<16xf32>
    %164 = vector.shape_cast %163 : vector<16xf32> to vector<16x1xf32>
    %cst_68 = arith.constant 3.200000e+01 : f32
    %165 = vector.broadcast %cst_68 : f32 to vector<16x1xf32>
    %166 = arith.divf %164, %165 : vector<16x1xf32>
    %167 = vector.broadcast %166 : vector<16x1xf32> to vector<16x32xf32>
    %168 = arith.subf %160, %167 : vector<16x32xf32>
    %169 = arith.mulf %168, %168 : vector<16x32xf32>
    %cst_69 = arith.constant dense<0.000000e+00> : vector<16xf32>
    %170 = vector.multi_reduction <add>, %169, %cst_69 [1] : vector<16x32xf32> to vector<16xf32>
    %171 = vector.shape_cast %170 : vector<16xf32> to vector<16x1xf32>
    %cst_70 = arith.constant 3.200000e+01 : f32
    %172 = vector.broadcast %cst_70 : f32 to vector<16x1xf32>
    %173 = arith.divf %171, %172 : vector<16x1xf32>
    %174 = vector.broadcast %166 : vector<16x1xf32> to vector<16x32xf32>
    %175 = arith.subf %160, %174 : vector<16x32xf32>
    %cst_71 = arith.constant 9.99999974E-6 : f32
    %176 = vector.broadcast %cst_71 : f32 to vector<16x1xf32>
    %177 = arith.addf %173, %176 : vector<16x1xf32>
    %178 = math.rsqrt %177 : vector<16x1xf32>
    %179 = vector.broadcast %178 : vector<16x1xf32> to vector<16x32xf32>
    %180 = arith.mulf %175, %179 : vector<16x32xf32>
    %181 = vector.broadcast %161 : vector<1x32xf32> to vector<16x32xf32>
    %182 = arith.mulf %180, %181 : vector<16x32xf32>
    %183 = vector.broadcast %162 : vector<1x32xf32> to vector<16x32xf32>
    %184 = arith.addf %182, %183 : vector<16x32xf32>
    %c560 = arith.constant 560 : index
    %c0_72 = arith.constant 0 : index
    %185 = vector.load %arg2[%c560, %c0_72] : memref<904x128xf32, #tpu.memory_space<vmem>>, vector<32x32xf32>
    %cst_73 = arith.constant dense<0.000000e+00> : vector<16x32xf32>
    %186 = tpu.matmul %184, %185, %cst_73 {dimension_numbers = #tpu.dot_dimension_numbers<[1], [0], [0], [1], [0, 0, 1, 1], [], []>} : vector<16x32xf32>, vector<32x32xf32>, vector<16x32xf32> -> vector<16x32xf32>
    %c592 = arith.constant 592 : index
    %c0_74 = arith.constant 0 : index
    %187 = vector.load %arg2[%c592, %c0_74] : memref<904x128xf32, #tpu.memory_space<vmem>>, vector<1x32xf32>
    %188 = vector.broadcast %187 : vector<1x32xf32> to vector<16x32xf32>
    %189 = arith.addf %186, %188 : vector<16x32xf32>
    %190 = vector.shape_cast %189 : vector<16x32xf32> to vector<2x8x32xf32>
    %c600 = arith.constant 600 : index
    %c0_75 = arith.constant 0 : index
    %191 = vector.load %arg2[%c600, %c0_75] : memref<904x128xf32, #tpu.memory_space<vmem>>, vector<32x32xf32>
    %cst_76 = arith.constant dense<0.000000e+00> : vector<16x32xf32>
    %192 = tpu.matmul %122, %191, %cst_76 {dimension_numbers = #tpu.dot_dimension_numbers<[1], [0], [0], [1], [0, 0, 1, 1], [], []>} : vector<16x32xf32>, vector<32x32xf32>, vector<16x32xf32> -> vector<16x32xf32>
    %c632 = arith.constant 632 : index
    %c0_77 = arith.constant 0 : index
    %193 = vector.load %arg2[%c632, %c0_77] : memref<904x128xf32, #tpu.memory_space<vmem>>, vector<1x32xf32>
    %194 = vector.broadcast %193 : vector<1x32xf32> to vector<16x32xf32>
    %195 = arith.addf %192, %194 : vector<16x32xf32>
    %196 = vector.shape_cast %195 : vector<16x32xf32> to vector<2x8x32xf32>
    %c640 = arith.constant 640 : index
    %c0_78 = arith.constant 0 : index
    %197 = vector.load %arg2[%c640, %c0_78] : memref<904x128xf32, #tpu.memory_space<vmem>>, vector<32x32xf32>
    %cst_79 = arith.constant dense<0.000000e+00> : vector<16x32xf32>
    %198 = tpu.matmul %122, %197, %cst_79 {dimension_numbers = #tpu.dot_dimension_numbers<[1], [0], [0], [1], [0, 0, 1, 1], [], []>} : vector<16x32xf32>, vector<32x32xf32>, vector<16x32xf32> -> vector<16x32xf32>
    %c672 = arith.constant 672 : index
    %c0_80 = arith.constant 0 : index
    %199 = vector.load %arg2[%c672, %c0_80] : memref<904x128xf32, #tpu.memory_space<vmem>>, vector<1x32xf32>
    %200 = vector.broadcast %199 : vector<1x32xf32> to vector<16x32xf32>
    %201 = arith.addf %198, %200 : vector<16x32xf32>
    %202 = vector.shape_cast %201 : vector<16x32xf32> to vector<2x8x32xf32>
    "tpu.trace_start"() <{level = 10 : i32, message = "bqd,bkd->bqk"}> : () -> ()
    %cst_81 = arith.constant dense<0.000000e+00> : vector<2x8x8xf32>
    %203 = tpu.matmul %190, %196, %cst_81 {dimension_numbers = #tpu.dot_dimension_numbers<[2], [2], [1], [1], [0, 0, 0, 1, 1, 1], [0], [0]>} : vector<2x8x32xf32>, vector<2x8x32xf32>, vector<2x8x8xf32> -> vector<2x8x8xf32>
    "tpu.trace_stop"() : () -> ()
    %cst_82 = arith.constant dense<0xFF800000> : vector<2x8xf32>
    %204 = vector.multi_reduction <maximumf>, %203, %cst_82 [2] : vector<2x8x8xf32> to vector<2x8xf32>
    %205 = vector.shape_cast %204 : vector<2x8xf32> to vector<2x8x1xf32>
    %206 = vector.broadcast %205 : vector<2x8x1xf32> to vector<2x8x8xf32>
    %207 = arith.subf %203, %206 : vector<2x8x8xf32>
    %208 = math.exp %207 : vector<2x8x8xf32>
    %cst_83 = arith.constant dense<0.000000e+00> : vector<2x8xf32>
    %209 = vector.multi_reduction <add>, %208, %cst_83 [2] : vector<2x8x8xf32> to vector<2x8xf32>
    %210 = vector.shape_cast %209 : vector<2x8xf32> to vector<2x8x1xf32>
    %211 = tpu.reciprocal %210 {approx = true} : vector<2x8x1xf32> -> vector<2x8x1xf32>
    %212 = vector.broadcast %211 : vector<2x8x1xf32> to vector<2x8x8xf32>
    %213 = arith.mulf %208, %212 : vector<2x8x8xf32>
    "tpu.trace_start"() <{level = 10 : i32, message = "bqk,bkd->bqd"}> : () -> ()
    %cst_84 = arith.constant dense<0.000000e+00> : vector<2x8x32xf32>
    %214 = tpu.matmul %213, %202, %cst_84 {dimension_numbers = #tpu.dot_dimension_numbers<[2], [1], [1], [2], [0, 0, 0, 1, 1, 2], [0], [0]>} : vector<2x8x8xf32>, vector<2x8x32xf32>, vector<2x8x32xf32> -> vector<2x8x32xf32>
    "tpu.trace_stop"() : () -> ()
    %215 = vector.shape_cast %214 : vector<2x8x32xf32> to vector<16x32xf32>
    %c680 = arith.constant 680 : index
    %c0_85 = arith.constant 0 : index
    %216 = vector.load %arg2[%c680, %c0_85] : memref<904x128xf32, #tpu.memory_space<vmem>>, vector<32x32xf32>
    %cst_86 = arith.constant dense<0.000000e+00> : vector<16x32xf32>
    %217 = tpu.matmul %215, %216, %cst_86 {dimension_numbers = #tpu.dot_dimension_numbers<[1], [0], [0], [1], [0, 0, 1, 1], [], []>} : vector<16x32xf32>, vector<32x32xf32>, vector<16x32xf32> -> vector<16x32xf32>
    %c712 = arith.constant 712 : index
    %c0_87 = arith.constant 0 : index
    %218 = vector.load %arg2[%c712, %c0_87] : memref<904x128xf32, #tpu.memory_space<vmem>>, vector<1x32xf32>
    %219 = vector.broadcast %218 : vector<1x32xf32> to vector<16x32xf32>
    %220 = arith.addf %217, %219 : vector<16x32xf32>
    %221 = arith.addf %184, %220 : vector<16x32xf32>
    %c720 = arith.constant 720 : index
    %c0_88 = arith.constant 0 : index
    %222 = vector.load %arg2[%c720, %c0_88] : memref<904x128xf32, #tpu.memory_space<vmem>>, vector<1x32xf32>
    %c728 = arith.constant 728 : index
    %c0_89 = arith.constant 0 : index
    %223 = vector.load %arg2[%c728, %c0_89] : memref<904x128xf32, #tpu.memory_space<vmem>>, vector<1x32xf32>
    %cst_90 = arith.constant dense<0.000000e+00> : vector<16xf32>
    %224 = vector.multi_reduction <add>, %221, %cst_90 [1] : vector<16x32xf32> to vector<16xf32>
    %225 = vector.shape_cast %224 : vector<16xf32> to vector<16x1xf32>
    %cst_91 = arith.constant 3.200000e+01 : f32
    %226 = vector.broadcast %cst_91 : f32 to vector<16x1xf32>
    %227 = arith.divf %225, %226 : vector<16x1xf32>
    %228 = vector.broadcast %227 : vector<16x1xf32> to vector<16x32xf32>
    %229 = arith.subf %221, %228 : vector<16x32xf32>
    %230 = arith.mulf %229, %229 : vector<16x32xf32>
    %cst_92 = arith.constant dense<0.000000e+00> : vector<16xf32>
    %231 = vector.multi_reduction <add>, %230, %cst_92 [1] : vector<16x32xf32> to vector<16xf32>
    %232 = vector.shape_cast %231 : vector<16xf32> to vector<16x1xf32>
    %cst_93 = arith.constant 3.200000e+01 : f32
    %233 = vector.broadcast %cst_93 : f32 to vector<16x1xf32>
    %234 = arith.divf %232, %233 : vector<16x1xf32>
    %235 = vector.broadcast %227 : vector<16x1xf32> to vector<16x32xf32>
    %236 = arith.subf %221, %235 : vector<16x32xf32>
    %cst_94 = arith.constant 9.99999974E-6 : f32
    %237 = vector.broadcast %cst_94 : f32 to vector<16x1xf32>
    %238 = arith.addf %234, %237 : vector<16x1xf32>
    %239 = math.rsqrt %238 : vector<16x1xf32>
    %240 = vector.broadcast %239 : vector<16x1xf32> to vector<16x32xf32>
    %241 = arith.mulf %236, %240 : vector<16x32xf32>
    %242 = vector.broadcast %222 : vector<1x32xf32> to vector<16x32xf32>
    %243 = arith.mulf %241, %242 : vector<16x32xf32>
    %244 = vector.broadcast %223 : vector<1x32xf32> to vector<16x32xf32>
    %245 = arith.addf %243, %244 : vector<16x32xf32>
    %c736 = arith.constant 736 : index
    %c0_95 = arith.constant 0 : index
    %246 = vector.load %arg2[%c736, %c0_95] : memref<904x128xf32, #tpu.memory_space<vmem>>, vector<32x64xf32>
    %cst_96 = arith.constant dense<0.000000e+00> : vector<16x64xf32>
    %247 = tpu.matmul %245, %246, %cst_96 {dimension_numbers = #tpu.dot_dimension_numbers<[1], [0], [0], [1], [0, 0, 1, 1], [], []>} : vector<16x32xf32>, vector<32x64xf32>, vector<16x64xf32> -> vector<16x64xf32>
    %c768 = arith.constant 768 : index
    %c0_97 = arith.constant 0 : index
    %248 = vector.load %arg2[%c768, %c0_97] : memref<904x128xf32, #tpu.memory_space<vmem>>, vector<1x64xf32>
    %249 = vector.broadcast %248 : vector<1x64xf32> to vector<16x64xf32>
    %250 = arith.addf %247, %249 : vector<16x64xf32>
    %cst_98 = arith.constant 0.000000e+00 : f32
    %251 = vector.broadcast %cst_98 : f32 to vector<16x64xf32>
    %252 = arith.maximumf %250, %251 : vector<16x64xf32>
    %c776 = arith.constant 776 : index
    %c0_99 = arith.constant 0 : index
    %253 = vector.load %arg2[%c776, %c0_99] : memref<904x128xf32, #tpu.memory_space<vmem>>, vector<64x32xf32>
    %cst_100 = arith.constant dense<0.000000e+00> : vector<16x32xf32>
    %254 = tpu.matmul %252, %253, %cst_100 {dimension_numbers = #tpu.dot_dimension_numbers<[1], [0], [0], [1], [0, 0, 1, 1], [], []>} : vector<16x64xf32>, vector<64x32xf32>, vector<16x32xf32> -> vector<16x32xf32>
    %c840 = arith.constant 840 : index
    %c0_101 = arith.constant 0 : index
    %255 = vector.load %arg2[%c840, %c0_101] : memref<904x128xf32, #tpu.memory_space<vmem>>, vector<1x32xf32>
    %256 = vector.broadcast %255 : vector<1x32xf32> to vector<16x32xf32>
    %257 = arith.addf %254, %256 : vector<16x32xf32>
    %258 = arith.addf %245, %257 : vector<16x32xf32>
    %c848 = arith.constant 848 : index
    %c0_102 = arith.constant 0 : index
    %259 = vector.load %arg2[%c848, %c0_102] : memref<904x128xf32, #tpu.memory_space<vmem>>, vector<1x32xf32>
    %c856 = arith.constant 856 : index
    %c0_103 = arith.constant 0 : index
    %260 = vector.load %arg2[%c856, %c0_103] : memref<904x128xf32, #tpu.memory_space<vmem>>, vector<1x32xf32>
    %cst_104 = arith.constant dense<0.000000e+00> : vector<16xf32>
    %261 = vector.multi_reduction <add>, %258, %cst_104 [1] : vector<16x32xf32> to vector<16xf32>
    %262 = vector.shape_cast %261 : vector<16xf32> to vector<16x1xf32>
    %cst_105 = arith.constant 3.200000e+01 : f32
    %263 = vector.broadcast %cst_105 : f32 to vector<16x1xf32>
    %264 = arith.divf %262, %263 : vector<16x1xf32>
    %265 = vector.broadcast %264 : vector<16x1xf32> to vector<16x32xf32>
    %266 = arith.subf %258, %265 : vector<16x32xf32>
    %267 = arith.mulf %266, %266 : vector<16x32xf32>
    %cst_106 = arith.constant dense<0.000000e+00> : vector<16xf32>
    %268 = vector.multi_reduction <add>, %267, %cst_106 [1] : vector<16x32xf32> to vector<16xf32>
    %269 = vector.shape_cast %268 : vector<16xf32> to vector<16x1xf32>
    %cst_107 = arith.constant 3.200000e+01 : f32
    %270 = vector.broadcast %cst_107 : f32 to vector<16x1xf32>
    %271 = arith.divf %269, %270 : vector<16x1xf32>
    %272 = vector.broadcast %264 : vector<16x1xf32> to vector<16x32xf32>
    %273 = arith.subf %258, %272 : vector<16x32xf32>
    %cst_108 = arith.constant 9.99999974E-6 : f32
    %274 = vector.broadcast %cst_108 : f32 to vector<16x1xf32>
    %275 = arith.addf %271, %274 : vector<16x1xf32>
    %276 = math.rsqrt %275 : vector<16x1xf32>
    %277 = vector.broadcast %276 : vector<16x1xf32> to vector<16x32xf32>
    %278 = arith.mulf %273, %277 : vector<16x32xf32>
    %279 = vector.broadcast %259 : vector<1x32xf32> to vector<16x32xf32>
    %280 = arith.mulf %278, %279 : vector<16x32xf32>
    %281 = vector.broadcast %260 : vector<1x32xf32> to vector<16x32xf32>
    %282 = arith.addf %280, %281 : vector<16x32xf32>
    %c864 = arith.constant 864 : index
    %c0_109 = arith.constant 0 : index
    %283 = vector.load %arg2[%c864, %c0_109] : memref<904x128xf32, #tpu.memory_space<vmem>>, vector<32x128xf32>
    %cst_110 = arith.constant dense<0.000000e+00> : vector<16x128xf32>
    %284 = tpu.matmul %282, %283, %cst_110 {dimension_numbers = #tpu.dot_dimension_numbers<[1], [0], [0], [1], [0, 0, 1, 1], [], []>} : vector<16x32xf32>, vector<32x128xf32>, vector<16x128xf32> -> vector<16x128xf32>
    %c896 = arith.constant 896 : index
    %c0_111 = arith.constant 0 : index
    %285 = vector.load %arg2[%c896, %c0_111] : memref<904x128xf32, #tpu.memory_space<vmem>>, vector<1x128xf32>
    %286 = vector.broadcast %285 : vector<1x128xf32> to vector<16x128xf32>
    %287 = arith.addf %284, %286 : vector<16x128xf32>
    %c0_112 = arith.constant 0 : index
    %c0_113 = arith.constant 0 : index
    %288 = vector.load %arg3[%c0_112, %c0_113] : memref<16x128xf32, #tpu.memory_space<vmem>>, vector<16x128xf32>
    tpu.vector_store %arg3[%c0_112, %c0_113], %287 {strides = array<i32>} : memref<16x128xf32, #tpu.memory_space<vmem>>, vector<16x128xf32>,
    return
  }
}

</mosaic_0001>

<llo_original>
// kernel: lstr_forward.1
$region0: #{lstr_forward.1}
  #allocation0 [shape = 'u32[]', space=smem, size = 0x4, offset = 0x4, fixed_abs, tag = 'smem constant byte address 0x4 - core index']
  #allocation1 [shape = 'u32[144,128]{1,0:T(1,128)}', space=vmem, size = 0x12000, scoped, tag = 'internal scratch']
  %s0 = inlined_call_operand.hbm [shape: f32[2,24,32], index: 0, kind: input, shape index: {}]
  %s1 = inlined_call_operand.hbm [shape: f32[2,24,32], index: 1, kind: input, shape index: {}]
  %s2 = inlined_call_operand.hbm [shape: f32[904,128], index: 2, kind: input, shape index: {}]
  %s3 = inlined_call_operand.hbm [shape: f32[16,128], index: 3, kind: output, shape index: {}]
  %s4 = sld [smem:[#allocation0]]
  $region34: #{lstr_forward.1} parent=0
    _
  %s6 = ssub.s32 1, %s4
  %s7 = scalar_select 0, %s6, %s4
  $region1: #{lstr_forward.1} parent=0
    #allocation2 [shape = 'u8[24576]{0}', space=vmem, size = 0x6000, scoped, tag = 'input window, operand 0, single buffered']
    #allocation3 [shape = 's32[1]{0}', space=sflag, size = 0x4, scoped, tag = 'scoped memory for lstr_forward.1']
    #allocation4 [shape = 's32[1]{0}', space=sflag, size = 0x4, scoped, tag = 'scoped memory for lstr_forward.1']
    #allocation5 [shape = 'u8[24576]{0}', space=vmem, size = 0x6000, scoped, tag = 'input window, operand 1, single buffered']
    #allocation6 [shape = 's32[1]{0}', space=sflag, size = 0x4, scoped, tag = 'scoped memory for lstr_forward.1']
    #allocation7 [shape = 'u8[462848]{0}', space=vmem, size = 0x71000, scoped, tag = 'input window, operand 2, single buffered']
    #allocation8 [shape = 'u8[8192]{0}', space=vmem, size = 0x2000, scoped, tag = 'output window, operand 0, single buffered']
    %8 = vsyncpa [#allocation3], 0
    %9 = vsyncpa [#allocation6], 0
    %10 = vsyncpa [#allocation4], 0
    // Predicated region
    $region2: #{lstr_forward.1} parent=1 // pred_check
      _
    $region3: #{lstr_forward.1} parent=1 // pred_check_branch
      %12 = sbr.rel (0) target = $region5
    $region4: #{lstr_forward.1} parent=1 // pred_region
      %s14 = ssub.s32 768, 768
      %15 = vsyncadd [#allocation3], %s14
      %s16 = sshll.u32 [#allocation2], 4
      %s17 = int_to_ptr.vmem [resolvable:$true] %s16
      %22 = dma.hbm_to_vmem [thread:$0]  %s0, 768, %s17, [#allocation3], 128, 128, 8
    $region5: #{lstr_forward.1} parent=1 // pred_fallthru
      _
    // Predicated region
    $region6: #{lstr_forward.1} parent=1 // pred_check
      _
    $region7: #{lstr_forward.1} parent=1 // pred_check_branch
      %24 = sbr.rel (0) target = $region9
    $region8: #{lstr_forward.1} parent=1 // pred_region
      %s26 = ssub.s32 768, 768
      %27 = vsyncadd [#allocation6], %s26
      %s28 = sshll.u32 [#allocation5], 4
      %s29 = int_to_ptr.vmem [resolvable:$true] %s28
      %34 = dma.hbm_to_vmem [thread:$0]  %s1, 768, %s29, [#allocation6], 128, 128, 8
    $region9: #{lstr_forward.1} parent=1 // pred_fallthru
      _
    // Predicated region
    $region10: #{lstr_forward.1} parent=1 // pred_check
      _
    $region11: #{lstr_forward.1} parent=1 // pred_check_branch
      %36 = sbr.rel (0) target = $region13
    $region12: #{lstr_forward.1} parent=1 // pred_region
      %s38 = ssub.s32 14464, 14464
      %39 = vsyncadd [#allocation6], %s38
      %s40 = sshll.u32 [#allocation7], 4
      %s41 = int_to_ptr.vmem [resolvable:$true] %s40
      %46 = dma.hbm_to_vmem [thread:$0]  %s2, 14464, %s41, [#allocation6], 128, 128, 8
    $region13: #{lstr_forward.1} parent=1 // pred_fallthru
      _
    // Predicated region
    $region14: #{lstr_forward.1} parent=1 // pred_check
      _
    $region15: #{lstr_forward.1} parent=1 // pred_check_branch
      %48 = sbr.rel (0) target = $region17
    $region16: #{lstr_forward.1} parent=1 // pred_region
      %49 = dma.done [#allocation3], 768
    $region17: #{lstr_forward.1} parent=1 // pred_fallthru
      _
    // Predicated region
    $region18: #{lstr_forward.1} parent=1 // pred_check
      _
    $region19: #{lstr_forward.1} parent=1 // pred_check_branch
      %51 = sbr.rel (0) target = $region21
    $region20: #{lstr_forward.1} parent=1 // pred_region
      %52 = dma.done [#allocation6], 768
    $region21: #{lstr_forward.1} parent=1 // pred_fallthru
      _
    // Predicated region
    $region22: #{lstr_forward.1} parent=1 // pred_check
      _
    $region23: #{lstr_forward.1} parent=1 // pred_check_branch
      %54 = sbr.rel (0) target = $region25
    $region24: #{lstr_forward.1} parent=1 // pred_region
      %55 = dma.done [#allocation6], 14464
    $region25: #{lstr_forward.1} parent=1 // pred_fallthru
      _
    %v56 = vld [vmem:[#allocation2] sm:$0xff]
    %v57 = vld [vmem:[#allocation2 + $0x8] sm:$0xff]
    %v58 = vld [vmem:[#allocation2 + $0x10] sm:$0xff]
    %v59 = vld [vmem:[#allocation2 + $0x18] sm:$0xff]
    %v60 = vld [vmem:[#allocation2 + $0x20] sm:$0xff]
    %v61 = vld [vmem:[#allocation2 + $0x28] sm:$0xff]
    %v62 = vld [vmem:[#allocation5] sm:$0xff]
    %v63 = vld [vmem:[#allocation5 + $0x8] sm:$0xff]
    %v64 = vld [vmem:[#allocation5 + $0x10] sm:$0xff]
    %v65 = vld [vmem:[#allocation5 + $0x18] sm:$0xff]
    %v66 = vld [vmem:[#allocation5 + $0x20] sm:$0xff]
    %v67 = vld [vmem:[#allocation5 + $0x28] sm:$0xff]
    %v68 = vld [vmem:[#allocation7] sm:$0xff]
    %v69 = vld [vmem:[#allocation7 + $0x8] sm:$0xff]
    %v70 = vld [vmem:[#allocation7 + $0x10] sm:$0xff]
    %v71 = vld [vmem:[#allocation7 + $0x18] sm:$0xff]
    %v72 = vld [vmem:[#allocation7 + $0x20] sm:$0xff]
    %v73 = vld [vmem:[#allocation7 + $0x28] sm:$0xff]
    %v74 = vld [vmem:[#allocation7 + $0x30] sm:$0xff]
    %v75 = vld [vmem:[#allocation7 + $0x38] sm:$0xff]
    %vm76 = vcmask 261120
    %v78 = vsel %vm76, %v62, 0
    %v81 = vsel %vm76, %v63, 0
    %v84 = vsel %vm76, %v64, 0
    %v87 = vsel %vm76, %v65, 0
    %v90 = vsel %vm76, %v66, 0
    %v93 = vsel %vm76, %v67, 0
    %95 = vmatprep.subr.mxu0 0.0
    %96 = vmatpush1.msra.mxu0 0.0
    %97 = vmatprep.subr.mxu0 0.0
    %98 = vmatpush1.msra.mxu0 0.0
    %99 = vmatprep.subr.mxu0 0.0
    %100 = vmatpush1.msra.mxu0 0.0
    %101 = vmatprep.subr.mxu0 0.0
    %102 = vmatpush1.msra.mxu0 0.0
    %103 = vmatprep.subr.mxu0 0.0
    %104 = vmatpush1.msra.mxu0 0.0
    %105 = vmatprep.subr.mxu0 0.0
    %106 = vmatpush1.msra.mxu0 0.0
    %107 = vmatprep.subr.mxu0 0.0
    %108 = vmatpush1.msra.mxu0 0.0
    %109 = vmatprep.subr.mxu0 0.0
    %110 = vmatpush1.msra.mxu0 0.0
    %111 = vmatprep.subr.mxu0 0.0
    %112 = vmatpush1.msra.mxu0 0.0
    %113 = vmatprep.subr.mxu0 0.0
    %114 = vmatpush1.msra.mxu0 0.0
    %115 = vmatprep.subr.mxu0 0.0
    %116 = vmatpush1.msra.mxu0 0.0
    %117 = vmatprep.subr.mxu0 0.0
    %118 = vmatpush1.msra.mxu0 0.0
    %119 = vmatprep.subr.mxu0 0.0
    %120 = vmatpush1.msra.mxu0 %v75
    %121 = vmatprep.subr.mxu0 0.0
    %122 = vmatpush1.msra.mxu0 %v74
    %123 = vmatprep.subr.mxu0 0.0
    %124 = vmatpush1.msra.mxu0 %v73
    %125 = vmatprep.subr.mxu0 0.0
    %126 = vmatpush1.msra.mxu0 %v72
    %127 = vmatprep.subr.mxu0 0.0
    %128 = vmatpush2.msra.mxu0 0.0
    %129 = vmatprep.subr.mxu0 0.0
    %130 = vmatpush2.msra.mxu0 0.0
    %131 = vmatprep.subr.mxu0 0.0
    %132 = vmatpush2.msra.mxu0 0.0
    %133 = vmatprep.subr.mxu0 0.0
    %134 = vmatpush2.msra.mxu0 0.0
    %135 = vmatprep.subr.mxu0 0.0
    %136 = vmatpush2.msra.mxu0 0.0
    %137 = vmatprep.subr.mxu0 0.0
    %138 = vmatpush2.msra.mxu0 0.0
    %139 = vmatprep.subr.mxu0 0.0
    %140 = vmatpush2.msra.mxu0 0.0
    %141 = vmatprep.subr.mxu0 0.0
    %142 = vmatpush2.msra.mxu0 0.0
    %143 = vmatprep.subr.mxu0 0.0
    %144 = vmatpush2.msra.mxu0 0.0
    %145 = vmatprep.subr.mxu0 0.0
    %146 = vmatpush2.msra.mxu0 0.0
    %147 = vmatprep.subr.mxu0 0.0
    %148 = vmatpush2.msra.mxu0 0.0
    %149 = vmatprep.subr.mxu0 0.0
    %150 = vmatpush2.msra.mxu0 0.0
    %151 = vmatprep.subr.mxu0 0.0
    %152 = vmatpush2.msra.mxu0 0.0
    %153 = vmatprep.subr.mxu0 0.0
    %154 = vmatpush2.msra.mxu0 0.0
    %155 = vmatprep.subr.mxu0 0.0
    %156 = vmatpush2.msra.mxu0 0.0
    %157 = vmatprep.subr.mxu0 0.0
    %158 = vmatpush2.msra.mxu0 0.0
    %159 = vmatprep.mubr.f32.mxu0 0.0
    %160 = vmatmul.mubr.f32.gmra.mxu0 %v78
    %v161 = vpop.f32.mrf.mxu0
    %v162 = vadd.f32 0.0, %v161
    %v163 = vpop.f32.mrf.mxu0
    %164 = vmatprep.mubr.f32.mxu0 0.0
    %165 = vmatmul.mubr.f32.gmra.mxu0 %v81
    %v166 = vpop.f32.mrf.mxu0
    %v167 = vadd.f32 0.0, %v166
    %v168 = vpop.f32.mrf.mxu0
    %169 = vmatprep.mubr.f32.mxu0 0.0
    %170 = vmatmul.mubr.f32.gmra.mxu0 %v84
    %v171 = vpop.f32.mrf.mxu0
    %v172 = vadd.f32 0.0, %v171
    %v173 = vpop.f32.mrf.mxu0
    %174 = vmatprep.mubr.f32.mxu0 0.0
    %175 = vmatmul.mubr.f32.gmra.mxu0 %v87
    %v176 = vpop.f32.mrf.mxu0
    %v177 = vadd.f32 0.0, %v176
    %v178 = vpop.f32.mrf.mxu0
    %179 = vmatprep.mubr.f32.mxu0 0.0
    %180 = vmatmul.mubr.f32.gmra.mxu0 %v90
    %v181 = vpop.f32.mrf.mxu0
    %v182 = vadd.f32 0.0, %v181
    %v183 = vpop.f32.mrf.mxu0
    %184 = vmatprep.mubr.f32.mxu0 0.0
    %185 = vmatmul.mubr.f32.gmra.mxu0 %v93
    %v186 = vpop.f32.mrf.mxu0
    %v187 = vadd.f32 0.0, %v186
    %v188 = vpop.f32.mrf.mxu0
    %189 = vdwg.mxu0
    %v191 = vsel %vm76, %v56, 0
    %v194 = vsel %vm76, %v57, 0
    %v197 = vsel %vm76, %v58, 0
    %v200 = vsel %vm76, %v59, 0
    %v203 = vsel %vm76, %v60, 0
    %v206 = vsel %vm76, %v61, 0
    %208 = vmatprep.subr.mxu0 0.0
    %209 = vmatpush1.msra.mxu0 0.0
    %210 = vmatprep.subr.mxu0 0.0
    %211 = vmatpush1.msra.mxu0 0.0
    %212 = vmatprep.subr.mxu0 0.0
    %213 = vmatpush1.msra.mxu0 0.0
    %214 = vmatprep.subr.mxu0 0.0
    %215 = vmatpush1.msra.mxu0 0.0
    %216 = vmatprep.subr.mxu0 0.0
    %217 = vmatpush1.msra.mxu0 0.0
    %218 = vmatprep.subr.mxu0 0.0
    %219 = vmatpush1.msra.mxu0 0.0
    %220 = vmatprep.subr.mxu0 0.0
    %221 = vmatpush1.msra.mxu0 0.0
    %222 = vmatprep.subr.mxu0 0.0
    %223 = vmatpush1.msra.mxu0 0.0
    %224 = vmatprep.subr.mxu0 0.0
    %225 = vmatpush1.msra.mxu0 0.0
    %226 = vmatprep.subr.mxu0 0.0
    %227 = vmatpush1.msra.mxu0 0.0
    %228 = vmatprep.subr.mxu0 0.0
    %229 = vmatpush1.msra.mxu0 0.0
    %230 = vmatprep.subr.mxu0 0.0
    %231 = vmatpush1.msra.mxu0 0.0
    %232 = vmatprep.subr.mxu0 0.0
    %233 = vmatpush1.msra.mxu0 %v71
    %234 = vmatprep.subr.mxu0 0.0
    %235 = vmatpush1.msra.mxu0 %v70
    %236 = vmatprep.subr.mxu0 0.0
    %237 = vmatpush1.msra.mxu0 %v69
    %238 = vmatprep.subr.mxu0 0.0
    %239 = vmatpush1.msra.mxu0 %v68
    %240 = vmatprep.subr.mxu0 0.0
    %241 = vmatpush2.msra.mxu0 0.0
    %242 = vmatprep.subr.mxu0 0.0
    %243 = vmatpush2.msra.mxu0 0.0
    %244 = vmatprep.subr.mxu0 0.0
    %245 = vmatpush2.msra.mxu0 0.0
    %246 = vmatprep.subr.mxu0 0.0
    %247 = vmatpush2.msra.mxu0 0.0
    %248 = vmatprep.subr.mxu0 0.0
    %249 = vmatpush2.msra.mxu0 0.0
    %250 = vmatprep.subr.mxu0 0.0
    %251 = vmatpush2.msra.mxu0 0.0
    %252 = vmatprep.subr.mxu0 0.0
    %253 = vmatpush2.msra.mxu0 0.0
    %254 = vmatprep.subr.mxu0 0.0
    %255 = vmatpush2.msra.mxu0 0.0
    %256 = vmatprep.subr.mxu0 0.0
    %257 = vmatpush2.msra.mxu0 0.0
    %258 = vmatprep.subr.mxu0 0.0
    %259 = vmatpush2.msra.mxu0 0.0
    %260 = vmatprep.subr.mxu0 0.0
    %261 = vmatpush2.msra.mxu0 0.0
    %262 = vmatprep.subr.mxu0 0.0
    %263 = vmatpush2.msra.mxu0 0.0
    %264 = vmatprep.subr.mxu0 0.0
    %265 = vmatpush2.msra.mxu0 0.0
    %266 = vmatprep.subr.mxu0 0.0
    %267 = vmatpush2.msra.mxu0 0.0
    %268 = vmatprep.subr.mxu0 0.0
    %269 = vmatpush2.msra.mxu0 0.0
    %270 = vmatprep.subr.mxu0 0.0
    %271 = vmatpush2.msra.mxu0 0.0
    %272 = vmatprep.mubr.f32.mxu0 0.0
    %273 = vmatmul.mubr.f32.gmra.mxu0 %v191
    %v274 = vpop.f32.mrf.mxu0
    %v275 = vadd.f32 %v162, %v274
    %v276 = vpop.f32.mrf.mxu0
    %277 = vmatprep.mubr.f32.mxu0 0.0
    %278 = vmatmul.mubr.f32.gmra.mxu0 %v194
    %v279 = vpop.f32.mrf.mxu0
    %v280 = vadd.f32 %v167, %v279
    %v281 = vpop.f32.mrf.mxu0
    %282 = vmatprep.mubr.f32.mxu0 0.0
    %283 = vmatmul.mubr.f32.gmra.mxu0 %v197
    %v284 = vpop.f32.mrf.mxu0
    %v285 = vadd.f32 %v172, %v284
    %v286 = vpop.f32.mrf.mxu0
    %287 = vmatprep.mubr.f32.mxu0 0.0
    %288 = vmatmul.mubr.f32.gmra.mxu0 %v200
    %v289 = vpop.f32.mrf.mxu0
    %v290 = vadd.f32 %v177, %v289
    %v291 = vpop.f32.mrf.mxu0
    %292 = vmatprep.mubr.f32.mxu0 0.0
    %293 = vmatmul.mubr.f32.gmra.mxu0 %v203
    %v294 = vpop.f32.mrf.mxu0
    %v295 = vadd.f32 %v182, %v294
    %v296 = vpop.f32.mrf.mxu0
    %297 = vmatprep.mubr.f32.mxu0 0.0
    %298 = vmatmul.mubr.f32.gmra.mxu0 %v206
    %v299 = vpop.f32.mrf.mxu0
    %v300 = vadd.f32 %v187, %v299
    %v301 = vpop.f32.mrf.mxu0
    %302 = vdwg.mxu0
    %v303 = vld [vmem:[#allocation7 + $0x40] sm:$0x1]
    %v304 = vlaneseq
    %v305 = vshrl.u32 %v304, 7
    %v306 = vsub.s32 0, %v305
    %v307 = vrot.slane %v303, %v306
    %v308 = vadd.f32 %v275, %v307
    %v309 = vadd.f32 %v280, %v307
    %v310 = vadd.f32 %v285, %v307
    %v311 = vadd.f32 %v290, %v307
    %v312 = vadd.f32 %v295, %v307
    %v313 = vadd.f32 %v300, %v307
    %v314 = vmax.f32 %v308, 0.0
    %v315 = vmax.f32 %v309, 0.0
    %v316 = vmax.f32 %v310, 0.0
    %v317 = vmax.f32 %v311, 0.0
    %v318 = vmax.f32 %v312, 0.0
    %v319 = vmax.f32 %v313, 0.0
    %v320 = vld [vmem:[#allocation7 + $0x48] sm:$0xff]
    %v321 = vld [vmem:[#allocation7 + $0x50] sm:$0xff]
    %v322 = vld [vmem:[#allocation7 + $0x58] sm:$0xff]
    %v323 = vld [vmem:[#allocation7 + $0x60] sm:$0xff]
    %v324 = vld [vmem:[#allocation7 + $0x68] sm:$0xff]
    %v325 = vld [vmem:[#allocation7 + $0x70] sm:$0x1]
    %v326 = vlaneseq
    %v327 = vshrl.u32 %v326, 7
    %v328 = vsub.s32 0, %v327
    %v329 = vrot.slane %v325, %v328
    %v331 = vsel %vm76, %v320, 0
    %333 = vmatprep.subr.mxu0 0.0
    %334 = vmatpush1.msra.mxu0 0.0
    %335 = vmatprep.subr.mxu0 0.0
    %336 = vmatpush1.msra.mxu0 0.0
    %337 = vmatprep.subr.mxu0 0.0
    %338 = vmatpush1.msra.mxu0 0.0
    %339 = vmatprep.subr.mxu0 0.0
    %340 = vmatpush1.msra.mxu0 0.0
    %341 = vmatprep.subr.mxu0 0.0
    %342 = vmatpush1.msra.mxu0 0.0
    %343 = vmatprep.subr.mxu0 0.0
    %344 = vmatpush1.msra.mxu0 0.0
    %345 = vmatprep.subr.mxu0 0.0
    %346 = vmatpush1.msra.mxu0 0.0
    %347 = vmatprep.subr.mxu0 0.0
    %348 = vmatpush1.msra.mxu0 0.0
    %349 = vmatprep.subr.mxu0 0.0
    %350 = vmatpush1.msra.mxu0 0.0
    %351 = vmatprep.subr.mxu0 0.0
    %352 = vmatpush1.msra.mxu0 0.0
    %353 = vmatprep.subr.mxu0 0.0
    %354 = vmatpush1.msra.mxu0 0.0
    %355 = vmatprep.subr.mxu0 0.0
    %356 = vmatpush1.msra.mxu0 0.0
    %357 = vmatprep.subr.mxu0 0.0
    %358 = vmatpush1.msra.mxu0 %v324
    %359 = vmatprep.subr.mxu0 0.0
    %360 = vmatpush1.msra.mxu0 %v323
    %361 = vmatprep.subr.mxu0 0.0
    %362 = vmatpush1.msra.mxu0 %v322
    %363 = vmatprep.subr.mxu0 0.0
    %364 = vmatpush1.msra.mxu0 %v321
    %365 = vmatprep.subr.mxu0 0.0
    %366 = vmatpush2.msra.mxu0 0.0
    %367 = vmatprep.subr.mxu0 0.0
    %368 = vmatpush2.msra.mxu0 0.0
    %369 = vmatprep.subr.mxu0 0.0
    %370 = vmatpush2.msra.mxu0 0.0
    %371 = vmatprep.subr.mxu0 0.0
    %372 = vmatpush2.msra.mxu0 0.0
    %373 = vmatprep.subr.mxu0 0.0
    %374 = vmatpush2.msra.mxu0 0.0
    %375 = vmatprep.subr.mxu0 0.0
    %376 = vmatpush2.msra.mxu0 0.0
    %377 = vmatprep.subr.mxu0 0.0
    %378 = vmatpush2.msra.mxu0 0.0
    %379 = vmatprep.subr.mxu0 0.0
    %380 = vmatpush2.msra.mxu0 0.0
    %381 = vmatprep.subr.mxu0 0.0
    %382 = vmatpush2.msra.mxu0 0.0
    %383 = vmatprep.subr.mxu0 0.0
    %384 = vmatpush2.msra.mxu0 0.0
    %385 = vmatprep.subr.mxu0 0.0
    %386 = vmatpush2.msra.mxu0 0.0
    %387 = vmatprep.subr.mxu0 0.0
    %388 = vmatpush2.msra.mxu0 0.0
    %389 = vmatprep.subr.mxu0 0.0
    %390 = vmatpush2.msra.mxu0 0.0
    %391 = vmatprep.subr.mxu0 0.0
    %392 = vmatpush2.msra.mxu0 0.0
    %393 = vmatprep.subr.mxu0 0.0
    %394 = vmatpush2.msra.mxu0 0.0
    %395 = vmatprep.subr.mxu0 0.0
    %396 = vmatpush2.msra.mxu0 0.0
    %397 = vmatprep.mubr.f32.mxu0 0.0
    %398 = vmatmul.mubr.f32.gmra.mxu0 %v331
    %v399 = vpop.f32.mrf.mxu0
    %v400 = vadd.f32 %v329, %v399
    %v401 = vpop.f32.mrf.mxu0
    %402 = vdwg.mxu0
    %v403 = vld [vmem:[#allocation7 + $0x78] sm:$0xff]
    %v404 = vld [vmem:[#allocation7 + $0x80] sm:$0xff]
    %v405 = vld [vmem:[#allocation7 + $0x88] sm:$0xff]
    %v406 = vld [vmem:[#allocation7 + $0x90] sm:$0xff]
    %v407 = vld [vmem:[#allocation7 + $0x98] sm:$0x1]
    %v408 = vlaneseq
    %v409 = vshrl.u32 %v408, 7
    %v410 = vsub.s32 0, %v409
    %v411 = vrot.slane %v407, %v410
    %v413 = vsel %vm76, %v314, 0
    %v416 = vsel %vm76, %v315, 0
    %v419 = vsel %vm76, %v317, 0
    %v422 = vsel %vm76, %v318, 0
    %424 = vmatprep.subr.mxu0 0.0
    %425 = vmatpush1.msra.mxu0 0.0
    %426 = vmatprep.subr.mxu0 0.0
    %427 = vmatpush1.msra.mxu0 0.0
    %428 = vmatprep.subr.mxu0 0.0
    %429 = vmatpush1.msra.mxu0 0.0
    %430 = vmatprep.subr.mxu0 0.0
    %431 = vmatpush1.msra.mxu0 0.0
    %432 = vmatprep.subr.mxu0 0.0
    %433 = vmatpush1.msra.mxu0 0.0
    %434 = vmatprep.subr.mxu0 0.0
    %435 = vmatpush1.msra.mxu0 0.0
    %436 = vmatprep.subr.mxu0 0.0
    %437 = vmatpush1.msra.mxu0 0.0
    %438 = vmatprep.subr.mxu0 0.0
    %439 = vmatpush1.msra.mxu0 0.0
    %440 = vmatprep.subr.mxu0 0.0
    %441 = vmatpush1.msra.mxu0 0.0
    %442 = vmatprep.subr.mxu0 0.0
    %443 = vmatpush1.msra.mxu0 0.0
    %444 = vmatprep.subr.mxu0 0.0
    %445 = vmatpush1.msra.mxu0 0.0
    %446 = vmatprep.subr.mxu0 0.0
    %447 = vmatpush1.msra.mxu0 0.0
    %448 = vmatprep.subr.mxu0 0.0
    %449 = vmatpush1.msra.mxu0 %v406
    %450 = vmatprep.subr.mxu0 0.0
    %451 = vmatpush1.msra.mxu0 %v405
    %452 = vmatprep.subr.mxu0 0.0
    %453 = vmatpush1.msra.mxu0 %v404
    %454 = vmatprep.subr.mxu0 0.0
    %455 = vmatpush1.msra.mxu0 %v403
    %456 = vmatprep.subr.mxu0 0.0
    %457 = vmatpush2.msra.mxu0 0.0
    %458 = vmatprep.subr.mxu0 0.0
    %459 = vmatpush2.msra.mxu0 0.0
    %460 = vmatprep.subr.mxu0 0.0
    %461 = vmatpush2.msra.mxu0 0.0
    %462 = vmatprep.subr.mxu0 0.0
    %463 = vmatpush2.msra.mxu0 0.0
    %464 = vmatprep.subr.mxu0 0.0
    %465 = vmatpush2.msra.mxu0 0.0
    %466 = vmatprep.subr.mxu0 0.0
    %467 = vmatpush2.msra.mxu0 0.0
    %468 = vmatprep.subr.mxu0 0.0
    %469 = vmatpush2.msra.mxu0 0.0
    %470 = vmatprep.subr.mxu0 0.0
    %471 = vmatpush2.msra.mxu0 0.0
    %472 = vmatprep.subr.mxu0 0.0
    %473 = vmatpush2.msra.mxu0 0.0
    %474 = vmatprep.subr.mxu0 0.0
    %475 = vmatpush2.msra.mxu0 0.0
    %476 = vmatprep.subr.mxu0 0.0
    %477 = vmatpush2.msra.mxu0 0.0
    %478 = vmatprep.subr.mxu0 0.0
    %479 = vmatpush2.msra.mxu0 0.0
    %480 = vmatprep.subr.mxu0 0.0
    %481 = vmatpush2.msra.mxu0 0.0
    %482 = vmatprep.subr.mxu0 0.0
    %483 = vmatpush2.msra.mxu0 0.0
    %484 = vmatprep.subr.mxu0 0.0
    %485 = vmatpush2.msra.mxu0 0.0
    %486 = vmatprep.subr.mxu0 0.0
    %487 = vmatpush2.msra.mxu0 0.0
    %488 = vmatprep.mubr.f32.mxu0 0.0
    %489 = vmatmul.mubr.f32.gmra.mxu0 %v413
    %v490 = vpop.f32.mrf.mxu0
    %v491 = vadd.f32 %v411, %v490
    %v492 = vpop.f32.mrf.mxu0
    %493 = vmatprep.mubr.f32.mxu0 0.0
    %494 = vmatmul.mubr.f32.gmra.mxu0 %v416
    %v495 = vpop.f32.mrf.mxu0
    %v496 = vadd.f32 %v411, %v495
    %v497 = vpop.f32.mrf.mxu0
    %498 = vmatprep.mubr.f32.mxu0 0.0
    %499 = vmatmul.mubr.f32.gmra.mxu0 %v419
    %v500 = vpop.f32.mrf.mxu0
    %v501 = vadd.f32 %v411, %v500
    %v502 = vpop.f32.mrf.mxu0
    %503 = vmatprep.mubr.f32.mxu0 0.0
    %504 = vmatmul.mubr.f32.gmra.mxu0 %v422
    %v505 = vpop.f32.mrf.mxu0
    %v506 = vadd.f32 %v411, %v505
    %v507 = vpop.f32.mrf.mxu0
    %508 = vdwg.mxu0
    %v509 = vld [vmem:[#allocation7 + $0xa0] sm:$0xff]
    %v510 = vld [vmem:[#allocation7 + $0xa8] sm:$0xff]
    %v511 = vld [vmem:[#allocation7 + $0xb0] sm:$0xff]
    %v512 = vld [vmem:[#allocation7 + $0xb8] sm:$0xff]
    %v513 = vld [vmem:[#allocation7 + $0xc0] sm:$0x1]
    %v514 = vlaneseq
    %v515 = vshrl.u32 %v514, 7
    %v516 = vsub.s32 0, %v515
    %v517 = vrot.slane %v513, %v516
    %518 = vmatprep.subr.mxu0 0.0
    %519 = vmatpush1.msra.mxu0 0.0
    %520 = vmatprep.subr.mxu0 0.0
    %521 = vmatpush1.msra.mxu0 0.0
    %522 = vmatprep.subr.mxu0 0.0
    %523 = vmatpush1.msra.mxu0 0.0
    %524 = vmatprep.subr.mxu0 0.0
    %525 = vmatpush1.msra.mxu0 0.0
    %526 = vmatprep.subr.mxu0 0.0
    %527 = vmatpush1.msra.mxu0 0.0
    %528 = vmatprep.subr.mxu0 0.0
    %529 = vmatpush1.msra.mxu0 0.0
    %530 = vmatprep.subr.mxu0 0.0
    %531 = vmatpush1.msra.mxu0 0.0
    %532 = vmatprep.subr.mxu0 0.0
    %533 = vmatpush1.msra.mxu0 0.0
    %534 = vmatprep.subr.mxu0 0.0
    %535 = vmatpush1.msra.mxu0 0.0
    %536 = vmatprep.subr.mxu0 0.0
    %537 = vmatpush1.msra.mxu0 0.0
    %538 = vmatprep.subr.mxu0 0.0
    %539 = vmatpush1.msra.mxu0 0.0
    %540 = vmatprep.subr.mxu0 0.0
    %541 = vmatpush1.msra.mxu0 0.0
    %542 = vmatprep.subr.mxu0 0.0
    %543 = vmatpush1.msra.mxu0 %v512
    %544 = vmatprep.subr.mxu0 0.0
    %545 = vmatpush1.msra.mxu0 %v511
    %546 = vmatprep.subr.mxu0 0.0
    %547 = vmatpush1.msra.mxu0 %v510
    %548 = vmatprep.subr.mxu0 0.0
    %549 = vmatpush1.msra.mxu0 %v509
    %550 = vmatprep.subr.mxu0 0.0
    %551 = vmatpush2.msra.mxu0 0.0
    %552 = vmatprep.subr.mxu0 0.0
    %553 = vmatpush2.msra.mxu0 0.0
    %554 = vmatprep.subr.mxu0 0.0
    %555 = vmatpush2.msra.mxu0 0.0
    %556 = vmatprep.subr.mxu0 0.0
    %557 = vmatpush2.msra.mxu0 0.0
    %558 = vmatprep.subr.mxu0 0.0
    %559 = vmatpush2.msra.mxu0 0.0
    %560 = vmatprep.subr.mxu0 0.0
    %561 = vmatpush2.msra.mxu0 0.0
    %562 = vmatprep.subr.mxu0 0.0
    %563 = vmatpush2.msra.mxu0 0.0
    %564 = vmatprep.subr.mxu0 0.0
    %565 = vmatpush2.msra.mxu0 0.0
    %566 = vmatprep.subr.mxu0 0.0
    %567 = vmatpush2.msra.mxu0 0.0
    %568 = vmatprep.subr.mxu0 0.0
    %569 = vmatpush2.msra.mxu0 0.0
    %570 = vmatprep.subr.mxu0 0.0
    %571 = vmatpush2.msra.mxu0 0.0
    %572 = vmatprep.subr.mxu0 0.0
    %573 = vmatpush2.msra.mxu0 0.0
    %574 = vmatprep.subr.mxu0 0.0
    %575 = vmatpush2.msra.mxu0 0.0
    %576 = vmatprep.subr.mxu0 0.0
    %577 = vmatpush2.msra.mxu0 0.0
    %578 = vmatprep.subr.mxu0 0.0
    %579 = vmatpush2.msra.mxu0 0.0
    %580 = vmatprep.subr.mxu0 0.0
    %581 = vmatpush2.msra.mxu0 0.0
    %582 = vmatprep.mubr.f32.mxu0 0.0
    %583 = vmatmul.mubr.f32.gmra.mxu0 %v413
    %v584 = vpop.f32.mrf.mxu0
    %v585 = vadd.f32 %v517, %v584
    %v586 = vpop.f32.mrf.mxu0
    %587 = vmatprep.mubr.f32.mxu0 0.0
    %588 = vmatmul.mubr.f32.gmra.mxu0 %v416
    %v589 = vpop.f32.mrf.mxu0
    %v590 = vadd.f32 %v517, %v589
    %v591 = vpop.f32.mrf.mxu0
    %592 = vmatprep.mubr.f32.mxu0 0.0
    %593 = vmatmul.mubr.f32.gmra.mxu0 %v419
    %v594 = vpop.f32.mrf.mxu0
    %v595 = vadd.f32 %v517, %v594
    %v596 = vpop.f32.mrf.mxu0
    %597 = vmatprep.mubr.f32.mxu0 0.0
    %598 = vmatmul.mubr.f32.gmra.mxu0 %v422
    %v599 = vpop.f32.mrf.mxu0
    %v600 = vadd.f32 %v517, %v599
    %v601 = vpop.f32.mrf.mxu0
    %602 = vdwg.mxu0
    %v604 = vsel %vm76, %v400, 0
    %v607 = vsel %vm76, %v491, 0
    %v610 = vsel %vm76, %v496, 0
    %612 = vmatprep.subr.mxu0 0.0
    %613 = vmatpush1.xpose.msra.mxu0 0.0
    %614 = vmatprep.subr.mxu0 0.0
    %615 = vmatpush1.xpose.msra.mxu0 0.0
    %616 = vmatprep.subr.mxu0 0.0
    %617 = vmatpush1.xpose.msra.mxu0 0.0
    %618 = vmatprep.subr.mxu0 0.0
    %619 = vmatpush1.xpose.msra.mxu0 0.0
    %620 = vmatprep.subr.mxu0 0.0
    %621 = vmatpush1.xpose.msra.mxu0 0.0
    %622 = vmatprep.subr.mxu0 0.0
    %623 = vmatpush1.xpose.msra.mxu0 0.0
    %624 = vmatprep.subr.mxu0 0.0
    %625 = vmatpush1.xpose.msra.mxu0 0.0
    %626 = vmatprep.subr.mxu0 0.0
    %627 = vmatpush1.xpose.msra.mxu0 0.0
    %628 = vmatprep.subr.mxu0 0.0
    %629 = vmatpush1.xpose.msra.mxu0 0.0
    %630 = vmatprep.subr.mxu0 0.0
    %631 = vmatpush1.xpose.msra.mxu0 0.0
    %632 = vmatprep.subr.mxu0 0.0
    %633 = vmatpush1.xpose.msra.mxu0 0.0
    %634 = vmatprep.subr.mxu0 0.0
    %635 = vmatpush1.xpose.msra.mxu0 0.0
    %636 = vmatprep.subr.mxu0 0.0
    %637 = vmatpush1.xpose.msra.mxu0 0.0
    %638 = vmatprep.subr.mxu0 0.0
    %639 = vmatpush1.xpose.msra.mxu0 0.0
    %640 = vmatprep.subr.mxu0 0.0
    %641 = vmatpush1.xpose.msra.mxu0 %v610
    %642 = vmatprep.subr.mxu0 0.0
    %643 = vmatpush1.xpose.msra.mxu0 %v607
    %644 = vmatprep.subr.mxu0 0.0
    %645 = vmatpush2.xpose.msra.mxu0 0.0
    %646 = vmatprep.subr.mxu0 0.0
    %647 = vmatpush2.xpose.msra.mxu0 0.0
    %648 = vmatprep.subr.mxu0 0.0
    %649 = vmatpush2.xpose.msra.mxu0 0.0
    %650 = vmatprep.subr.mxu0 0.0
    %651 = vmatpush2.xpose.msra.mxu0 0.0
    %652 = vmatprep.subr.mxu0 0.0
    %653 = vmatpush2.xpose.msra.mxu0 0.0
    %654 = vmatprep.subr.mxu0 0.0
    %655 = vmatpush2.xpose.msra.mxu0 0.0
    %656 = vmatprep.subr.mxu0 0.0
    %657 = vmatpush2.xpose.msra.mxu0 0.0
    %658 = vmatprep.subr.mxu0 0.0
    %659 = vmatpush2.xpose.msra.mxu0 0.0
    %660 = vmatprep.subr.mxu0 0.0
    %661 = vmatpush2.xpose.msra.mxu0 0.0
    %662 = vmatprep.subr.mxu0 0.0
    %663 = vmatpush2.xpose.msra.mxu0 0.0
    %664 = vmatprep.subr.mxu0 0.0
    %665 = vmatpush2.xpose.msra.mxu0 0.0
    %666 = vmatprep.subr.mxu0 0.0
    %667 = vmatpush2.xpose.msra.mxu0 0.0
    %668 = vmatprep.subr.mxu0 0.0
    %669 = vmatpush2.xpose.msra.mxu0 0.0
    %670 = vmatprep.subr.mxu0 0.0
    %671 = vmatpush2.xpose.msra.mxu0 0.0
    %672 = vmatprep.subr.mxu0 0.0
    %673 = vmatpush2.xpose.msra.mxu0 0.0
    %674 = vmatprep.subr.mxu0 0.0
    %675 = vmatpush2.xpose.msra.mxu0 0.0
    %676 = vmatprep.mubr.f32.mxu0 0.0
    %677 = vmatmul.mubr.f32.gmra.mxu0 %v604
    %v678 = vpop.f32.mrf.mxu0
    %v679 = vadd.f32 0.0, %v678
    %v680 = vpop.f32.mrf.mxu0
    %681 = vdwg.mxu0
    %v683 = vsel %vm76, %v501, 0
    %v686 = vsel %vm76, %v506, 0
    %688 = vmatprep.subr.mxu0 0.0
    %689 = vmatpush1.xpose.msra.mxu0 0.0
    %690 = vmatprep.subr.mxu0 0.0
    %691 = vmatpush1.xpose.msra.mxu0 0.0
    %692 = vmatprep.subr.mxu0 0.0
    %693 = vmatpush1.xpose.msra.mxu0 0.0
    %694 = vmatprep.subr.mxu0 0.0
    %695 = vmatpush1.xpose.msra.mxu0 0.0
    %696 = vmatprep.subr.mxu0 0.0
    %697 = vmatpush1.xpose.msra.mxu0 0.0
    %698 = vmatprep.subr.mxu0 0.0
    %699 = vmatpush1.xpose.msra.mxu0 0.0
    %700 = vmatprep.subr.mxu0 0.0
    %701 = vmatpush1.xpose.msra.mxu0 0.0
    %702 = vmatprep.subr.mxu0 0.0
    %703 = vmatpush1.xpose.msra.mxu0 0.0
    %704 = vmatprep.subr.mxu0 0.0
    %705 = vmatpush1.xpose.msra.mxu0 0.0
    %706 = vmatprep.subr.mxu0 0.0
    %707 = vmatpush1.xpose.msra.mxu0 0.0
    %708 = vmatprep.subr.mxu0 0.0
    %709 = vmatpush1.xpose.msra.mxu0 0.0
    %710 = vmatprep.subr.mxu0 0.0
    %711 = vmatpush1.xpose.msra.mxu0 0.0
    %712 = vmatprep.subr.mxu0 0.0
    %713 = vmatpush1.xpose.msra.mxu0 0.0
    %714 = vmatprep.subr.mxu0 0.0
    %715 = vmatpush1.xpose.msra.mxu0 0.0
    %716 = vmatprep.subr.mxu0 0.0
    %717 = vmatpush1.xpose.msra.mxu0 %v686
    %718 = vmatprep.subr.mxu0 0.0
    %719 = vmatpush1.xpose.msra.mxu0 %v683
    %720 = vmatprep.subr.mxu0 0.0
    %721 = vmatpush2.xpose.msra.mxu0 0.0
    %722 = vmatprep.subr.mxu0 0.0
    %723 = vmatpush2.xpose.msra.mxu0 0.0
    %724 = vmatprep.subr.mxu0 0.0
    %725 = vmatpush2.xpose.msra.mxu0 0.0
    %726 = vmatprep.subr.mxu0 0.0
    %727 = vmatpush2.xpose.msra.mxu0 0.0
    %728 = vmatprep.subr.mxu0 0.0
    %729 = vmatpush2.xpose.msra.mxu0 0.0
    %730 = vmatprep.subr.mxu0 0.0
    %731 = vmatpush2.xpose.msra.mxu0 0.0
    %732 = vmatprep.subr.mxu0 0.0
    %733 = vmatpush2.xpose.msra.mxu0 0.0
    %734 = vmatprep.subr.mxu0 0.0
    %735 = vmatpush2.xpose.msra.mxu0 0.0
    %736 = vmatprep.subr.mxu0 0.0
    %737 = vmatpush2.xpose.msra.mxu0 0.0
    %738 = vmatprep.subr.mxu0 0.0
    %739 = vmatpush2.xpose.msra.mxu0 0.0
    %740 = vmatprep.subr.mxu0 0.0
    %741 = vmatpush2.xpose.msra.mxu0 0.0
    %742 = vmatprep.subr.mxu0 0.0
    %743 = vmatpush2.xpose.msra.mxu0 0.0
    %744 = vmatprep.subr.mxu0 0.0
    %745 = vmatpush2.xpose.msra.mxu0 0.0
    %746 = vmatprep.subr.mxu0 0.0
    %747 = vmatpush2.xpose.msra.mxu0 0.0
    %748 = vmatprep.subr.mxu0 0.0
    %749 = vmatpush2.xpose.msra.mxu0 0.0
    %750 = vmatprep.subr.mxu0 0.0
    %751 = vmatpush2.xpose.msra.mxu0 0.0
    %752 = vmatprep.mubr.f32.mxu0 0.0
    %753 = vmatmul.mubr.f32.gmra.mxu0 %v604
    %v754 = vpop.f32.mrf.mxu0
    %v755 = vadd.f32 0.0, %v754
    %v756 = vpop.f32.mrf.mxu0
    %757 = vdwg.mxu0
    %vm758 = vcmask 130048
    %v759 = vsel %vm758, %v679, -inf
    %760 = vmax.xlane.f32.xlu0 %v759
    %v761 = vpop.xlane.xlu0 %760
    %v762 = vsel %vm758, %v755, -inf
    %763 = vmax.xlane.f32.xlu0 %v762
    %v764 = vpop.xlane.xlu0 %763
    %v765 = vsub.f32 %v679, %v761
    %v766 = vsub.f32 %v755, %v764
    %v767 = vmul.f32 %v765, 1.442695
    %v768 = vpow.pop %v767
    %v769 = vmul.f32 %v766, 1.442695
    %v770 = vpow.pop %v769
    %v771 = vsel %vm758, %v768, 0.0
    %772 = vadd.xlane.f32.xlu0 %v771
    %v773 = vpop.xlane.xlu0 %772
    %v774 = vsel %vm758, %v770, 0.0
    %775 = vadd.xlane.f32.xlu0 %v774
    %v776 = vpop.xlane.xlu0 %775
    %v777 = vrcp.pop %v773
    %v778 = vrcp.pop %v776
    %v779 = vmul.f32 %v768, %v777
    %v780 = vmul.f32 %v770, %v778
    %v782 = vsel %vm758, %v779, 0
    %784 = vmatprep.subr.mxu0 0.0
    %785 = vmatpush1.msra.mxu0 0.0
    %786 = vmatprep.subr.mxu0 0.0
    %787 = vmatpush1.msra.mxu0 0.0
    %788 = vmatprep.subr.mxu0 0.0
    %789 = vmatpush1.msra.mxu0 0.0
    %790 = vmatprep.subr.mxu0 0.0
    %791 = vmatpush1.msra.mxu0 0.0
    %792 = vmatprep.subr.mxu0 0.0
    %793 = vmatpush1.msra.mxu0 0.0
    %794 = vmatprep.subr.mxu0 0.0
    %795 = vmatpush1.msra.mxu0 0.0
    %796 = vmatprep.subr.mxu0 0.0
    %797 = vmatpush1.msra.mxu0 0.0
    %798 = vmatprep.subr.mxu0 0.0
    %799 = vmatpush1.msra.mxu0 0.0
    %800 = vmatprep.subr.mxu0 0.0
    %801 = vmatpush1.msra.mxu0 0.0
    %802 = vmatprep.subr.mxu0 0.0
    %803 = vmatpush1.msra.mxu0 0.0
    %804 = vmatprep.subr.mxu0 0.0
    %805 = vmatpush1.msra.mxu0 0.0
    %806 = vmatprep.subr.mxu0 0.0
    %807 = vmatpush1.msra.mxu0 0.0
    %808 = vmatprep.subr.mxu0 0.0
    %809 = vmatpush1.msra.mxu0 0.0
    %810 = vmatprep.subr.mxu0 0.0
    %811 = vmatpush1.msra.mxu0 0.0
    %812 = vmatprep.subr.mxu0 0.0
    %813 = vmatpush1.msra.mxu0 %v590
    %814 = vmatprep.subr.mxu0 0.0
    %815 = vmatpush1.msra.mxu0 %v585
    %816 = vmatprep.subr.mxu0 0.0
    %817 = vmatpush2.msra.mxu0 0.0
    %818 = vmatprep.subr.mxu0 0.0
    %819 = vmatpush2.msra.mxu0 0.0
    %820 = vmatprep.subr.mxu0 0.0
    %821 = vmatpush2.msra.mxu0 0.0
    %822 = vmatprep.subr.mxu0 0.0
    %823 = vmatpush2.msra.mxu0 0.0
    %824 = vmatprep.subr.mxu0 0.0
    %825 = vmatpush2.msra.mxu0 0.0
    %826 = vmatprep.subr.mxu0 0.0
    %827 = vmatpush2.msra.mxu0 0.0
    %828 = vmatprep.subr.mxu0 0.0
    %829 = vmatpush2.msra.mxu0 0.0
    %830 = vmatprep.subr.mxu0 0.0
    %831 = vmatpush2.msra.mxu0 0.0
    %832 = vmatprep.subr.mxu0 0.0
    %833 = vmatpush2.msra.mxu0 0.0
    %834 = vmatprep.subr.mxu0 0.0
    %835 = vmatpush2.msra.mxu0 0.0
    %836 = vmatprep.subr.mxu0 0.0
    %837 = vmatpush2.msra.mxu0 0.0
    %838 = vmatprep.subr.mxu0 0.0
    %839 = vmatpush2.msra.mxu0 0.0
    %840 = vmatprep.subr.mxu0 0.0
    %841 = vmatpush2.msra.mxu0 0.0
    %842 = vmatprep.subr.mxu0 0.0
    %843 = vmatpush2.msra.mxu0 0.0
    %844 = vmatprep.subr.mxu0 0.0
    %845 = vmatpush2.msra.mxu0 0.0
    %846 = vmatprep.subr.mxu0 0.0
    %847 = vmatpush2.msra.mxu0 0.0
    %848 = vmatprep.mubr.f32.mxu0 0.0
    %849 = vmatmul.mubr.f32.gmra.mxu0 %v782
    %v850 = vpop.f32.mrf.mxu0
    %v851 = vadd.f32 0.0, %v850
    %v852 = vpop.f32.mrf.mxu0
    %853 = vdwg.mxu0
    %v855 = vsel %vm758, %v780, 0
    %857 = vmatprep.subr.mxu0 0.0
    %858 = vmatpush1.msra.mxu0 0.0
    %859 = vmatprep.subr.mxu0 0.0
    %860 = vmatpush1.msra.mxu0 0.0
    %861 = vmatprep.subr.mxu0 0.0
    %862 = vmatpush1.msra.mxu0 0.0
    %863 = vmatprep.subr.mxu0 0.0
    %864 = vmatpush1.msra.mxu0 0.0
    %865 = vmatprep.subr.mxu0 0.0
    %866 = vmatpush1.msra.mxu0 0.0
    %867 = vmatprep.subr.mxu0 0.0
    %868 = vmatpush1.msra.mxu0 0.0
    %869 = vmatprep.subr.mxu0 0.0
    %870 = vmatpush1.msra.mxu0 0.0
    %871 = vmatprep.subr.mxu0 0.0
    %872 = vmatpush1.msra.mxu0 0.0
    %873 = vmatprep.subr.mxu0 0.0
    %874 = vmatpush1.msra.mxu0 0.0
    %875 = vmatprep.subr.mxu0 0.0
    %876 = vmatpush1.msra.mxu0 0.0
    %877 = vmatprep.subr.mxu0 0.0
    %878 = vmatpush1.msra.mxu0 0.0
    %879 = vmatprep.subr.mxu0 0.0
    %880 = vmatpush1.msra.mxu0 0.0
    %881 = vmatprep.subr.mxu0 0.0
    %882 = vmatpush1.msra.mxu0 0.0
    %883 = vmatprep.subr.mxu0 0.0
    %884 = vmatpush1.msra.mxu0 0.0
    %885 = vmatprep.subr.mxu0 0.0
    %886 = vmatpush1.msra.mxu0 %v600
    %887 = vmatprep.subr.mxu0 0.0
    %888 = vmatpush1.msra.mxu0 %v595
    %889 = vmatprep.subr.mxu0 0.0
    %890 = vmatpush2.msra.mxu0 0.0
    %891 = vmatprep.subr.mxu0 0.0
    %892 = vmatpush2.msra.mxu0 0.0
    %893 = vmatprep.subr.mxu0 0.0
    %894 = vmatpush2.msra.mxu0 0.0
    %895 = vmatprep.subr.mxu0 0.0
    %896 = vmatpush2.msra.mxu0 0.0
    %897 = vmatprep.subr.mxu0 0.0
    %898 = vmatpush2.msra.mxu0 0.0
    %899 = vmatprep.subr.mxu0 0.0
    %900 = vmatpush2.msra.mxu0 0.0
    %901 = vmatprep.subr.mxu0 0.0
    %902 = vmatpush2.msra.mxu0 0.0
    %903 = vmatprep.subr.mxu0 0.0
    %904 = vmatpush2.msra.mxu0 0.0
    %905 = vmatprep.subr.mxu0 0.0
    %906 = vmatpush2.msra.mxu0 0.0
    %907 = vmatprep.subr.mxu0 0.0
    %908 = vmatpush2.msra.mxu0 0.0
    %909 = vmatprep.subr.mxu0 0.0
    %910 = vmatpush2.msra.mxu0 0.0
    %911 = vmatprep.subr.mxu0 0.0
    %912 = vmatpush2.msra.mxu0 0.0
    %913 = vmatprep.subr.mxu0 0.0
    %914 = vmatpush2.msra.mxu0 0.0
    %915 = vmatprep.subr.mxu0 0.0
    %916 = vmatpush2.msra.mxu0 0.0
    %917 = vmatprep.subr.mxu0 0.0
    %918 = vmatpush2.msra.mxu0 0.0
    %919 = vmatprep.subr.mxu0 0.0
    %920 = vmatpush2.msra.mxu0 0.0
    %921 = vmatprep.mubr.f32.mxu0 0.0
    %922 = vmatmul.mubr.f32.gmra.mxu0 %v855
    %v923 = vpop.f32.mrf.mxu0
    %v924 = vadd.f32 0.0, %v923
    %v925 = vpop.f32.mrf.mxu0
    %926 = vdwg.mxu0
    %v927 = vld [vmem:[#allocation7 + $0xc8] sm:$0xff]
    %v928 = vld [vmem:[#allocation7 + $0xd0] sm:$0xff]
    %v929 = vld [vmem:[#allocation7 + $0xd8] sm:$0xff]
    %v930 = vld [vmem:[#allocation7 + $0xe0] sm:$0xff]
    %v931 = vld [vmem:[#allocation7 + $0xe8] sm:$0x1]
    %v932 = vlaneseq
    %v933 = vshrl.u32 %v932, 7
    %v934 = vsub.s32 0, %v933
    %v935 = vrot.slane %v931, %v934
    %v937 = vsel %vm76, %v851, 0
    %v940 = vsel %vm76, %v924, 0
    %942 = vmatprep.subr.mxu0 0.0
    %943 = vmatpush1.msra.mxu0 0.0
    %944 = vmatprep.subr.mxu0 0.0
    %945 = vmatpush1.msra.mxu0 0.0
    %946 = vmatprep.subr.mxu0 0.0
    %947 = vmatpush1.msra.mxu0 0.0
    %948 = vmatprep.subr.mxu0 0.0
    %949 = vmatpush1.msra.mxu0 0.0
    %950 = vmatprep.subr.mxu0 0.0
    %951 = vmatpush1.msra.mxu0 0.0
    %952 = vmatprep.subr.mxu0 0.0
    %953 = vmatpush1.msra.mxu0 0.0
    %954 = vmatprep.subr.mxu0 0.0
    %955 = vmatpush1.msra.mxu0 0.0
    %956 = vmatprep.subr.mxu0 0.0
    %957 = vmatpush1.msra.mxu0 0.0
    %958 = vmatprep.subr.mxu0 0.0
    %959 = vmatpush1.msra.mxu0 0.0
    %960 = vmatprep.subr.mxu0 0.0
    %961 = vmatpush1.msra.mxu0 0.0
    %962 = vmatprep.subr.mxu0 0.0
    %963 = vmatpush1.msra.mxu0 0.0
    %964 = vmatprep.subr.mxu0 0.0
    %965 = vmatpush1.msra.mxu0 0.0
    %966 = vmatprep.subr.mxu0 0.0
    %967 = vmatpush1.msra.mxu0 %v930
    %968 = vmatprep.subr.mxu0 0.0
    %969 = vmatpush1.msra.mxu0 %v929
    %970 = vmatprep.subr.mxu0 0.0
    %971 = vmatpush1.msra.mxu0 %v928
    %972 = vmatprep.subr.mxu0 0.0
    %973 = vmatpush1.msra.mxu0 %v927
    %974 = vmatprep.subr.mxu0 0.0
    %975 = vmatpush2.msra.mxu0 0.0
    %976 = vmatprep.subr.mxu0 0.0
    %977 = vmatpush2.msra.mxu0 0.0
    %978 = vmatprep.subr.mxu0 0.0
    %979 = vmatpush2.msra.mxu0 0.0
    %980 = vmatprep.subr.mxu0 0.0
    %981 = vmatpush2.msra.mxu0 0.0
    %982 = vmatprep.subr.mxu0 0.0
    %983 = vmatpush2.msra.mxu0 0.0
    %984 = vmatprep.subr.mxu0 0.0
    %985 = vmatpush2.msra.mxu0 0.0
    %986 = vmatprep.subr.mxu0 0.0
    %987 = vmatpush2.msra.mxu0 0.0
    %988 = vmatprep.subr.mxu0 0.0
    %989 = vmatpush2.msra.mxu0 0.0
    %990 = vmatprep.subr.mxu0 0.0
    %991 = vmatpush2.msra.mxu0 0.0
    %992 = vmatprep.subr.mxu0 0.0
    %993 = vmatpush2.msra.mxu0 0.0
    %994 = vmatprep.subr.mxu0 0.0
    %995 = vmatpush2.msra.mxu0 0.0
    %996 = vmatprep.subr.mxu0 0.0
    %997 = vmatpush2.msra.mxu0 0.0
    %998 = vmatprep.subr.mxu0 0.0
    %999 = vmatpush2.msra.mxu0 0.0
    %1000 = vmatprep.subr.mxu0 0.0
    %1001 = vmatpush2.msra.mxu0 0.0
    %1002 = vmatprep.subr.mxu0 0.0
    %1003 = vmatpush2.msra.mxu0 0.0
    %1004 = vmatprep.subr.mxu0 0.0
    %1005 = vmatpush2.msra.mxu0 0.0
    %1006 = vmatprep.mubr.f32.mxu0 0.0
    %1007 = vmatmul.mubr.f32.gmra.mxu0 %v937
    %v1008 = vpop.f32.mrf.mxu0
    %v1009 = vadd.f32 %v935, %v1008
    %v1010 = vpop.f32.mrf.mxu0
    %1011 = vmatprep.mubr.f32.mxu0 0.0
    %1012 = vmatmul.mubr.f32.gmra.mxu0 %v940
    %v1013 = vpop.f32.mrf.mxu0
    %v1014 = vadd.f32 %v935, %v1013
    %v1015 = vpop.f32.mrf.mxu0
    %1016 = vdwg.mxu0
    %v1017 = vadd.f32 %v320, %v1009
    %v1018 = vadd.f32 %v320, %v1014
    %v1019 = vld [vmem:[#allocation7 + $0xf0] sm:$0x1]
    %v1020 = vld [vmem:[#allocation7 + $0xf8] sm:$0x1]
    %v1021 = vsel %vm76, %v1017, 0.0
    %1022 = vadd.xlane.f32.xlu0 %v1021
    %v1023 = vpop.xlane.xlu0 %1022
    %v1024 = vsel %vm76, %v1018, 0.0
    %1025 = vadd.xlane.f32.xlu0 %v1024
    %v1026 = vpop.xlane.xlu0 %1025
    %v1027 = vrcp.pop 32.0
    %v1028 = vmul.f32 %v1023, %v1027
    %v1029 = vmul.f32 %v1026, %v1027
    %v1030 = vsub.f32 %v1017, %v1028
    %v1031 = vsub.f32 %v1018, %v1029
    %v1032 = vmul.f32 %v1030, %v1030
    %v1033 = vmul.f32 %v1031, %v1031
    %v1034 = vsel %vm76, %v1032, 0.0
    %1035 = vadd.xlane.f32.xlu0 %v1034
    %v1036 = vpop.xlane.xlu0 %1035
    %v1037 = vsel %vm76, %v1033, 0.0
    %1038 = vadd.xlane.f32.xlu0 %v1037
    %v1039 = vpop.xlane.xlu0 %1038
    %v1040 = vmul.f32 %v1036, %v1027
    %v1041 = vmul.f32 %v1039, %v1027
    %v1042 = vadd.f32 %v1040, 1e-05
    %v1043 = vadd.f32 %v1041, 1e-05
    %v1044 = vrsqrt.pop %v1042
    %v1045 = vrsqrt.pop %v1043
    %v1046 = vmul.f32 %v1030, %v1044
    %v1047 = vmul.f32 %v1031, %v1045
    %v1048 = vlaneseq
    %v1049 = vshrl.u32 %v1048, 7
    %v1050 = vsub.s32 0, %v1049
    %v1051 = vrot.slane %v1019, %v1050
    %v1052 = vmul.f32 %v1046, %v1051
    %v1053 = vmul.f32 %v1047, %v1051
    %v1054 = vlaneseq
    %v1055 = vshrl.u32 %v1054, 7
    %v1056 = vsub.s32 0, %v1055
    %v1057 = vrot.slane %v1020, %v1056
    %v1058 = vadd.f32 %v1052, %v1057
    %v1059 = vadd.f32 %v1053, %v1057
    %v1060 = vld [vmem:[#allocation7 + $0x100] sm:$0xff]
    %v1061 = vld [vmem:[#allocation7 + $0x108] sm:$0xff]
    %v1062 = vld [vmem:[#allocation7 + $0x110] sm:$0xff]
    %v1063 = vld [vmem:[#allocation7 + $0x118] sm:$0xff]
    %v1064 = vld [vmem:[#allocation7 + $0x120] sm:$0x1]
    %v1065 = vlaneseq
    %v1066 = vshrl.u32 %v1065, 7
    %v1067 = vsub.s32 0, %v1066
    %v1068 = vrot.slane %v1064, %v1067
    %v1070 = vsel %vm76, %v1058, 0
    %v1073 = vsel %vm76, %v1059, 0
    %1075 = vmatprep.subr.mxu0 0.0
    %1076 = vmatpush1.msra.mxu0 0.0
    %1077 = vmatprep.subr.mxu0 0.0
    %1078 = vmatpush1.msra.mxu0 0.0
    %1079 = vmatprep.subr.mxu0 0.0
    %1080 = vmatpush1.msra.mxu0 0.0
    %1081 = vmatprep.subr.mxu0 0.0
    %1082 = vmatpush1.msra.mxu0 0.0
    %1083 = vmatprep.subr.mxu0 0.0
    %1084 = vmatpush1.msra.mxu0 0.0
    %1085 = vmatprep.subr.mxu0 0.0
    %1086 = vmatpush1.msra.mxu0 0.0
    %1087 = vmatprep.subr.mxu0 0.0
    %1088 = vmatpush1.msra.mxu0 0.0
    %1089 = vmatprep.subr.mxu0 0.0
    %1090 = vmatpush1.msra.mxu0 0.0
    %1091 = vmatprep.subr.mxu0 0.0
    %1092 = vmatpush1.msra.mxu0 0.0
    %1093 = vmatprep.subr.mxu0 0.0
    %1094 = vmatpush1.msra.mxu0 0.0
    %1095 = vmatprep.subr.mxu0 0.0
    %1096 = vmatpush1.msra.mxu0 0.0
    %1097 = vmatprep.subr.mxu0 0.0
    %1098 = vmatpush1.msra.mxu0 0.0
    %1099 = vmatprep.subr.mxu0 0.0
    %1100 = vmatpush1.msra.mxu0 %v1063
    %1101 = vmatprep.subr.mxu0 0.0
    %1102 = vmatpush1.msra.mxu0 %v1062
    %1103 = vmatprep.subr.mxu0 0.0
    %1104 = vmatpush1.msra.mxu0 %v1061
    %1105 = vmatprep.subr.mxu0 0.0
    %1106 = vmatpush1.msra.mxu0 %v1060
    %1107 = vmatprep.subr.mxu0 0.0
    %1108 = vmatpush2.msra.mxu0 0.0
    %1109 = vmatprep.subr.mxu0 0.0
    %1110 = vmatpush2.msra.mxu0 0.0
    %1111 = vmatprep.subr.mxu0 0.0
    %1112 = vmatpush2.msra.mxu0 0.0
    %1113 = vmatprep.subr.mxu0 0.0
    %1114 = vmatpush2.msra.mxu0 0.0
    %1115 = vmatprep.subr.mxu0 0.0
    %1116 = vmatpush2.msra.mxu0 0.0
    %1117 = vmatprep.subr.mxu0 0.0
    %1118 = vmatpush2.msra.mxu0 0.0
    %1119 = vmatprep.subr.mxu0 0.0
    %1120 = vmatpush2.msra.mxu0 0.0
    %1121 = vmatprep.subr.mxu0 0.0
    %1122 = vmatpush2.msra.mxu0 0.0
    %1123 = vmatprep.subr.mxu0 0.0
    %1124 = vmatpush2.msra.mxu0 0.0
    %1125 = vmatprep.subr.mxu0 0.0
    %1126 = vmatpush2.msra.mxu0 0.0
    %1127 = vmatprep.subr.mxu0 0.0
    %1128 = vmatpush2.msra.mxu0 0.0
    %1129 = vmatprep.subr.mxu0 0.0
    %1130 = vmatpush2.msra.mxu0 0.0
    %1131 = vmatprep.subr.mxu0 0.0
    %1132 = vmatpush2.msra.mxu0 0.0
    %1133 = vmatprep.subr.mxu0 0.0
    %1134 = vmatpush2.msra.mxu0 0.0
    %1135 = vmatprep.subr.mxu0 0.0
    %1136 = vmatpush2.msra.mxu0 0.0
    %1137 = vmatprep.subr.mxu0 0.0
    %1138 = vmatpush2.msra.mxu0 0.0
    %1139 = vmatprep.mubr.f32.mxu0 0.0
    %1140 = vmatmul.mubr.f32.gmra.mxu0 %v1070
    %v1141 = vpop.f32.mrf.mxu0
    %v1142 = vadd.f32 %v1068, %v1141
    %v1143 = vpop.f32.mrf.mxu0
    %1144 = vmatprep.mubr.f32.mxu0 0.0
    %1145 = vmatmul.mubr.f32.gmra.mxu0 %v1073
    %v1146 = vpop.f32.mrf.mxu0
    %v1147 = vadd.f32 %v1068, %v1146
    %v1148 = vpop.f32.mrf.mxu0
    %1149 = vdwg.mxu0
    %v1150 = vmax.f32 %v1142, 0.0
    %v1151 = vmax.f32 %v1147, 0.0
    %v1152 = vld [vmem:[#allocation7 + $0x128] sm:$0xff]
    %v1153 = vld [vmem:[#allocation7 + $0x130] sm:$0xff]
    %v1154 = vld [vmem:[#allocation7 + $0x138] sm:$0xff]
    %v1155 = vld [vmem:[#allocation7 + $0x140] sm:$0xff]
    %v1156 = vld [vmem:[#allocation7 + $0x148] sm:$0xff]
    %v1157 = vld [vmem:[#allocation7 + $0x150] sm:$0xff]
    %v1158 = vld [vmem:[#allocation7 + $0x158] sm:$0xff]
    %v1159 = vld [vmem:[#allocation7 + $0x160] sm:$0xff]
    %v1160 = vld [vmem:[#allocation7 + $0x168] sm:$0x1]
    %v1161 = vlaneseq
    %v1162 = vshrl.u32 %v1161, 7
    %v1163 = vsub.s32 0, %v1162
    %v1164 = vrot.slane %v1160, %v1163
    %vm1165 = vcmask 523264
    %v1167 = vsel %vm1165, %v1150, 0
    %v1170 = vsel %vm1165, %v1151, 0
    %1172 = vmatprep.subr.mxu0 0.0
    %1173 = vmatpush1.msra.mxu0 0.0
    %1174 = vmatprep.subr.mxu0 0.0
    %1175 = vmatpush1.msra.mxu0 0.0
    %1176 = vmatprep.subr.mxu0 0.0
    %1177 = vmatpush1.msra.mxu0 0.0
    %1178 = vmatprep.subr.mxu0 0.0
    %1179 = vmatpush1.msra.mxu0 0.0
    %1180 = vmatprep.subr.mxu0 0.0
    %1181 = vmatpush1.msra.mxu0 0.0
    %1182 = vmatprep.subr.mxu0 0.0
    %1183 = vmatpush1.msra.mxu0 0.0
    %1184 = vmatprep.subr.mxu0 0.0
    %1185 = vmatpush1.msra.mxu0 0.0
    %1186 = vmatprep.subr.mxu0 0.0
    %1187 = vmatpush1.msra.mxu0 0.0
    %1188 = vmatprep.subr.mxu0 0.0
    %1189 = vmatpush1.msra.mxu0 %v1159
    %1190 = vmatprep.subr.mxu0 0.0
    %1191 = vmatpush1.msra.mxu0 %v1158
    %1192 = vmatprep.subr.mxu0 0.0
    %1193 = vmatpush1.msra.mxu0 %v1157
    %1194 = vmatprep.subr.mxu0 0.0
    %1195 = vmatpush1.msra.mxu0 %v1156
    %1196 = vmatprep.subr.mxu0 0.0
    %1197 = vmatpush1.msra.mxu0 %v1155
    %1198 = vmatprep.subr.mxu0 0.0
    %1199 = vmatpush1.msra.mxu0 %v1154
    %1200 = vmatprep.subr.mxu0 0.0
    %1201 = vmatpush1.msra.mxu0 %v1153
    %1202 = vmatprep.subr.mxu0 0.0
    %1203 = vmatpush1.msra.mxu0 %v1152
    %1204 = vmatprep.subr.mxu0 0.0
    %1205 = vmatpush2.msra.mxu0 0.0
    %1206 = vmatprep.subr.mxu0 0.0
    %1207 = vmatpush2.msra.mxu0 0.0
    %1208 = vmatprep.subr.mxu0 0.0
    %1209 = vmatpush2.msra.mxu0 0.0
    %1210 = vmatprep.subr.mxu0 0.0
    %1211 = vmatpush2.msra.mxu0 0.0
    %1212 = vmatprep.subr.mxu0 0.0
    %1213 = vmatpush2.msra.mxu0 0.0
    %1214 = vmatprep.subr.mxu0 0.0
    %1215 = vmatpush2.msra.mxu0 0.0
    %1216 = vmatprep.subr.mxu0 0.0
    %1217 = vmatpush2.msra.mxu0 0.0
    %1218 = vmatprep.subr.mxu0 0.0
    %1219 = vmatpush2.msra.mxu0 0.0
    %1220 = vmatprep.subr.mxu0 0.0
    %1221 = vmatpush2.msra.mxu0 0.0
    %1222 = vmatprep.subr.mxu0 0.0
    %1223 = vmatpush2.msra.mxu0 0.0
    %1224 = vmatprep.subr.mxu0 0.0
    %1225 = vmatpush2.msra.mxu0 0.0
    %1226 = vmatprep.subr.mxu0 0.0
    %1227 = vmatpush2.msra.mxu0 0.0
    %1228 = vmatprep.subr.mxu0 0.0
    %1229 = vmatpush2.msra.mxu0 0.0
    %1230 = vmatprep.subr.mxu0 0.0
    %1231 = vmatpush2.msra.mxu0 0.0
    %1232 = vmatprep.subr.mxu0 0.0
    %1233 = vmatpush2.msra.mxu0 0.0
    %1234 = vmatprep.subr.mxu0 0.0
    %1235 = vmatpush2.msra.mxu0 0.0
    %1236 = vmatprep.mubr.f32.mxu0 0.0
    %1237 = vmatmul.mubr.f32.gmra.mxu0 %v1167
    %v1238 = vpop.f32.mrf.mxu0
    %v1239 = vadd.f32 %v1164, %v1238
    %v1240 = vpop.f32.mrf.mxu0
    %1241 = vmatprep.mubr.f32.mxu0 0.0
    %1242 = vmatmul.mubr.f32.gmra.mxu0 %v1170
    %v1243 = vpop.f32.mrf.mxu0
    %v1244 = vadd.f32 %v1164, %v1243
    %v1245 = vpop.f32.mrf.mxu0
    %1246 = vdwg.mxu0
    %v1247 = vadd.f32 %v1058, %v1239
    %v1248 = vadd.f32 %v1059, %v1244
    %v1249 = vld [vmem:[#allocation7 + $0x170] sm:$0x1]
    %v1250 = vld [vmem:[#allocation7 + $0x178] sm:$0x1]
    %v1251 = vsel %vm76, %v1247, 0.0
    %1252 = vadd.xlane.f32.xlu0 %v1251
    %v1253 = vpop.xlane.xlu0 %1252
    %v1254 = vsel %vm76, %v1248, 0.0
    %1255 = vadd.xlane.f32.xlu0 %v1254
    %v1256 = vpop.xlane.xlu0 %1255
    %v1257 = vmul.f32 %v1253, %v1027
    %v1258 = vmul.f32 %v1256, %v1027
    %v1259 = vsub.f32 %v1247, %v1257
    %v1260 = vsub.f32 %v1248, %v1258
    %v1261 = vmul.f32 %v1259, %v1259
    %v1262 = vmul.f32 %v1260, %v1260
    %v1263 = vsel %vm76, %v1261, 0.0
    %1264 = vadd.xlane.f32.xlu0 %v1263
    %v1265 = vpop.xlane.xlu0 %1264
    %v1266 = vsel %vm76, %v1262, 0.0
    %1267 = vadd.xlane.f32.xlu0 %v1266
    %v1268 = vpop.xlane.xlu0 %1267
    %v1269 = vmul.f32 %v1265, %v1027
    %v1270 = vmul.f32 %v1268, %v1027
    %v1271 = vadd.f32 %v1269, 1e-05
    %v1272 = vadd.f32 %v1270, 1e-05
    %v1273 = vrsqrt.pop %v1271
    %v1274 = vrsqrt.pop %v1272
    %v1275 = vmul.f32 %v1259, %v1273
    %v1276 = vmul.f32 %v1260, %v1274
    %v1277 = vlaneseq
    %v1278 = vshrl.u32 %v1277, 7
    %v1279 = vsub.s32 0, %v1278
    %v1280 = vrot.slane %v1249, %v1279
    %v1281 = vmul.f32 %v1275, %v1280
    %v1282 = vmul.f32 %v1276, %v1280
    %v1283 = vlaneseq
    %v1284 = vshrl.u32 %v1283, 7
    %v1285 = vsub.s32 0, %v1284
    %v1286 = vrot.slane %v1250, %v1285
    %v1287 = vadd.f32 %v1281, %v1286
    %v1288 = vadd.f32 %v1282, %v1286
    %v1289 = vld [vmem:[#allocation7 + $0x180] sm:$0xff]
    %v1290 = vld [vmem:[#allocation7 + $0x188] sm:$0xff]
    %v1291 = vld [vmem:[#allocation7 + $0x190] sm:$0xff]
    %v1292 = vld [vmem:[#allocation7 + $0x198] sm:$0xff]
    %v1293 = vld [vmem:[#allocation7 + $0x1a0] sm:$0x1]
    %v1294 = vlaneseq
    %v1295 = vshrl.u32 %v1294, 7
    %v1296 = vsub.s32 0, %v1295
    %v1297 = vrot.slane %v1293, %v1296
    %v1299 = vsel %vm76, %v316, 0
    %v1302 = vsel %vm76, %v319, 0
    %1304 = vmatprep.subr.mxu0 0.0
    %1305 = vmatpush1.msra.mxu0 0.0
    %1306 = vmatprep.subr.mxu0 0.0
    %1307 = vmatpush1.msra.mxu0 0.0
    %1308 = vmatprep.subr.mxu0 0.0
    %1309 = vmatpush1.msra.mxu0 0.0
    %1310 = vmatprep.subr.mxu0 0.0
    %1311 = vmatpush1.msra.mxu0 0.0
    %1312 = vmatprep.subr.mxu0 0.0
    %1313 = vmatpush1.msra.mxu0 0.0
    %1314 = vmatprep.subr.mxu0 0.0
    %1315 = vmatpush1.msra.mxu0 0.0
    %1316 = vmatprep.subr.mxu0 0.0
    %1317 = vmatpush1.msra.mxu0 0.0
    %1318 = vmatprep.subr.mxu0 0.0
    %1319 = vmatpush1.msra.mxu0 0.0
    %1320 = vmatprep.subr.mxu0 0.0
    %1321 = vmatpush1.msra.mxu0 0.0
    %1322 = vmatprep.subr.mxu0 0.0
    %1323 = vmatpush1.msra.mxu0 0.0
    %1324 = vmatprep.subr.mxu0 0.0
    %1325 = vmatpush1.msra.mxu0 0.0
    %1326 = vmatprep.subr.mxu0 0.0
    %1327 = vmatpush1.msra.mxu0 0.0
    %1328 = vmatprep.subr.mxu0 0.0
    %1329 = vmatpush1.msra.mxu0 %v1292
    %1330 = vmatprep.subr.mxu0 0.0
    %1331 = vmatpush1.msra.mxu0 %v1291
    %1332 = vmatprep.subr.mxu0 0.0
    %1333 = vmatpush1.msra.mxu0 %v1290
    %1334 = vmatprep.subr.mxu0 0.0
    %1335 = vmatpush1.msra.mxu0 %v1289
    %1336 = vmatprep.subr.mxu0 0.0
    %1337 = vmatpush2.msra.mxu0 0.0
    %1338 = vmatprep.subr.mxu0 0.0
    %1339 = vmatpush2.msra.mxu0 0.0
    %1340 = vmatprep.subr.mxu0 0.0
    %1341 = vmatpush2.msra.mxu0 0.0
    %1342 = vmatprep.subr.mxu0 0.0
    %1343 = vmatpush2.msra.mxu0 0.0
    %1344 = vmatprep.subr.mxu0 0.0
    %1345 = vmatpush2.msra.mxu0 0.0
    %1346 = vmatprep.subr.mxu0 0.0
    %1347 = vmatpush2.msra.mxu0 0.0
    %1348 = vmatprep.subr.mxu0 0.0
    %1349 = vmatpush2.msra.mxu0 0.0
    %1350 = vmatprep.subr.mxu0 0.0
    %1351 = vmatpush2.msra.mxu0 0.0
    %1352 = vmatprep.subr.mxu0 0.0
    %1353 = vmatpush2.msra.mxu0 0.0
    %1354 = vmatprep.subr.mxu0 0.0
    %1355 = vmatpush2.msra.mxu0 0.0
    %1356 = vmatprep.subr.mxu0 0.0
    %1357 = vmatpush2.msra.mxu0 0.0
    %1358 = vmatprep.subr.mxu0 0.0
    %1359 = vmatpush2.msra.mxu0 0.0
    %1360 = vmatprep.subr.mxu0 0.0
    %1361 = vmatpush2.msra.mxu0 0.0
    %1362 = vmatprep.subr.mxu0 0.0
    %1363 = vmatpush2.msra.mxu0 0.0
    %1364 = vmatprep.subr.mxu0 0.0
    %1365 = vmatpush2.msra.mxu0 0.0
    %1366 = vmatprep.subr.mxu0 0.0
    %1367 = vmatpush2.msra.mxu0 0.0
    %1368 = vmatprep.mubr.f32.mxu0 0.0
    %1369 = vmatmul.mubr.f32.gmra.mxu0 %v1299
    %v1370 = vpop.f32.mrf.mxu0
    %v1371 = vadd.f32 %v1297, %v1370
    %v1372 = vpop.f32.mrf.mxu0
    %1373 = vmatprep.mubr.f32.mxu0 0.0
    %1374 = vmatmul.mubr.f32.gmra.mxu0 %v1302
    %v1375 = vpop.f32.mrf.mxu0
    %v1376 = vadd.f32 %v1297, %v1375
    %v1377 = vpop.f32.mrf.mxu0
    %1378 = vdwg.mxu0
    %v1379 = vld [vmem:[#allocation7 + $0x1a8] sm:$0xff]
    %v1380 = vld [vmem:[#allocation7 + $0x1b0] sm:$0xff]
    %v1381 = vld [vmem:[#allocation7 + $0x1b8] sm:$0xff]
    %v1382 = vld [vmem:[#allocation7 + $0x1c0] sm:$0xff]
    %v1383 = vld [vmem:[#allocation7 + $0x1c8] sm:$0x1]
    %v1384 = vlaneseq
    %v1385 = vshrl.u32 %v1384, 7
    %v1386 = vsub.s32 0, %v1385
    %v1387 = vrot.slane %v1383, %v1386
    %1388 = vmatprep.subr.mxu0 0.0
    %1389 = vmatpush1.msra.mxu0 0.0
    %1390 = vmatprep.subr.mxu0 0.0
    %1391 = vmatpush1.msra.mxu0 0.0
    %1392 = vmatprep.subr.mxu0 0.0
    %1393 = vmatpush1.msra.mxu0 0.0
    %1394 = vmatprep.subr.mxu0 0.0
    %1395 = vmatpush1.msra.mxu0 0.0
    %1396 = vmatprep.subr.mxu0 0.0
    %1397 = vmatpush1.msra.mxu0 0.0
    %1398 = vmatprep.subr.mxu0 0.0
    %1399 = vmatpush1.msra.mxu0 0.0
    %1400 = vmatprep.subr.mxu0 0.0
    %1401 = vmatpush1.msra.mxu0 0.0
    %1402 = vmatprep.subr.mxu0 0.0
    %1403 = vmatpush1.msra.mxu0 0.0
    %1404 = vmatprep.subr.mxu0 0.0
    %1405 = vmatpush1.msra.mxu0 0.0
    %1406 = vmatprep.subr.mxu0 0.0
    %1407 = vmatpush1.msra.mxu0 0.0
    %1408 = vmatprep.subr.mxu0 0.0
    %1409 = vmatpush1.msra.mxu0 0.0
    %1410 = vmatprep.subr.mxu0 0.0
    %1411 = vmatpush1.msra.mxu0 0.0
    %1412 = vmatprep.subr.mxu0 0.0
    %1413 = vmatpush1.msra.mxu0 %v1382
    %1414 = vmatprep.subr.mxu0 0.0
    %1415 = vmatpush1.msra.mxu0 %v1381
    %1416 = vmatprep.subr.mxu0 0.0
    %1417 = vmatpush1.msra.mxu0 %v1380
    %1418 = vmatprep.subr.mxu0 0.0
    %1419 = vmatpush1.msra.mxu0 %v1379
    %1420 = vmatprep.subr.mxu0 0.0
    %1421 = vmatpush2.msra.mxu0 0.0
    %1422 = vmatprep.subr.mxu0 0.0
    %1423 = vmatpush2.msra.mxu0 0.0
    %1424 = vmatprep.subr.mxu0 0.0
    %1425 = vmatpush2.msra.mxu0 0.0
    %1426 = vmatprep.subr.mxu0 0.0
    %1427 = vmatpush2.msra.mxu0 0.0
    %1428 = vmatprep.subr.mxu0 0.0
    %1429 = vmatpush2.msra.mxu0 0.0
    %1430 = vmatprep.subr.mxu0 0.0
    %1431 = vmatpush2.msra.mxu0 0.0
    %1432 = vmatprep.subr.mxu0 0.0
    %1433 = vmatpush2.msra.mxu0 0.0
    %1434 = vmatprep.subr.mxu0 0.0
    %1435 = vmatpush2.msra.mxu0 0.0
    %1436 = vmatprep.subr.mxu0 0.0
    %1437 = vmatpush2.msra.mxu0 0.0
    %1438 = vmatprep.subr.mxu0 0.0
    %1439 = vmatpush2.msra.mxu0 0.0
    %1440 = vmatprep.subr.mxu0 0.0
    %1441 = vmatpush2.msra.mxu0 0.0
    %1442 = vmatprep.subr.mxu0 0.0
    %1443 = vmatpush2.msra.mxu0 0.0
    %1444 = vmatprep.subr.mxu0 0.0
    %1445 = vmatpush2.msra.mxu0 0.0
    %1446 = vmatprep.subr.mxu0 0.0
    %1447 = vmatpush2.msra.mxu0 0.0
    %1448 = vmatprep.subr.mxu0 0.0
    %1449 = vmatpush2.msra.mxu0 0.0
    %1450 = vmatprep.subr.mxu0 0.0
    %1451 = vmatpush2.msra.mxu0 0.0
    %1452 = vmatprep.mubr.f32.mxu0 0.0
    %1453 = vmatmul.mubr.f32.gmra.mxu0 %v1299
    %v1454 = vpop.f32.mrf.mxu0
    %v1455 = vadd.f32 %v1387, %v1454
    %v1456 = vpop.f32.mrf.mxu0
    %1457 = vmatprep.mubr.f32.mxu0 0.0
    %1458 = vmatmul.mubr.f32.gmra.mxu0 %v1302
    %v1459 = vpop.f32.mrf.mxu0
    %v1460 = vadd.f32 %v1387, %v1459
    %v1461 = vpop.f32.mrf.mxu0
    %1462 = vdwg.mxu0
    %v1463 = vld [vmem:[#allocation7 + $0x1d0] sm:$0xff]
    %v1464 = vld [vmem:[#allocation7 + $0x1d8] sm:$0xff]
    %v1465 = vld [vmem:[#allocation7 + $0x1e0] sm:$0xff]
    %v1466 = vld [vmem:[#allocation7 + $0x1e8] sm:$0xff]
    %v1467 = vld [vmem:[#allocation7 + $0x1f0] sm:$0x1]
    %v1468 = vlaneseq
    %v1469 = vshrl.u32 %v1468, 7
    %v1470 = vsub.s32 0, %v1469
    %v1471 = vrot.slane %v1467, %v1470
    %1472 = vmatprep.subr.mxu0 0.0
    %1473 = vmatpush1.msra.mxu0 0.0
    %1474 = vmatprep.subr.mxu0 0.0
    %1475 = vmatpush1.msra.mxu0 0.0
    %1476 = vmatprep.subr.mxu0 0.0
    %1477 = vmatpush1.msra.mxu0 0.0
    %1478 = vmatprep.subr.mxu0 0.0
    %1479 = vmatpush1.msra.mxu0 0.0
    %1480 = vmatprep.subr.mxu0 0.0
    %1481 = vmatpush1.msra.mxu0 0.0
    %1482 = vmatprep.subr.mxu0 0.0
    %1483 = vmatpush1.msra.mxu0 0.0
    %1484 = vmatprep.subr.mxu0 0.0
    %1485 = vmatpush1.msra.mxu0 0.0
    %1486 = vmatprep.subr.mxu0 0.0
    %1487 = vmatpush1.msra.mxu0 0.0
    %1488 = vmatprep.subr.mxu0 0.0
    %1489 = vmatpush1.msra.mxu0 0.0
    %1490 = vmatprep.subr.mxu0 0.0
    %1491 = vmatpush1.msra.mxu0 0.0
    %1492 = vmatprep.subr.mxu0 0.0
    %1493 = vmatpush1.msra.mxu0 0.0
    %1494 = vmatprep.subr.mxu0 0.0
    %1495 = vmatpush1.msra.mxu0 0.0
    %1496 = vmatprep.subr.mxu0 0.0
    %1497 = vmatpush1.msra.mxu0 %v1466
    %1498 = vmatprep.subr.mxu0 0.0
    %1499 = vmatpush1.msra.mxu0 %v1465
    %1500 = vmatprep.subr.mxu0 0.0
    %1501 = vmatpush1.msra.mxu0 %v1464
    %1502 = vmatprep.subr.mxu0 0.0
    %1503 = vmatpush1.msra.mxu0 %v1463
    %1504 = vmatprep.subr.mxu0 0.0
    %1505 = vmatpush2.msra.mxu0 0.0
    %1506 = vmatprep.subr.mxu0 0.0
    %1507 = vmatpush2.msra.mxu0 0.0
    %1508 = vmatprep.subr.mxu0 0.0
    %1509 = vmatpush2.msra.mxu0 0.0
    %1510 = vmatprep.subr.mxu0 0.0
    %1511 = vmatpush2.msra.mxu0 0.0
    %1512 = vmatprep.subr.mxu0 0.0
    %1513 = vmatpush2.msra.mxu0 0.0
    %1514 = vmatprep.subr.mxu0 0.0
    %1515 = vmatpush2.msra.mxu0 0.0
    %1516 = vmatprep.subr.mxu0 0.0
    %1517 = vmatpush2.msra.mxu0 0.0
    %1518 = vmatprep.subr.mxu0 0.0
    %1519 = vmatpush2.msra.mxu0 0.0
    %1520 = vmatprep.subr.mxu0 0.0
    %1521 = vmatpush2.msra.mxu0 0.0
    %1522 = vmatprep.subr.mxu0 0.0
    %1523 = vmatpush2.msra.mxu0 0.0
    %1524 = vmatprep.subr.mxu0 0.0
    %1525 = vmatpush2.msra.mxu0 0.0
    %1526 = vmatprep.subr.mxu0 0.0
    %1527 = vmatpush2.msra.mxu0 0.0
    %1528 = vmatprep.subr.mxu0 0.0
    %1529 = vmatpush2.msra.mxu0 0.0
    %1530 = vmatprep.subr.mxu0 0.0
    %1531 = vmatpush2.msra.mxu0 0.0
    %1532 = vmatprep.subr.mxu0 0.0
    %1533 = vmatpush2.msra.mxu0 0.0
    %1534 = vmatprep.subr.mxu0 0.0
    %1535 = vmatpush2.msra.mxu0 0.0
    %1536 = vmatprep.mubr.f32.mxu0 0.0
    %1537 = vmatmul.mubr.f32.gmra.mxu0 %v1299
    %v1538 = vpop.f32.mrf.mxu0
    %v1539 = vadd.f32 %v1471, %v1538
    %v1540 = vpop.f32.mrf.mxu0
    %1541 = vmatprep.mubr.f32.mxu0 0.0
    %1542 = vmatmul.mubr.f32.gmra.mxu0 %v1302
    %v1543 = vpop.f32.mrf.mxu0
    %v1544 = vadd.f32 %v1471, %v1543
    %v1545 = vpop.f32.mrf.mxu0
    %1546 = vdwg.mxu0
    %v1548 = vsel %vm76, %v1371, 0
    %v1551 = vsel %vm76, %v1455, 0
    %1553 = vmatprep.subr.mxu0 0.0
    %1554 = vmatpush1.xpose.msra.mxu0 0.0
    %1555 = vmatprep.subr.mxu0 0.0
    %1556 = vmatpush1.xpose.msra.mxu0 0.0
    %1557 = vmatprep.subr.mxu0 0.0
    %1558 = vmatpush1.xpose.msra.mxu0 0.0
    %1559 = vmatprep.subr.mxu0 0.0
    %1560 = vmatpush1.xpose.msra.mxu0 0.0
    %1561 = vmatprep.subr.mxu0 0.0
    %1562 = vmatpush1.xpose.msra.mxu0 0.0
    %1563 = vmatprep.subr.mxu0 0.0
    %1564 = vmatpush1.xpose.msra.mxu0 0.0
    %1565 = vmatprep.subr.mxu0 0.0
    %1566 = vmatpush1.xpose.msra.mxu0 0.0
    %1567 = vmatprep.subr.mxu0 0.0
    %1568 = vmatpush1.xpose.msra.mxu0 0.0
    %1569 = vmatprep.subr.mxu0 0.0
    %1570 = vmatpush1.xpose.msra.mxu0 0.0
    %1571 = vmatprep.subr.mxu0 0.0
    %1572 = vmatpush1.xpose.msra.mxu0 0.0
    %1573 = vmatprep.subr.mxu0 0.0
    %1574 = vmatpush1.xpose.msra.mxu0 0.0
    %1575 = vmatprep.subr.mxu0 0.0
    %1576 = vmatpush1.xpose.msra.mxu0 0.0
    %1577 = vmatprep.subr.mxu0 0.0
    %1578 = vmatpush1.xpose.msra.mxu0 0.0
    %1579 = vmatprep.subr.mxu0 0.0
    %1580 = vmatpush1.xpose.msra.mxu0 0.0
    %1581 = vmatprep.subr.mxu0 0.0
    %1582 = vmatpush1.xpose.msra.mxu0 0.0
    %1583 = vmatprep.subr.mxu0 0.0
    %1584 = vmatpush1.xpose.msra.mxu0 %v1551
    %1585 = vmatprep.subr.mxu0 0.0
    %1586 = vmatpush2.xpose.msra.mxu0 0.0
    %1587 = vmatprep.subr.mxu0 0.0
    %1588 = vmatpush2.xpose.msra.mxu0 0.0
    %1589 = vmatprep.subr.mxu0 0.0
    %1590 = vmatpush2.xpose.msra.mxu0 0.0
    %1591 = vmatprep.subr.mxu0 0.0
    %1592 = vmatpush2.xpose.msra.mxu0 0.0
    %1593 = vmatprep.subr.mxu0 0.0
    %1594 = vmatpush2.xpose.msra.mxu0 0.0
    %1595 = vmatprep.subr.mxu0 0.0
    %1596 = vmatpush2.xpose.msra.mxu0 0.0
    %1597 = vmatprep.subr.mxu0 0.0
    %1598 = vmatpush2.xpose.msra.mxu0 0.0
    %1599 = vmatprep.subr.mxu0 0.0
    %1600 = vmatpush2.xpose.msra.mxu0 0.0
    %1601 = vmatprep.subr.mxu0 0.0
    %1602 = vmatpush2.xpose.msra.mxu0 0.0
    %1603 = vmatprep.subr.mxu0 0.0
    %1604 = vmatpush2.xpose.msra.mxu0 0.0
    %1605 = vmatprep.subr.mxu0 0.0
    %1606 = vmatpush2.xpose.msra.mxu0 0.0
    %1607 = vmatprep.subr.mxu0 0.0
    %1608 = vmatpush2.xpose.msra.mxu0 0.0
    %1609 = vmatprep.subr.mxu0 0.0
    %1610 = vmatpush2.xpose.msra.mxu0 0.0
    %1611 = vmatprep.subr.mxu0 0.0
    %1612 = vmatpush2.xpose.msra.mxu0 0.0
    %1613 = vmatprep.subr.mxu0 0.0
    %1614 = vmatpush2.xpose.msra.mxu0 0.0
    %1615 = vmatprep.subr.mxu0 0.0
    %1616 = vmatpush2.xpose.msra.mxu0 0.0
    %1617 = vmatprep.mubr.f32.mxu0 0.0
    %1618 = vmatmul.mubr.f32.gmra.mxu0 %v1548
    %v1619 = vpop.f32.mrf.mxu0
    %v1620 = vadd.f32 0.0, %v1619
    %v1621 = vpop.f32.mrf.mxu0
    %1622 = vdwg.mxu0
    %v1624 = vsel %vm76, %v1376, 0
    %v1627 = vsel %vm76, %v1460, 0
    %1629 = vmatprep.subr.mxu0 0.0
    %1630 = vmatpush1.xpose.msra.mxu0 0.0
    %1631 = vmatprep.subr.mxu0 0.0
    %1632 = vmatpush1.xpose.msra.mxu0 0.0
    %1633 = vmatprep.subr.mxu0 0.0
    %1634 = vmatpush1.xpose.msra.mxu0 0.0
    %1635 = vmatprep.subr.mxu0 0.0
    %1636 = vmatpush1.xpose.msra.mxu0 0.0
    %1637 = vmatprep.subr.mxu0 0.0
    %1638 = vmatpush1.xpose.msra.mxu0 0.0
    %1639 = vmatprep.subr.mxu0 0.0
    %1640 = vmatpush1.xpose.msra.mxu0 0.0
    %1641 = vmatprep.subr.mxu0 0.0
    %1642 = vmatpush1.xpose.msra.mxu0 0.0
    %1643 = vmatprep.subr.mxu0 0.0
    %1644 = vmatpush1.xpose.msra.mxu0 0.0
    %1645 = vmatprep.subr.mxu0 0.0
    %1646 = vmatpush1.xpose.msra.mxu0 0.0
    %1647 = vmatprep.subr.mxu0 0.0
    %1648 = vmatpush1.xpose.msra.mxu0 0.0
    %1649 = vmatprep.subr.mxu0 0.0
    %1650 = vmatpush1.xpose.msra.mxu0 0.0
    %1651 = vmatprep.subr.mxu0 0.0
    %1652 = vmatpush1.xpose.msra.mxu0 0.0
    %1653 = vmatprep.subr.mxu0 0.0
    %1654 = vmatpush1.xpose.msra.mxu0 0.0
    %1655 = vmatprep.subr.mxu0 0.0
    %1656 = vmatpush1.xpose.msra.mxu0 0.0
    %1657 = vmatprep.subr.mxu0 0.0
    %1658 = vmatpush1.xpose.msra.mxu0 0.0
    %1659 = vmatprep.subr.mxu0 0.0
    %1660 = vmatpush1.xpose.msra.mxu0 %v1627
    %1661 = vmatprep.subr.mxu0 0.0
    %1662 = vmatpush2.xpose.msra.mxu0 0.0
    %1663 = vmatprep.subr.mxu0 0.0
    %1664 = vmatpush2.xpose.msra.mxu0 0.0
    %1665 = vmatprep.subr.mxu0 0.0
    %1666 = vmatpush2.xpose.msra.mxu0 0.0
    %1667 = vmatprep.subr.mxu0 0.0
    %1668 = vmatpush2.xpose.msra.mxu0 0.0
    %1669 = vmatprep.subr.mxu0 0.0
    %1670 = vmatpush2.xpose.msra.mxu0 0.0
    %1671 = vmatprep.subr.mxu0 0.0
    %1672 = vmatpush2.xpose.msra.mxu0 0.0
    %1673 = vmatprep.subr.mxu0 0.0
    %1674 = vmatpush2.xpose.msra.mxu0 0.0
    %1675 = vmatprep.subr.mxu0 0.0
    %1676 = vmatpush2.xpose.msra.mxu0 0.0
    %1677 = vmatprep.subr.mxu0 0.0
    %1678 = vmatpush2.xpose.msra.mxu0 0.0
    %1679 = vmatprep.subr.mxu0 0.0
    %1680 = vmatpush2.xpose.msra.mxu0 0.0
    %1681 = vmatprep.subr.mxu0 0.0
    %1682 = vmatpush2.xpose.msra.mxu0 0.0
    %1683 = vmatprep.subr.mxu0 0.0
    %1684 = vmatpush2.xpose.msra.mxu0 0.0
    %1685 = vmatprep.subr.mxu0 0.0
    %1686 = vmatpush2.xpose.msra.mxu0 0.0
    %1687 = vmatprep.subr.mxu0 0.0
    %1688 = vmatpush2.xpose.msra.mxu0 0.0
    %1689 = vmatprep.subr.mxu0 0.0
    %1690 = vmatpush2.xpose.msra.mxu0 0.0
    %1691 = vmatprep.subr.mxu0 0.0
    %1692 = vmatpush2.xpose.msra.mxu0 0.0
    %1693 = vmatprep.mubr.f32.mxu0 0.0
    %1694 = vmatmul.mubr.f32.gmra.mxu0 %v1624
    %v1695 = vpop.f32.mrf.mxu0
    %v1696 = vadd.f32 0.0, %v1695
    %v1697 = vpop.f32.mrf.mxu0
    %1698 = vdwg.mxu0
    %vm1699 = vcmask 64512
    %v1700 = vsel %vm1699, %v1620, -inf
    %1701 = vmax.xlane.f32.xlu0 %v1700
    %v1702 = vpop.xlane.xlu0 %1701
    %v1703 = vsel %vm1699, %v1696, -inf
    %1704 = vmax.xlane.f32.xlu0 %v1703
    %v1705 = vpop.xlane.xlu0 %1704
    %v1706 = vsub.f32 %v1620, %v1702
    %v1707 = vsub.f32 %v1696, %v1705
    %v1708 = vmul.f32 %v1706, 1.442695
    %v1709 = vpow.pop %v1708
    %v1710 = vmul.f32 %v1707, 1.442695
    %v1711 = vpow.pop %v1710
    %v1712 = vsel %vm1699, %v1709, 0.0
    %1713 = vadd.xlane.f32.xlu0 %v1712
    %v1714 = vpop.xlane.xlu0 %1713
    %v1715 = vsel %vm1699, %v1711, 0.0
    %1716 = vadd.xlane.f32.xlu0 %v1715
    %v1717 = vpop.xlane.xlu0 %1716
    %v1718 = vrcp.pop %v1714
    %v1719 = vrcp.pop %v1717
    %v1720 = vmul.f32 %v1709, %v1718
    %v1721 = vmul.f32 %v1711, %v1719
    %v1723 = vsel %vm1699, %v1720, 0
    %1725 = vmatprep.subr.mxu0 0.0
    %1726 = vmatpush1.msra.mxu0 0.0
    %1727 = vmatprep.subr.mxu0 0.0
    %1728 = vmatpush1.msra.mxu0 0.0
    %1729 = vmatprep.subr.mxu0 0.0
    %1730 = vmatpush1.msra.mxu0 0.0
    %1731 = vmatprep.subr.mxu0 0.0
    %1732 = vmatpush1.msra.mxu0 0.0
    %1733 = vmatprep.subr.mxu0 0.0
    %1734 = vmatpush1.msra.mxu0 0.0
    %1735 = vmatprep.subr.mxu0 0.0
    %1736 = vmatpush1.msra.mxu0 0.0
    %1737 = vmatprep.subr.mxu0 0.0
    %1738 = vmatpush1.msra.mxu0 0.0
    %1739 = vmatprep.subr.mxu0 0.0
    %1740 = vmatpush1.msra.mxu0 0.0
    %1741 = vmatprep.subr.mxu0 0.0
    %1742 = vmatpush1.msra.mxu0 0.0
    %1743 = vmatprep.subr.mxu0 0.0
    %1744 = vmatpush1.msra.mxu0 0.0
    %1745 = vmatprep.subr.mxu0 0.0
    %1746 = vmatpush1.msra.mxu0 0.0
    %1747 = vmatprep.subr.mxu0 0.0
    %1748 = vmatpush1.msra.mxu0 0.0
    %1749 = vmatprep.subr.mxu0 0.0
    %1750 = vmatpush1.msra.mxu0 0.0
    %1751 = vmatprep.subr.mxu0 0.0
    %1752 = vmatpush1.msra.mxu0 0.0
    %1753 = vmatprep.subr.mxu0 0.0
    %1754 = vmatpush1.msra.mxu0 0.0
    %1755 = vmatprep.subr.mxu0 0.0
    %1756 = vmatpush1.msra.mxu0 %v1539
    %1757 = vmatprep.subr.mxu0 0.0
    %1758 = vmatpush2.msra.mxu0 0.0
    %1759 = vmatprep.subr.mxu0 0.0
    %1760 = vmatpush2.msra.mxu0 0.0
    %1761 = vmatprep.subr.mxu0 0.0
    %1762 = vmatpush2.msra.mxu0 0.0
    %1763 = vmatprep.subr.mxu0 0.0
    %1764 = vmatpush2.msra.mxu0 0.0
    %1765 = vmatprep.subr.mxu0 0.0
    %1766 = vmatpush2.msra.mxu0 0.0
    %1767 = vmatprep.subr.mxu0 0.0
    %1768 = vmatpush2.msra.mxu0 0.0
    %1769 = vmatprep.subr.mxu0 0.0
    %1770 = vmatpush2.msra.mxu0 0.0
    %1771 = vmatprep.subr.mxu0 0.0
    %1772 = vmatpush2.msra.mxu0 0.0
    %1773 = vmatprep.subr.mxu0 0.0
    %1774 = vmatpush2.msra.mxu0 0.0
    %1775 = vmatprep.subr.mxu0 0.0
    %1776 = vmatpush2.msra.mxu0 0.0
    %1777 = vmatprep.subr.mxu0 0.0
    %1778 = vmatpush2.msra.mxu0 0.0
    %1779 = vmatprep.subr.mxu0 0.0
    %1780 = vmatpush2.msra.mxu0 0.0
    %1781 = vmatprep.subr.mxu0 0.0
    %1782 = vmatpush2.msra.mxu0 0.0
    %1783 = vmatprep.subr.mxu0 0.0
    %1784 = vmatpush2.msra.mxu0 0.0
    %1785 = vmatprep.subr.mxu0 0.0
    %1786 = vmatpush2.msra.mxu0 0.0
    %1787 = vmatprep.subr.mxu0 0.0
    %1788 = vmatpush2.msra.mxu0 0.0
    %1789 = vmatprep.mubr.f32.mxu0 0.0
    %1790 = vmatmul.mubr.f32.gmra.mxu0 %v1723
    %v1791 = vpop.f32.mrf.mxu0
    %v1792 = vadd.f32 0.0, %v1791
    %v1793 = vpop.f32.mrf.mxu0
    %1794 = vdwg.mxu0
    %v1796 = vsel %vm1699, %v1721, 0
    %1798 = vmatprep.subr.mxu0 0.0
    %1799 = vmatpush1.msra.mxu0 0.0
    %1800 = vmatprep.subr.mxu0 0.0
    %1801 = vmatpush1.msra.mxu0 0.0
    %1802 = vmatprep.subr.mxu0 0.0
    %1803 = vmatpush1.msra.mxu0 0.0
    %1804 = vmatprep.subr.mxu0 0.0
    %1805 = vmatpush1.msra.mxu0 0.0
    %1806 = vmatprep.subr.mxu0 0.0
    %1807 = vmatpush1.msra.mxu0 0.0
    %1808 = vmatprep.subr.mxu0 0.0
    %1809 = vmatpush1.msra.mxu0 0.0
    %1810 = vmatprep.subr.mxu0 0.0
    %1811 = vmatpush1.msra.mxu0 0.0
    %1812 = vmatprep.subr.mxu0 0.0
    %1813 = vmatpush1.msra.mxu0 0.0
    %1814 = vmatprep.subr.mxu0 0.0
    %1815 = vmatpush1.msra.mxu0 0.0
    %1816 = vmatprep.subr.mxu0 0.0
    %1817 = vmatpush1.msra.mxu0 0.0
    %1818 = vmatprep.subr.mxu0 0.0
    %1819 = vmatpush1.msra.mxu0 0.0
    %1820 = vmatprep.subr.mxu0 0.0
    %1821 = vmatpush1.msra.mxu0 0.0
    %1822 = vmatprep.subr.mxu0 0.0
    %1823 = vmatpush1.msra.mxu0 0.0
    %1824 = vmatprep.subr.mxu0 0.0
    %1825 = vmatpush1.msra.mxu0 0.0
    %1826 = vmatprep.subr.mxu0 0.0
    %1827 = vmatpush1.msra.mxu0 0.0
    %1828 = vmatprep.subr.mxu0 0.0
    %1829 = vmatpush1.msra.mxu0 %v1544
    %1830 = vmatprep.subr.mxu0 0.0
    %1831 = vmatpush2.msra.mxu0 0.0
    %1832 = vmatprep.subr.mxu0 0.0
    %1833 = vmatpush2.msra.mxu0 0.0
    %1834 = vmatprep.subr.mxu0 0.0
    %1835 = vmatpush2.msra.mxu0 0.0
    %1836 = vmatprep.subr.mxu0 0.0
    %1837 = vmatpush2.msra.mxu0 0.0
    %1838 = vmatprep.subr.mxu0 0.0
    %1839 = vmatpush2.msra.mxu0 0.0
    %1840 = vmatprep.subr.mxu0 0.0
    %1841 = vmatpush2.msra.mxu0 0.0
    %1842 = vmatprep.subr.mxu0 0.0
    %1843 = vmatpush2.msra.mxu0 0.0
    %1844 = vmatprep.subr.mxu0 0.0
    %1845 = vmatpush2.msra.mxu0 0.0
    %1846 = vmatprep.subr.mxu0 0.0
    %1847 = vmatpush2.msra.mxu0 0.0
    %1848 = vmatprep.subr.mxu0 0.0
    %1849 = vmatpush2.msra.mxu0 0.0
    %1850 = vmatprep.subr.mxu0 0.0
    %1851 = vmatpush2.msra.mxu0 0.0
    %1852 = vmatprep.subr.mxu0 0.0
    %1853 = vmatpush2.msra.mxu0 0.0
    %1854 = vmatprep.subr.mxu0 0.0
    %1855 = vmatpush2.msra.mxu0 0.0
    %1856 = vmatprep.subr.mxu0 0.0
    %1857 = vmatpush2.msra.mxu0 0.0
    %1858 = vmatprep.subr.mxu0 0.0
    %1859 = vmatpush2.msra.mxu0 0.0
    %1860 = vmatprep.subr.mxu0 0.0
    %1861 = vmatpush2.msra.mxu0 0.0
    %1862 = vmatprep.mubr.f32.mxu0 0.0
    %1863 = vmatmul.mubr.f32.gmra.mxu0 %v1796
    %v1864 = vpop.f32.mrf.mxu0
    %v1865 = vadd.f32 0.0, %v1864
    %v1866 = vpop.f32.mrf.mxu0
    %1867 = vdwg.mxu0
    %v1868 = vld [vmem:[#allocation7 + $0x1f8] sm:$0xff]
    %v1869 = vld [vmem:[#allocation7 + $0x200] sm:$0xff]
    %v1870 = vld [vmem:[#allocation7 + $0x208] sm:$0xff]
    %v1871 = vld [vmem:[#allocation7 + $0x210] sm:$0xff]
    %v1872 = vld [vmem:[#allocation7 + $0x218] sm:$0x1]
    %v1873 = vlaneseq
    %v1874 = vshrl.u32 %v1873, 7
    %v1875 = vsub.s32 0, %v1874
    %v1876 = vrot.slane %v1872, %v1875
    %v1878 = vsel %vm76, %v1792, 0
    %v1881 = vsel %vm76, %v1865, 0
    %1883 = vmatprep.subr.mxu0 0.0
    %1884 = vmatpush1.msra.mxu0 0.0
    %1885 = vmatprep.subr.mxu0 0.0
    %1886 = vmatpush1.msra.mxu0 0.0
    %1887 = vmatprep.subr.mxu0 0.0
    %1888 = vmatpush1.msra.mxu0 0.0
    %1889 = vmatprep.subr.mxu0 0.0
    %1890 = vmatpush1.msra.mxu0 0.0
    %1891 = vmatprep.subr.mxu0 0.0
    %1892 = vmatpush1.msra.mxu0 0.0
    %1893 = vmatprep.subr.mxu0 0.0
    %1894 = vmatpush1.msra.mxu0 0.0
    %1895 = vmatprep.subr.mxu0 0.0
    %1896 = vmatpush1.msra.mxu0 0.0
    %1897 = vmatprep.subr.mxu0 0.0
    %1898 = vmatpush1.msra.mxu0 0.0
    %1899 = vmatprep.subr.mxu0 0.0
    %1900 = vmatpush1.msra.mxu0 0.0
    %1901 = vmatprep.subr.mxu0 0.0
    %1902 = vmatpush1.msra.mxu0 0.0
    %1903 = vmatprep.subr.mxu0 0.0
    %1904 = vmatpush1.msra.mxu0 0.0
    %1905 = vmatprep.subr.mxu0 0.0
    %1906 = vmatpush1.msra.mxu0 0.0
    %1907 = vmatprep.subr.mxu0 0.0
    %1908 = vmatpush1.msra.mxu0 %v1871
    %1909 = vmatprep.subr.mxu0 0.0
    %1910 = vmatpush1.msra.mxu0 %v1870
    %1911 = vmatprep.subr.mxu0 0.0
    %1912 = vmatpush1.msra.mxu0 %v1869
    %1913 = vmatprep.subr.mxu0 0.0
    %1914 = vmatpush1.msra.mxu0 %v1868
    %1915 = vmatprep.subr.mxu0 0.0
    %1916 = vmatpush2.msra.mxu0 0.0
    %1917 = vmatprep.subr.mxu0 0.0
    %1918 = vmatpush2.msra.mxu0 0.0
    %1919 = vmatprep.subr.mxu0 0.0
    %1920 = vmatpush2.msra.mxu0 0.0
    %1921 = vmatprep.subr.mxu0 0.0
    %1922 = vmatpush2.msra.mxu0 0.0
    %1923 = vmatprep.subr.mxu0 0.0
    %1924 = vmatpush2.msra.mxu0 0.0
    %1925 = vmatprep.subr.mxu0 0.0
    %1926 = vmatpush2.msra.mxu0 0.0
    %1927 = vmatprep.subr.mxu0 0.0
    %1928 = vmatpush2.msra.mxu0 0.0
    %1929 = vmatprep.subr.mxu0 0.0
    %1930 = vmatpush2.msra.mxu0 0.0
    %1931 = vmatprep.subr.mxu0 0.0
    %1932 = vmatpush2.msra.mxu0 0.0
    %1933 = vmatprep.subr.mxu0 0.0
    %1934 = vmatpush2.msra.mxu0 0.0
    %1935 = vmatprep.subr.mxu0 0.0
    %1936 = vmatpush2.msra.mxu0 0.0
    %1937 = vmatprep.subr.mxu0 0.0
    %1938 = vmatpush2.msra.mxu0 0.0
    %1939 = vmatprep.subr.mxu0 0.0
    %1940 = vmatpush2.msra.mxu0 0.0
    %1941 = vmatprep.subr.mxu0 0.0
    %1942 = vmatpush2.msra.mxu0 0.0
    %1943 = vmatprep.subr.mxu0 0.0
    %1944 = vmatpush2.msra.mxu0 0.0
    %1945 = vmatprep.subr.mxu0 0.0
    %1946 = vmatpush2.msra.mxu0 0.0
    %1947 = vmatprep.mubr.f32.mxu0 0.0
    %1948 = vmatmul.mubr.f32.gmra.mxu0 %v1878
    %v1949 = vpop.f32.mrf.mxu0
    %v1950 = vadd.f32 %v1876, %v1949
    %v1951 = vpop.f32.mrf.mxu0
    %1952 = vmatprep.mubr.f32.mxu0 0.0
    %1953 = vmatmul.mubr.f32.gmra.mxu0 %v1881
    %v1954 = vpop.f32.mrf.mxu0
    %v1955 = vadd.f32 %v1876, %v1954
    %v1956 = vpop.f32.mrf.mxu0
    %1957 = vdwg.mxu0
    %v1958 = vadd.f32 %v316, %v1950
    %v1959 = vadd.f32 %v319, %v1955
    %v1960 = vld [vmem:[#allocation7 + $0x220] sm:$0x1]
    %v1961 = vld [vmem:[#allocation7 + $0x228] sm:$0x1]
    %v1962 = vsel %vm76, %v1958, 0.0
    %1963 = vadd.xlane.f32.xlu0 %v1962
    %v1964 = vpop.xlane.xlu0 %1963
    %v1965 = vsel %vm76, %v1959, 0.0
    %1966 = vadd.xlane.f32.xlu0 %v1965
    %v1967 = vpop.xlane.xlu0 %1966
    %v1968 = vmul.f32 %v1964, %v1027
    %v1969 = vmul.f32 %v1967, %v1027
    %v1970 = vsub.f32 %v1958, %v1968
    %v1971 = vsub.f32 %v1959, %v1969
    %v1972 = vmul.f32 %v1970, %v1970
    %v1973 = vmul.f32 %v1971, %v1971
    %v1974 = vsel %vm76, %v1972, 0.0
    %1975 = vadd.xlane.f32.xlu0 %v1974
    %v1976 = vpop.xlane.xlu0 %1975
    %v1977 = vsel %vm76, %v1973, 0.0
    %1978 = vadd.xlane.f32.xlu0 %v1977
    %v1979 = vpop.xlane.xlu0 %1978
    %v1980 = vmul.f32 %v1976, %v1027
    %v1981 = vmul.f32 %v1979, %v1027
    %v1982 = vadd.f32 %v1980, 1e-05
    %v1983 = vadd.f32 %v1981, 1e-05
    %v1984 = vrsqrt.pop %v1982
    %v1985 = vrsqrt.pop %v1983
    %v1986 = vmul.f32 %v1970, %v1984
    %v1987 = vmul.f32 %v1971, %v1985
    %v1988 = vlaneseq
    %v1989 = vshrl.u32 %v1988, 7
    %v1990 = vsub.s32 0, %v1989
    %v1991 = vrot.slane %v1960, %v1990
    %v1992 = vmul.f32 %v1986, %v1991
    %v1993 = vmul.f32 %v1987, %v1991
    %v1994 = vlaneseq
    %v1995 = vshrl.u32 %v1994, 7
    %v1996 = vsub.s32 0, %v1995
    %v1997 = vrot.slane %v1961, %v1996
    %v1998 = vadd.f32 %v1992, %v1997
    %v1999 = vadd.f32 %v1993, %v1997
    %v2000 = vld [vmem:[#allocation7 + $0x230] sm:$0xff]
    %v2001 = vld [vmem:[#allocation7 + $0x238] sm:$0xff]
    %v2002 = vld [vmem:[#allocation7 + $0x240] sm:$0xff]
    %v2003 = vld [vmem:[#allocation7 + $0x248] sm:$0xff]
    %v2004 = vld [vmem:[#allocation7 + $0x250] sm:$0x1]
    %v2005 = vlaneseq
    %v2006 = vshrl.u32 %v2005, 7
    %v2007 = vsub.s32 0, %v2006
    %v2008 = vrot.slane %v2004, %v2007
    %v2010 = vsel %vm76, %v1998, 0
    %v2013 = vsel %vm76, %v1999, 0
    %2015 = vmatprep.subr.mxu0 0.0
    %2016 = vmatpush1.msra.mxu0 0.0
    %2017 = vmatprep.subr.mxu0 0.0
    %2018 = vmatpush1.msra.mxu0 0.0
    %2019 = vmatprep.subr.mxu0 0.0
    %2020 = vmatpush1.msra.mxu0 0.0
    %2021 = vmatprep.subr.mxu0 0.0
    %2022 = vmatpush1.msra.mxu0 0.0
    %2023 = vmatprep.subr.mxu0 0.0
    %2024 = vmatpush1.msra.mxu0 0.0
    %2025 = vmatprep.subr.mxu0 0.0
    %2026 = vmatpush1.msra.mxu0 0.0
    %2027 = vmatprep.subr.mxu0 0.0
    %2028 = vmatpush1.msra.mxu0 0.0
    %2029 = vmatprep.subr.mxu0 0.0
    %2030 = vmatpush1.msra.mxu0 0.0
    %2031 = vmatprep.subr.mxu0 0.0
    %2032 = vmatpush1.msra.mxu0 0.0
    %2033 = vmatprep.subr.mxu0 0.0
    %2034 = vmatpush1.msra.mxu0 0.0
    %2035 = vmatprep.subr.mxu0 0.0
    %2036 = vmatpush1.msra.mxu0 0.0
    %2037 = vmatprep.subr.mxu0 0.0
    %2038 = vmatpush1.msra.mxu0 0.0
    %2039 = vmatprep.subr.mxu0 0.0
    %2040 = vmatpush1.msra.mxu0 %v2003
    %2041 = vmatprep.subr.mxu0 0.0
    %2042 = vmatpush1.msra.mxu0 %v2002
    %2043 = vmatprep.subr.mxu0 0.0
    %2044 = vmatpush1.msra.mxu0 %v2001
    %2045 = vmatprep.subr.mxu0 0.0
    %2046 = vmatpush1.msra.mxu0 %v2000
    %2047 = vmatprep.subr.mxu0 0.0
    %2048 = vmatpush2.msra.mxu0 0.0
    %2049 = vmatprep.subr.mxu0 0.0
    %2050 = vmatpush2.msra.mxu0 0.0
    %2051 = vmatprep.subr.mxu0 0.0
    %2052 = vmatpush2.msra.mxu0 0.0
    %2053 = vmatprep.subr.mxu0 0.0
    %2054 = vmatpush2.msra.mxu0 0.0
    %2055 = vmatprep.subr.mxu0 0.0
    %2056 = vmatpush2.msra.mxu0 0.0
    %2057 = vmatprep.subr.mxu0 0.0
    %2058 = vmatpush2.msra.mxu0 0.0
    %2059 = vmatprep.subr.mxu0 0.0
    %2060 = vmatpush2.msra.mxu0 0.0
    %2061 = vmatprep.subr.mxu0 0.0
    %2062 = vmatpush2.msra.mxu0 0.0
    %2063 = vmatprep.subr.mxu0 0.0
    %2064 = vmatpush2.msra.mxu0 0.0
    %2065 = vmatprep.subr.mxu0 0.0
    %2066 = vmatpush2.msra.mxu0 0.0
    %2067 = vmatprep.subr.mxu0 0.0
    %2068 = vmatpush2.msra.mxu0 0.0
    %2069 = vmatprep.subr.mxu0 0.0
    %2070 = vmatpush2.msra.mxu0 0.0
    %2071 = vmatprep.subr.mxu0 0.0
    %2072 = vmatpush2.msra.mxu0 0.0
    %2073 = vmatprep.subr.mxu0 0.0
    %2074 = vmatpush2.msra.mxu0 0.0
    %2075 = vmatprep.subr.mxu0 0.0
    %2076 = vmatpush2.msra.mxu0 0.0
    %2077 = vmatprep.subr.mxu0 0.0
    %2078 = vmatpush2.msra.mxu0 0.0
    %2079 = vmatprep.mubr.f32.mxu0 0.0
    %2080 = vmatmul.mubr.f32.gmra.mxu0 %v2010
    %v2081 = vpop.f32.mrf.mxu0
    %v2082 = vadd.f32 %v2008, %v2081
    %v2083 = vpop.f32.mrf.mxu0
    %2084 = vmatprep.mubr.f32.mxu0 0.0
    %2085 = vmatmul.mubr.f32.gmra.mxu0 %v2013
    %v2086 = vpop.f32.mrf.mxu0
    %v2087 = vadd.f32 %v2008, %v2086
    %v2088 = vpop.f32.mrf.mxu0
    %2089 = vdwg.mxu0
    %v2090 = vld [vmem:[#allocation7 + $0x258] sm:$0xff]
    %v2091 = vld [vmem:[#allocation7 + $0x260] sm:$0xff]
    %v2092 = vld [vmem:[#allocation7 + $0x268] sm:$0xff]
    %v2093 = vld [vmem:[#allocation7 + $0x270] sm:$0xff]
    %v2094 = vld [vmem:[#allocation7 + $0x278] sm:$0x1]
    %v2095 = vlaneseq
    %v2096 = vshrl.u32 %v2095, 7
    %v2097 = vsub.s32 0, %v2096
    %v2098 = vrot.slane %v2094, %v2097
    %v2100 = vsel %vm76, %v1287, 0
    %v2103 = vsel %vm76, %v1288, 0
    %2105 = vmatprep.subr.mxu0 0.0
    %2106 = vmatpush1.msra.mxu0 0.0
    %2107 = vmatprep.subr.mxu0 0.0
    %2108 = vmatpush1.msra.mxu0 0.0
    %2109 = vmatprep.subr.mxu0 0.0
    %2110 = vmatpush1.msra.mxu0 0.0
    %2111 = vmatprep.subr.mxu0 0.0
    %2112 = vmatpush1.msra.mxu0 0.0
    %2113 = vmatprep.subr.mxu0 0.0
    %2114 = vmatpush1.msra.mxu0 0.0
    %2115 = vmatprep.subr.mxu0 0.0
    %2116 = vmatpush1.msra.mxu0 0.0
    %2117 = vmatprep.subr.mxu0 0.0
    %2118 = vmatpush1.msra.mxu0 0.0
    %2119 = vmatprep.subr.mxu0 0.0
    %2120 = vmatpush1.msra.mxu0 0.0
    %2121 = vmatprep.subr.mxu0 0.0
    %2122 = vmatpush1.msra.mxu0 0.0
    %2123 = vmatprep.subr.mxu0 0.0
    %2124 = vmatpush1.msra.mxu0 0.0
    %2125 = vmatprep.subr.mxu0 0.0
    %2126 = vmatpush1.msra.mxu0 0.0
    %2127 = vmatprep.subr.mxu0 0.0
    %2128 = vmatpush1.msra.mxu0 0.0
    %2129 = vmatprep.subr.mxu0 0.0
    %2130 = vmatpush1.msra.mxu0 %v2093
    %2131 = vmatprep.subr.mxu0 0.0
    %2132 = vmatpush1.msra.mxu0 %v2092
    %2133 = vmatprep.subr.mxu0 0.0
    %2134 = vmatpush1.msra.mxu0 %v2091
    %2135 = vmatprep.subr.mxu0 0.0
    %2136 = vmatpush1.msra.mxu0 %v2090
    %2137 = vmatprep.subr.mxu0 0.0
    %2138 = vmatpush2.msra.mxu0 0.0
    %2139 = vmatprep.subr.mxu0 0.0
    %2140 = vmatpush2.msra.mxu0 0.0
    %2141 = vmatprep.subr.mxu0 0.0
    %2142 = vmatpush2.msra.mxu0 0.0
    %2143 = vmatprep.subr.mxu0 0.0
    %2144 = vmatpush2.msra.mxu0 0.0
    %2145 = vmatprep.subr.mxu0 0.0
    %2146 = vmatpush2.msra.mxu0 0.0
    %2147 = vmatprep.subr.mxu0 0.0
    %2148 = vmatpush2.msra.mxu0 0.0
    %2149 = vmatprep.subr.mxu0 0.0
    %2150 = vmatpush2.msra.mxu0 0.0
    %2151 = vmatprep.subr.mxu0 0.0
    %2152 = vmatpush2.msra.mxu0 0.0
    %2153 = vmatprep.subr.mxu0 0.0
    %2154 = vmatpush2.msra.mxu0 0.0
    %2155 = vmatprep.subr.mxu0 0.0
    %2156 = vmatpush2.msra.mxu0 0.0
    %2157 = vmatprep.subr.mxu0 0.0
    %2158 = vmatpush2.msra.mxu0 0.0
    %2159 = vmatprep.subr.mxu0 0.0
    %2160 = vmatpush2.msra.mxu0 0.0
    %2161 = vmatprep.subr.mxu0 0.0
    %2162 = vmatpush2.msra.mxu0 0.0
    %2163 = vmatprep.subr.mxu0 0.0
    %2164 = vmatpush2.msra.mxu0 0.0
    %2165 = vmatprep.subr.mxu0 0.0
    %2166 = vmatpush2.msra.mxu0 0.0
    %2167 = vmatprep.subr.mxu0 0.0
    %2168 = vmatpush2.msra.mxu0 0.0
    %2169 = vmatprep.mubr.f32.mxu0 0.0
    %2170 = vmatmul.mubr.f32.gmra.mxu0 %v2100
    %v2171 = vpop.f32.mrf.mxu0
    %v2172 = vadd.f32 %v2098, %v2171
    %v2173 = vpop.f32.mrf.mxu0
    %2174 = vmatprep.mubr.f32.mxu0 0.0
    %2175 = vmatmul.mubr.f32.gmra.mxu0 %v2103
    %v2176 = vpop.f32.mrf.mxu0
    %v2177 = vadd.f32 %v2098, %v2176
    %v2178 = vpop.f32.mrf.mxu0
    %2179 = vdwg.mxu0
    %v2180 = vld [vmem:[#allocation7 + $0x280] sm:$0xff]
    %v2181 = vld [vmem:[#allocation7 + $0x288] sm:$0xff]
    %v2182 = vld [vmem:[#allocation7 + $0x290] sm:$0xff]
    %v2183 = vld [vmem:[#allocation7 + $0x298] sm:$0xff]
    %v2184 = vld [vmem:[#allocation7 + $0x2a0] sm:$0x1]
    %v2185 = vlaneseq
    %v2186 = vshrl.u32 %v2185, 7
    %v2187 = vsub.s32 0, %v2186
    %v2188 = vrot.slane %v2184, %v2187
    %2189 = vmatprep.subr.mxu0 0.0
    %2190 = vmatpush1.msra.mxu0 0.0
    %2191 = vmatprep.subr.mxu0 0.0
    %2192 = vmatpush1.msra.mxu0 0.0
    %2193 = vmatprep.subr.mxu0 0.0
    %2194 = vmatpush1.msra.mxu0 0.0
    %2195 = vmatprep.subr.mxu0 0.0
    %2196 = vmatpush1.msra.mxu0 0.0
    %2197 = vmatprep.subr.mxu0 0.0
    %2198 = vmatpush1.msra.mxu0 0.0
    %2199 = vmatprep.subr.mxu0 0.0
    %2200 = vmatpush1.msra.mxu0 0.0
    %2201 = vmatprep.subr.mxu0 0.0
    %2202 = vmatpush1.msra.mxu0 0.0
    %2203 = vmatprep.subr.mxu0 0.0
    %2204 = vmatpush1.msra.mxu0 0.0
    %2205 = vmatprep.subr.mxu0 0.0
    %2206 = vmatpush1.msra.mxu0 0.0
    %2207 = vmatprep.subr.mxu0 0.0
    %2208 = vmatpush1.msra.mxu0 0.0
    %2209 = vmatprep.subr.mxu0 0.0
    %2210 = vmatpush1.msra.mxu0 0.0
    %2211 = vmatprep.subr.mxu0 0.0
    %2212 = vmatpush1.msra.mxu0 0.0
    %2213 = vmatprep.subr.mxu0 0.0
    %2214 = vmatpush1.msra.mxu0 %v2183
    %2215 = vmatprep.subr.mxu0 0.0
    %2216 = vmatpush1.msra.mxu0 %v2182
    %2217 = vmatprep.subr.mxu0 0.0
    %2218 = vmatpush1.msra.mxu0 %v2181
    %2219 = vmatprep.subr.mxu0 0.0
    %2220 = vmatpush1.msra.mxu0 %v2180
    %2221 = vmatprep.subr.mxu0 0.0
    %2222 = vmatpush2.msra.mxu0 0.0
    %2223 = vmatprep.subr.mxu0 0.0
    %2224 = vmatpush2.msra.mxu0 0.0
    %2225 = vmatprep.subr.mxu0 0.0
    %2226 = vmatpush2.msra.mxu0 0.0
    %2227 = vmatprep.subr.mxu0 0.0
    %2228 = vmatpush2.msra.mxu0 0.0
    %2229 = vmatprep.subr.mxu0 0.0
    %2230 = vmatpush2.msra.mxu0 0.0
    %2231 = vmatprep.subr.mxu0 0.0
    %2232 = vmatpush2.msra.mxu0 0.0
    %2233 = vmatprep.subr.mxu0 0.0
    %2234 = vmatpush2.msra.mxu0 0.0
    %2235 = vmatprep.subr.mxu0 0.0
    %2236 = vmatpush2.msra.mxu0 0.0
    %2237 = vmatprep.subr.mxu0 0.0
    %2238 = vmatpush2.msra.mxu0 0.0
    %2239 = vmatprep.subr.mxu0 0.0
    %2240 = vmatpush2.msra.mxu0 0.0
    %2241 = vmatprep.subr.mxu0 0.0
    %2242 = vmatpush2.msra.mxu0 0.0
    %2243 = vmatprep.subr.mxu0 0.0
    %2244 = vmatpush2.msra.mxu0 0.0
    %2245 = vmatprep.subr.mxu0 0.0
    %2246 = vmatpush2.msra.mxu0 0.0
    %2247 = vmatprep.subr.mxu0 0.0
    %2248 = vmatpush2.msra.mxu0 0.0
    %2249 = vmatprep.subr.mxu0 0.0
    %2250 = vmatpush2.msra.mxu0 0.0
    %2251 = vmatprep.subr.mxu0 0.0
    %2252 = vmatpush2.msra.mxu0 0.0
    %2253 = vmatprep.mubr.f32.mxu0 0.0
    %2254 = vmatmul.mubr.f32.gmra.mxu0 %v2100
    %v2255 = vpop.f32.mrf.mxu0
    %v2256 = vadd.f32 %v2188, %v2255
    %v2257 = vpop.f32.mrf.mxu0
    %2258 = vmatprep.mubr.f32.mxu0 0.0
    %2259 = vmatmul.mubr.f32.gmra.mxu0 %v2103
    %v2260 = vpop.f32.mrf.mxu0
    %v2261 = vadd.f32 %v2188, %v2260
    %v2262 = vpop.f32.mrf.mxu0
    %2263 = vdwg.mxu0
    %v2265 = vsel %vm76, %v2082, 0
    %v2268 = vsel %vm76, %v2172, 0
    %2270 = vmatprep.subr.mxu0 0.0
    %2271 = vmatpush1.xpose.msra.mxu0 0.0
    %2272 = vmatprep.subr.mxu0 0.0
    %2273 = vmatpush1.xpose.msra.mxu0 0.0
    %2274 = vmatprep.subr.mxu0 0.0
    %2275 = vmatpush1.xpose.msra.mxu0 0.0
    %2276 = vmatprep.subr.mxu0 0.0
    %2277 = vmatpush1.xpose.msra.mxu0 0.0
    %2278 = vmatprep.subr.mxu0 0.0
    %2279 = vmatpush1.xpose.msra.mxu0 0.0
    %2280 = vmatprep.subr.mxu0 0.0
    %2281 = vmatpush1.xpose.msra.mxu0 0.0
    %2282 = vmatprep.subr.mxu0 0.0
    %2283 = vmatpush1.xpose.msra.mxu0 0.0
    %2284 = vmatprep.subr.mxu0 0.0
    %2285 = vmatpush1.xpose.msra.mxu0 0.0
    %2286 = vmatprep.subr.mxu0 0.0
    %2287 = vmatpush1.xpose.msra.mxu0 0.0
    %2288 = vmatprep.subr.mxu0 0.0
    %2289 = vmatpush1.xpose.msra.mxu0 0.0
    %2290 = vmatprep.subr.mxu0 0.0
    %2291 = vmatpush1.xpose.msra.mxu0 0.0
    %2292 = vmatprep.subr.mxu0 0.0
    %2293 = vmatpush1.xpose.msra.mxu0 0.0
    %2294 = vmatprep.subr.mxu0 0.0
    %2295 = vmatpush1.xpose.msra.mxu0 0.0
    %2296 = vmatprep.subr.mxu0 0.0
    %2297 = vmatpush1.xpose.msra.mxu0 0.0
    %2298 = vmatprep.subr.mxu0 0.0
    %2299 = vmatpush1.xpose.msra.mxu0 0.0
    %2300 = vmatprep.subr.mxu0 0.0
    %2301 = vmatpush1.xpose.msra.mxu0 %v2268
    %2302 = vmatprep.subr.mxu0 0.0
    %2303 = vmatpush2.xpose.msra.mxu0 0.0
    %2304 = vmatprep.subr.mxu0 0.0
    %2305 = vmatpush2.xpose.msra.mxu0 0.0
    %2306 = vmatprep.subr.mxu0 0.0
    %2307 = vmatpush2.xpose.msra.mxu0 0.0
    %2308 = vmatprep.subr.mxu0 0.0
    %2309 = vmatpush2.xpose.msra.mxu0 0.0
    %2310 = vmatprep.subr.mxu0 0.0
    %2311 = vmatpush2.xpose.msra.mxu0 0.0
    %2312 = vmatprep.subr.mxu0 0.0
    %2313 = vmatpush2.xpose.msra.mxu0 0.0
    %2314 = vmatprep.subr.mxu0 0.0
    %2315 = vmatpush2.xpose.msra.mxu0 0.0
    %2316 = vmatprep.subr.mxu0 0.0
    %2317 = vmatpush2.xpose.msra.mxu0 0.0
    %2318 = vmatprep.subr.mxu0 0.0
    %2319 = vmatpush2.xpose.msra.mxu0 0.0
    %2320 = vmatprep.subr.mxu0 0.0
    %2321 = vmatpush2.xpose.msra.mxu0 0.0
    %2322 = vmatprep.subr.mxu0 0.0
    %2323 = vmatpush2.xpose.msra.mxu0 0.0
    %2324 = vmatprep.subr.mxu0 0.0
    %2325 = vmatpush2.xpose.msra.mxu0 0.0
    %2326 = vmatprep.subr.mxu0 0.0
    %2327 = vmatpush2.xpose.msra.mxu0 0.0
    %2328 = vmatprep.subr.mxu0 0.0
    %2329 = vmatpush2.xpose.msra.mxu0 0.0
    %2330 = vmatprep.subr.mxu0 0.0
    %2331 = vmatpush2.xpose.msra.mxu0 0.0
    %2332 = vmatprep.subr.mxu0 0.0
    %2333 = vmatpush2.xpose.msra.mxu0 0.0
    %2334 = vmatprep.mubr.f32.mxu0 0.0
    %2335 = vmatmul.mubr.f32.gmra.mxu0 %v2265
    %v2336 = vpop.f32.mrf.mxu0
    %v2337 = vadd.f32 0.0, %v2336
    %v2338 = vpop.f32.mrf.mxu0
    %2339 = vdwg.mxu0
    %v2341 = vsel %vm76, %v2087, 0
    %v2344 = vsel %vm76, %v2177, 0
    %2346 = vmatprep.subr.mxu0 0.0
    %2347 = vmatpush1.xpose.msra.mxu0 0.0
    %2348 = vmatprep.subr.mxu0 0.0
    %2349 = vmatpush1.xpose.msra.mxu0 0.0
    %2350 = vmatprep.subr.mxu0 0.0
    %2351 = vmatpush1.xpose.msra.mxu0 0.0
    %2352 = vmatprep.subr.mxu0 0.0
    %2353 = vmatpush1.xpose.msra.mxu0 0.0
    %2354 = vmatprep.subr.mxu0 0.0
    %2355 = vmatpush1.xpose.msra.mxu0 0.0
    %2356 = vmatprep.subr.mxu0 0.0
    %2357 = vmatpush1.xpose.msra.mxu0 0.0
    %2358 = vmatprep.subr.mxu0 0.0
    %2359 = vmatpush1.xpose.msra.mxu0 0.0
    %2360 = vmatprep.subr.mxu0 0.0
    %2361 = vmatpush1.xpose.msra.mxu0 0.0
    %2362 = vmatprep.subr.mxu0 0.0
    %2363 = vmatpush1.xpose.msra.mxu0 0.0
    %2364 = vmatprep.subr.mxu0 0.0
    %2365 = vmatpush1.xpose.msra.mxu0 0.0
    %2366 = vmatprep.subr.mxu0 0.0
    %2367 = vmatpush1.xpose.msra.mxu0 0.0
    %2368 = vmatprep.subr.mxu0 0.0
    %2369 = vmatpush1.xpose.msra.mxu0 0.0
    %2370 = vmatprep.subr.mxu0 0.0
    %2371 = vmatpush1.xpose.msra.mxu0 0.0
    %2372 = vmatprep.subr.mxu0 0.0
    %2373 = vmatpush1.xpose.msra.mxu0 0.0
    %2374 = vmatprep.subr.mxu0 0.0
    %2375 = vmatpush1.xpose.msra.mxu0 0.0
    %2376 = vmatprep.subr.mxu0 0.0
    %2377 = vmatpush1.xpose.msra.mxu0 %v2344
    %2378 = vmatprep.subr.mxu0 0.0
    %2379 = vmatpush2.xpose.msra.mxu0 0.0
    %2380 = vmatprep.subr.mxu0 0.0
    %2381 = vmatpush2.xpose.msra.mxu0 0.0
    %2382 = vmatprep.subr.mxu0 0.0
    %2383 = vmatpush2.xpose.msra.mxu0 0.0
    %2384 = vmatprep.subr.mxu0 0.0
    %2385 = vmatpush2.xpose.msra.mxu0 0.0
    %2386 = vmatprep.subr.mxu0 0.0
    %2387 = vmatpush2.xpose.msra.mxu0 0.0
    %2388 = vmatprep.subr.mxu0 0.0
    %2389 = vmatpush2.xpose.msra.mxu0 0.0
    %2390 = vmatprep.subr.mxu0 0.0
    %2391 = vmatpush2.xpose.msra.mxu0 0.0
    %2392 = vmatprep.subr.mxu0 0.0
    %2393 = vmatpush2.xpose.msra.mxu0 0.0
    %2394 = vmatprep.subr.mxu0 0.0
    %2395 = vmatpush2.xpose.msra.mxu0 0.0
    %2396 = vmatprep.subr.mxu0 0.0
    %2397 = vmatpush2.xpose.msra.mxu0 0.0
    %2398 = vmatprep.subr.mxu0 0.0
    %2399 = vmatpush2.xpose.msra.mxu0 0.0
    %2400 = vmatprep.subr.mxu0 0.0
    %2401 = vmatpush2.xpose.msra.mxu0 0.0
    %2402 = vmatprep.subr.mxu0 0.0
    %2403 = vmatpush2.xpose.msra.mxu0 0.0
    %2404 = vmatprep.subr.mxu0 0.0
    %2405 = vmatpush2.xpose.msra.mxu0 0.0
    %2406 = vmatprep.subr.mxu0 0.0
    %2407 = vmatpush2.xpose.msra.mxu0 0.0
    %2408 = vmatprep.subr.mxu0 0.0
    %2409 = vmatpush2.xpose.msra.mxu0 0.0
    %2410 = vmatprep.mubr.f32.mxu0 0.0
    %2411 = vmatmul.mubr.f32.gmra.mxu0 %v2341
    %v2412 = vpop.f32.mrf.mxu0
    %v2413 = vadd.f32 0.0, %v2412
    %v2414 = vpop.f32.mrf.mxu0
    %2415 = vdwg.mxu0
    %v2416 = vsel %vm1699, %v2337, -inf
    %2417 = vmax.xlane.f32.xlu0 %v2416
    %v2418 = vpop.xlane.xlu0 %2417
    %v2419 = vsel %vm1699, %v2413, -inf
    %2420 = vmax.xlane.f32.xlu0 %v2419
    %v2421 = vpop.xlane.xlu0 %2420
    %v2422 = vsub.f32 %v2337, %v2418
    %v2423 = vsub.f32 %v2413, %v2421
    %v2424 = vmul.f32 %v2422, 1.442695
    %v2425 = vpow.pop %v2424
    %v2426 = vmul.f32 %v2423, 1.442695
    %v2427 = vpow.pop %v2426
    %v2428 = vsel %vm1699, %v2425, 0.0
    %2429 = vadd.xlane.f32.xlu0 %v2428
    %v2430 = vpop.xlane.xlu0 %2429
    %v2431 = vsel %vm1699, %v2427, 0.0
    %2432 = vadd.xlane.f32.xlu0 %v2431
    %v2433 = vpop.xlane.xlu0 %2432
    %v2434 = vrcp.pop %v2430
    %v2435 = vrcp.pop %v2433
    %v2436 = vmul.f32 %v2425, %v2434
    %v2437 = vmul.f32 %v2427, %v2435
    %v2439 = vsel %vm1699, %v2436, 0
    %2441 = vmatprep.subr.mxu0 0.0
    %2442 = vmatpush1.msra.mxu0 0.0
    %2443 = vmatprep.subr.mxu0 0.0
    %2444 = vmatpush1.msra.mxu0 0.0
    %2445 = vmatprep.subr.mxu0 0.0
    %2446 = vmatpush1.msra.mxu0 0.0
    %2447 = vmatprep.subr.mxu0 0.0
    %2448 = vmatpush1.msra.mxu0 0.0
    %2449 = vmatprep.subr.mxu0 0.0
    %2450 = vmatpush1.msra.mxu0 0.0
    %2451 = vmatprep.subr.mxu0 0.0
    %2452 = vmatpush1.msra.mxu0 0.0
    %2453 = vmatprep.subr.mxu0 0.0
    %2454 = vmatpush1.msra.mxu0 0.0
    %2455 = vmatprep.subr.mxu0 0.0
    %2456 = vmatpush1.msra.mxu0 0.0
    %2457 = vmatprep.subr.mxu0 0.0
    %2458 = vmatpush1.msra.mxu0 0.0
    %2459 = vmatprep.subr.mxu0 0.0
    %2460 = vmatpush1.msra.mxu0 0.0
    %2461 = vmatprep.subr.mxu0 0.0
    %2462 = vmatpush1.msra.mxu0 0.0
    %2463 = vmatprep.subr.mxu0 0.0
    %2464 = vmatpush1.msra.mxu0 0.0
    %2465 = vmatprep.subr.mxu0 0.0
    %2466 = vmatpush1.msra.mxu0 0.0
    %2467 = vmatprep.subr.mxu0 0.0
    %2468 = vmatpush1.msra.mxu0 0.0
    %2469 = vmatprep.subr.mxu0 0.0
    %2470 = vmatpush1.msra.mxu0 0.0
    %2471 = vmatprep.subr.mxu0 0.0
    %2472 = vmatpush1.msra.mxu0 %v2256
    %2473 = vmatprep.subr.mxu0 0.0
    %2474 = vmatpush2.msra.mxu0 0.0
    %2475 = vmatprep.subr.mxu0 0.0
    %2476 = vmatpush2.msra.mxu0 0.0
    %2477 = vmatprep.subr.mxu0 0.0
    %2478 = vmatpush2.msra.mxu0 0.0
    %2479 = vmatprep.subr.mxu0 0.0
    %2480 = vmatpush2.msra.mxu0 0.0
    %2481 = vmatprep.subr.mxu0 0.0
    %2482 = vmatpush2.msra.mxu0 0.0
    %2483 = vmatprep.subr.mxu0 0.0
    %2484 = vmatpush2.msra.mxu0 0.0
    %2485 = vmatprep.subr.mxu0 0.0
    %2486 = vmatpush2.msra.mxu0 0.0
    %2487 = vmatprep.subr.mxu0 0.0
    %2488 = vmatpush2.msra.mxu0 0.0
    %2489 = vmatprep.subr.mxu0 0.0
    %2490 = vmatpush2.msra.mxu0 0.0
    %2491 = vmatprep.subr.mxu0 0.0
    %2492 = vmatpush2.msra.mxu0 0.0
    %2493 = vmatprep.subr.mxu0 0.0
    %2494 = vmatpush2.msra.mxu0 0.0
    %2495 = vmatprep.subr.mxu0 0.0
    %2496 = vmatpush2.msra.mxu0 0.0
    %2497 = vmatprep.subr.mxu0 0.0
    %2498 = vmatpush2.msra.mxu0 0.0
    %2499 = vmatprep.subr.mxu0 0.0
    %2500 = vmatpush2.msra.mxu0 0.0
    %2501 = vmatprep.subr.mxu0 0.0
    %2502 = vmatpush2.msra.mxu0 0.0
    %2503 = vmatprep.subr.mxu0 0.0
    %2504 = vmatpush2.msra.mxu0 0.0
    %2505 = vmatprep.mubr.f32.mxu0 0.0
    %2506 = vmatmul.mubr.f32.gmra.mxu0 %v2439
    %v2507 = vpop.f32.mrf.mxu0
    %v2508 = vadd.f32 0.0, %v2507
    %v2509 = vpop.f32.mrf.mxu0
    %2510 = vdwg.mxu0
    %v2512 = vsel %vm1699, %v2437, 0
    %2514 = vmatprep.subr.mxu0 0.0
    %2515 = vmatpush1.msra.mxu0 0.0
    %2516 = vmatprep.subr.mxu0 0.0
    %2517 = vmatpush1.msra.mxu0 0.0
    %2518 = vmatprep.subr.mxu0 0.0
    %2519 = vmatpush1.msra.mxu0 0.0
    %2520 = vmatprep.subr.mxu0 0.0
    %2521 = vmatpush1.msra.mxu0 0.0
    %2522 = vmatprep.subr.mxu0 0.0
    %2523 = vmatpush1.msra.mxu0 0.0
    %2524 = vmatprep.subr.mxu0 0.0
    %2525 = vmatpush1.msra.mxu0 0.0
    %2526 = vmatprep.subr.mxu0 0.0
    %2527 = vmatpush1.msra.mxu0 0.0
    %2528 = vmatprep.subr.mxu0 0.0
    %2529 = vmatpush1.msra.mxu0 0.0
    %2530 = vmatprep.subr.mxu0 0.0
    %2531 = vmatpush1.msra.mxu0 0.0
    %2532 = vmatprep.subr.mxu0 0.0
    %2533 = vmatpush1.msra.mxu0 0.0
    %2534 = vmatprep.subr.mxu0 0.0
    %2535 = vmatpush1.msra.mxu0 0.0
    %2536 = vmatprep.subr.mxu0 0.0
    %2537 = vmatpush1.msra.mxu0 0.0
    %2538 = vmatprep.subr.mxu0 0.0
    %2539 = vmatpush1.msra.mxu0 0.0
    %2540 = vmatprep.subr.mxu0 0.0
    %2541 = vmatpush1.msra.mxu0 0.0
    %2542 = vmatprep.subr.mxu0 0.0
    %2543 = vmatpush1.msra.mxu0 0.0
    %2544 = vmatprep.subr.mxu0 0.0
    %2545 = vmatpush1.msra.mxu0 %v2261
    %2546 = vmatprep.subr.mxu0 0.0
    %2547 = vmatpush2.msra.mxu0 0.0
    %2548 = vmatprep.subr.mxu0 0.0
    %2549 = vmatpush2.msra.mxu0 0.0
    %2550 = vmatprep.subr.mxu0 0.0
    %2551 = vmatpush2.msra.mxu0 0.0
    %2552 = vmatprep.subr.mxu0 0.0
    %2553 = vmatpush2.msra.mxu0 0.0
    %2554 = vmatprep.subr.mxu0 0.0
    %2555 = vmatpush2.msra.mxu0 0.0
    %2556 = vmatprep.subr.mxu0 0.0
    %2557 = vmatpush2.msra.mxu0 0.0
    %2558 = vmatprep.subr.mxu0 0.0
    %2559 = vmatpush2.msra.mxu0 0.0
    %2560 = vmatprep.subr.mxu0 0.0
    %2561 = vmatpush2.msra.mxu0 0.0
    %2562 = vmatprep.subr.mxu0 0.0
    %2563 = vmatpush2.msra.mxu0 0.0
    %2564 = vmatprep.subr.mxu0 0.0
    %2565 = vmatpush2.msra.mxu0 0.0
    %2566 = vmatprep.subr.mxu0 0.0
    %2567 = vmatpush2.msra.mxu0 0.0
    %2568 = vmatprep.subr.mxu0 0.0
    %2569 = vmatpush2.msra.mxu0 0.0
    %2570 = vmatprep.subr.mxu0 0.0
    %2571 = vmatpush2.msra.mxu0 0.0
    %2572 = vmatprep.subr.mxu0 0.0
    %2573 = vmatpush2.msra.mxu0 0.0
    %2574 = vmatprep.subr.mxu0 0.0
    %2575 = vmatpush2.msra.mxu0 0.0
    %2576 = vmatprep.subr.mxu0 0.0
    %2577 = vmatpush2.msra.mxu0 0.0
    %2578 = vmatprep.mubr.f32.mxu0 0.0
    %2579 = vmatmul.mubr.f32.gmra.mxu0 %v2512
    %v2580 = vpop.f32.mrf.mxu0
    %v2581 = vadd.f32 0.0, %v2580
    %v2582 = vpop.f32.mrf.mxu0
    %2583 = vdwg.mxu0
    %v2584 = vld [vmem:[#allocation7 + $0x2a8] sm:$0xff]
    %v2585 = vld [vmem:[#allocation7 + $0x2b0] sm:$0xff]
    %v2586 = vld [vmem:[#allocation7 + $0x2b8] sm:$0xff]
    %v2587 = vld [vmem:[#allocation7 + $0x2c0] sm:$0xff]
    %v2588 = vld [vmem:[#allocation7 + $0x2c8] sm:$0x1]
    %v2589 = vlaneseq
    %v2590 = vshrl.u32 %v2589, 7
    %v2591 = vsub.s32 0, %v2590
    %v2592 = vrot.slane %v2588, %v2591
    %v2594 = vsel %vm76, %v2508, 0
    %v2597 = vsel %vm76, %v2581, 0
    %2599 = vmatprep.subr.mxu0 0.0
    %2600 = vmatpush1.msra.mxu0 0.0
    %2601 = vmatprep.subr.mxu0 0.0
    %2602 = vmatpush1.msra.mxu0 0.0
    %2603 = vmatprep.subr.mxu0 0.0
    %2604 = vmatpush1.msra.mxu0 0.0
    %2605 = vmatprep.subr.mxu0 0.0
    %2606 = vmatpush1.msra.mxu0 0.0
    %2607 = vmatprep.subr.mxu0 0.0
    %2608 = vmatpush1.msra.mxu0 0.0
    %2609 = vmatprep.subr.mxu0 0.0
    %2610 = vmatpush1.msra.mxu0 0.0
    %2611 = vmatprep.subr.mxu0 0.0
    %2612 = vmatpush1.msra.mxu0 0.0
    %2613 = vmatprep.subr.mxu0 0.0
    %2614 = vmatpush1.msra.mxu0 0.0
    %2615 = vmatprep.subr.mxu0 0.0
    %2616 = vmatpush1.msra.mxu0 0.0
    %2617 = vmatprep.subr.mxu0 0.0
    %2618 = vmatpush1.msra.mxu0 0.0
    %2619 = vmatprep.subr.mxu0 0.0
    %2620 = vmatpush1.msra.mxu0 0.0
    %2621 = vmatprep.subr.mxu0 0.0
    %2622 = vmatpush1.msra.mxu0 0.0
    %2623 = vmatprep.subr.mxu0 0.0
    %2624 = vmatpush1.msra.mxu0 %v2587
    %2625 = vmatprep.subr.mxu0 0.0
    %2626 = vmatpush1.msra.mxu0 %v2586
    %2627 = vmatprep.subr.mxu0 0.0
    %2628 = vmatpush1.msra.mxu0 %v2585
    %2629 = vmatprep.subr.mxu0 0.0
    %2630 = vmatpush1.msra.mxu0 %v2584
    %2631 = vmatprep.subr.mxu0 0.0
    %2632 = vmatpush2.msra.mxu0 0.0
    %2633 = vmatprep.subr.mxu0 0.0
    %2634 = vmatpush2.msra.mxu0 0.0
    %2635 = vmatprep.subr.mxu0 0.0
    %2636 = vmatpush2.msra.mxu0 0.0
    %2637 = vmatprep.subr.mxu0 0.0
    %2638 = vmatpush2.msra.mxu0 0.0
    %2639 = vmatprep.subr.mxu0 0.0
    %2640 = vmatpush2.msra.mxu0 0.0
    %2641 = vmatprep.subr.mxu0 0.0
    %2642 = vmatpush2.msra.mxu0 0.0
    %2643 = vmatprep.subr.mxu0 0.0
    %2644 = vmatpush2.msra.mxu0 0.0
    %2645 = vmatprep.subr.mxu0 0.0
    %2646 = vmatpush2.msra.mxu0 0.0
    %2647 = vmatprep.subr.mxu0 0.0
    %2648 = vmatpush2.msra.mxu0 0.0
    %2649 = vmatprep.subr.mxu0 0.0
    %2650 = vmatpush2.msra.mxu0 0.0
    %2651 = vmatprep.subr.mxu0 0.0
    %2652 = vmatpush2.msra.mxu0 0.0
    %2653 = vmatprep.subr.mxu0 0.0
    %2654 = vmatpush2.msra.mxu0 0.0
    %2655 = vmatprep.subr.mxu0 0.0
    %2656 = vmatpush2.msra.mxu0 0.0
    %2657 = vmatprep.subr.mxu0 0.0
    %2658 = vmatpush2.msra.mxu0 0.0
    %2659 = vmatprep.subr.mxu0 0.0
    %2660 = vmatpush2.msra.mxu0 0.0
    %2661 = vmatprep.subr.mxu0 0.0
    %2662 = vmatpush2.msra.mxu0 0.0
    %2663 = vmatprep.mubr.f32.mxu0 0.0
    %2664 = vmatmul.mubr.f32.gmra.mxu0 %v2594
    %v2665 = vpop.f32.mrf.mxu0
    %v2666 = vadd.f32 %v2592, %v2665
    %v2667 = vpop.f32.mrf.mxu0
    %2668 = vmatprep.mubr.f32.mxu0 0.0
    %2669 = vmatmul.mubr.f32.gmra.mxu0 %v2597
    %v2670 = vpop.f32.mrf.mxu0
    %v2671 = vadd.f32 %v2592, %v2670
    %v2672 = vpop.f32.mrf.mxu0
    %2673 = vdwg.mxu0
    %v2674 = vadd.f32 %v1998, %v2666
    %v2675 = vadd.f32 %v1999, %v2671
    %v2676 = vld [vmem:[#allocation7 + $0x2d0] sm:$0x1]
    %v2677 = vld [vmem:[#allocation7 + $0x2d8] sm:$0x1]
    %v2678 = vsel %vm76, %v2674, 0.0
    %2679 = vadd.xlane.f32.xlu0 %v2678
    %v2680 = vpop.xlane.xlu0 %2679
    %v2681 = vsel %vm76, %v2675, 0.0
    %2682 = vadd.xlane.f32.xlu0 %v2681
    %v2683 = vpop.xlane.xlu0 %2682
    %v2684 = vmul.f32 %v2680, %v1027
    %v2685 = vmul.f32 %v2683, %v1027
    %v2686 = vsub.f32 %v2674, %v2684
    %v2687 = vsub.f32 %v2675, %v2685
    %v2688 = vmul.f32 %v2686, %v2686
    %v2689 = vmul.f32 %v2687, %v2687
    %v2690 = vsel %vm76, %v2688, 0.0
    %2691 = vadd.xlane.f32.xlu0 %v2690
    %v2692 = vpop.xlane.xlu0 %2691
    %v2693 = vsel %vm76, %v2689, 0.0
    %2694 = vadd.xlane.f32.xlu0 %v2693
    %v2695 = vpop.xlane.xlu0 %2694
    %v2696 = vmul.f32 %v2692, %v1027
    %v2697 = vmul.f32 %v2695, %v1027
    %v2698 = vadd.f32 %v2696, 1e-05
    %v2699 = vadd.f32 %v2697, 1e-05
    %v2700 = vrsqrt.pop %v2698
    %v2701 = vrsqrt.pop %v2699
    %v2702 = vmul.f32 %v2686, %v2700
    %v2703 = vmul.f32 %v2687, %v2701
    %v2704 = vlaneseq
    %v2705 = vshrl.u32 %v2704, 7
    %v2706 = vsub.s32 0, %v2705
    %v2707 = vrot.slane %v2676, %v2706
    %v2708 = vmul.f32 %v2702, %v2707
    %v2709 = vmul.f32 %v2703, %v2707
    %v2710 = vlaneseq
    %v2711 = vshrl.u32 %v2710, 7
    %v2712 = vsub.s32 0, %v2711
    %v2713 = vrot.slane %v2677, %v2712
    %v2714 = vadd.f32 %v2708, %v2713
    %v2715 = vadd.f32 %v2709, %v2713
    %v2716 = vld [vmem:[#allocation7 + $0x2e0] sm:$0xff]
    %v2717 = vld [vmem:[#allocation7 + $0x2e8] sm:$0xff]
    %v2718 = vld [vmem:[#allocation7 + $0x2f0] sm:$0xff]
    %v2719 = vld [vmem:[#allocation7 + $0x2f8] sm:$0xff]
    %v2720 = vld [vmem:[#allocation7 + $0x300] sm:$0x1]
    %v2721 = vlaneseq
    %v2722 = vshrl.u32 %v2721, 7
    %v2723 = vsub.s32 0, %v2722
    %v2724 = vrot.slane %v2720, %v2723
    %v2726 = vsel %vm76, %v2714, 0
    %v2729 = vsel %vm76, %v2715, 0
    %2731 = vmatprep.subr.mxu0 0.0
    %2732 = vmatpush1.msra.mxu0 0.0
    %2733 = vmatprep.subr.mxu0 0.0
    %2734 = vmatpush1.msra.mxu0 0.0
    %2735 = vmatprep.subr.mxu0 0.0
    %2736 = vmatpush1.msra.mxu0 0.0
    %2737 = vmatprep.subr.mxu0 0.0
    %2738 = vmatpush1.msra.mxu0 0.0
    %2739 = vmatprep.subr.mxu0 0.0
    %2740 = vmatpush1.msra.mxu0 0.0
    %2741 = vmatprep.subr.mxu0 0.0
    %2742 = vmatpush1.msra.mxu0 0.0
    %2743 = vmatprep.subr.mxu0 0.0
    %2744 = vmatpush1.msra.mxu0 0.0
    %2745 = vmatprep.subr.mxu0 0.0
    %2746 = vmatpush1.msra.mxu0 0.0
    %2747 = vmatprep.subr.mxu0 0.0
    %2748 = vmatpush1.msra.mxu0 0.0
    %2749 = vmatprep.subr.mxu0 0.0
    %2750 = vmatpush1.msra.mxu0 0.0
    %2751 = vmatprep.subr.mxu0 0.0
    %2752 = vmatpush1.msra.mxu0 0.0
    %2753 = vmatprep.subr.mxu0 0.0
    %2754 = vmatpush1.msra.mxu0 0.0
    %2755 = vmatprep.subr.mxu0 0.0
    %2756 = vmatpush1.msra.mxu0 %v2719
    %2757 = vmatprep.subr.mxu0 0.0
    %2758 = vmatpush1.msra.mxu0 %v2718
    %2759 = vmatprep.subr.mxu0 0.0
    %2760 = vmatpush1.msra.mxu0 %v2717
    %2761 = vmatprep.subr.mxu0 0.0
    %2762 = vmatpush1.msra.mxu0 %v2716
    %2763 = vmatprep.subr.mxu0 0.0
    %2764 = vmatpush2.msra.mxu0 0.0
    %2765 = vmatprep.subr.mxu0 0.0
    %2766 = vmatpush2.msra.mxu0 0.0
    %2767 = vmatprep.subr.mxu0 0.0
    %2768 = vmatpush2.msra.mxu0 0.0
    %2769 = vmatprep.subr.mxu0 0.0
    %2770 = vmatpush2.msra.mxu0 0.0
    %2771 = vmatprep.subr.mxu0 0.0
    %2772 = vmatpush2.msra.mxu0 0.0
    %2773 = vmatprep.subr.mxu0 0.0
    %2774 = vmatpush2.msra.mxu0 0.0
    %2775 = vmatprep.subr.mxu0 0.0
    %2776 = vmatpush2.msra.mxu0 0.0
    %2777 = vmatprep.subr.mxu0 0.0
    %2778 = vmatpush2.msra.mxu0 0.0
    %2779 = vmatprep.subr.mxu0 0.0
    %2780 = vmatpush2.msra.mxu0 0.0
    %2781 = vmatprep.subr.mxu0 0.0
    %2782 = vmatpush2.msra.mxu0 0.0
    %2783 = vmatprep.subr.mxu0 0.0
    %2784 = vmatpush2.msra.mxu0 0.0
    %2785 = vmatprep.subr.mxu0 0.0
    %2786 = vmatpush2.msra.mxu0 0.0
    %2787 = vmatprep.subr.mxu0 0.0
    %2788 = vmatpush2.msra.mxu0 0.0
    %2789 = vmatprep.subr.mxu0 0.0
    %2790 = vmatpush2.msra.mxu0 0.0
    %2791 = vmatprep.subr.mxu0 0.0
    %2792 = vmatpush2.msra.mxu0 0.0
    %2793 = vmatprep.subr.mxu0 0.0
    %2794 = vmatpush2.msra.mxu0 0.0
    %2795 = vmatprep.mubr.f32.mxu0 0.0
    %2796 = vmatmul.mubr.f32.gmra.mxu0 %v2726
    %v2797 = vpop.f32.mrf.mxu0
    %v2798 = vadd.f32 %v2724, %v2797
    %v2799 = vpop.f32.mrf.mxu0
    %2800 = vmatprep.mubr.f32.mxu0 0.0
    %2801 = vmatmul.mubr.f32.gmra.mxu0 %v2729
    %v2802 = vpop.f32.mrf.mxu0
    %v2803 = vadd.f32 %v2724, %v2802
    %v2804 = vpop.f32.mrf.mxu0
    %2805 = vdwg.mxu0
    %v2806 = vmax.f32 %v2798, 0.0
    %v2807 = vmax.f32 %v2803, 0.0
    %v2808 = vld [vmem:[#allocation7 + $0x308] sm:$0xff]
    %v2809 = vld [vmem:[#allocation7 + $0x310] sm:$0xff]
    %v2810 = vld [vmem:[#allocation7 + $0x318] sm:$0xff]
    %v2811 = vld [vmem:[#allocation7 + $0x320] sm:$0xff]
    %v2812 = vld [vmem:[#allocation7 + $0x328] sm:$0xff]
    %v2813 = vld [vmem:[#allocation7 + $0x330] sm:$0xff]
    %v2814 = vld [vmem:[#allocation7 + $0x338] sm:$0xff]
    %v2815 = vld [vmem:[#allocation7 + $0x340] sm:$0xff]
    %v2816 = vld [vmem:[#allocation7 + $0x348] sm:$0x1]
    %v2817 = vlaneseq
    %v2818 = vshrl.u32 %v2817, 7
    %v2819 = vsub.s32 0, %v2818
    %v2820 = vrot.slane %v2816, %v2819
    %v2822 = vsel %vm1165, %v2806, 0
    %v2825 = vsel %vm1165, %v2807, 0
    %2827 = vmatprep.subr.mxu0 0.0
    %2828 = vmatpush1.msra.mxu0 0.0
    %2829 = vmatprep.subr.mxu0 0.0
    %2830 = vmatpush1.msra.mxu0 0.0
    %2831 = vmatprep.subr.mxu0 0.0
    %2832 = vmatpush1.msra.mxu0 0.0
    %2833 = vmatprep.subr.mxu0 0.0
    %2834 = vmatpush1.msra.mxu0 0.0
    %2835 = vmatprep.subr.mxu0 0.0
    %2836 = vmatpush1.msra.mxu0 0.0
    %2837 = vmatprep.subr.mxu0 0.0
    %2838 = vmatpush1.msra.mxu0 0.0
    %2839 = vmatprep.subr.mxu0 0.0
    %2840 = vmatpush1.msra.mxu0 0.0
    %2841 = vmatprep.subr.mxu0 0.0
    %2842 = vmatpush1.msra.mxu0 0.0
    %2843 = vmatprep.subr.mxu0 0.0
    %2844 = vmatpush1.msra.mxu0 %v2815
    %2845 = vmatprep.subr.mxu0 0.0
    %2846 = vmatpush1.msra.mxu0 %v2814
    %2847 = vmatprep.subr.mxu0 0.0
    %2848 = vmatpush1.msra.mxu0 %v2813
    %2849 = vmatprep.subr.mxu0 0.0
    %2850 = vmatpush1.msra.mxu0 %v2812
    %2851 = vmatprep.subr.mxu0 0.0
    %2852 = vmatpush1.msra.mxu0 %v2811
    %2853 = vmatprep.subr.mxu0 0.0
    %2854 = vmatpush1.msra.mxu0 %v2810
    %2855 = vmatprep.subr.mxu0 0.0
    %2856 = vmatpush1.msra.mxu0 %v2809
    %2857 = vmatprep.subr.mxu0 0.0
    %2858 = vmatpush1.msra.mxu0 %v2808
    %2859 = vmatprep.subr.mxu0 0.0
    %2860 = vmatpush2.msra.mxu0 0.0
    %2861 = vmatprep.subr.mxu0 0.0
    %2862 = vmatpush2.msra.mxu0 0.0
    %2863 = vmatprep.subr.mxu0 0.0
    %2864 = vmatpush2.msra.mxu0 0.0
    %2865 = vmatprep.subr.mxu0 0.0
    %2866 = vmatpush2.msra.mxu0 0.0
    %2867 = vmatprep.subr.mxu0 0.0
    %2868 = vmatpush2.msra.mxu0 0.0
    %2869 = vmatprep.subr.mxu0 0.0
    %2870 = vmatpush2.msra.mxu0 0.0
    %2871 = vmatprep.subr.mxu0 0.0
    %2872 = vmatpush2.msra.mxu0 0.0
    %2873 = vmatprep.subr.mxu0 0.0
    %2874 = vmatpush2.msra.mxu0 0.0
    %2875 = vmatprep.subr.mxu0 0.0
    %2876 = vmatpush2.msra.mxu0 0.0
    %2877 = vmatprep.subr.mxu0 0.0
    %2878 = vmatpush2.msra.mxu0 0.0
    %2879 = vmatprep.subr.mxu0 0.0
    %2880 = vmatpush2.msra.mxu0 0.0
    %2881 = vmatprep.subr.mxu0 0.0
    %2882 = vmatpush2.msra.mxu0 0.0
    %2883 = vmatprep.subr.mxu0 0.0
    %2884 = vmatpush2.msra.mxu0 0.0
    %2885 = vmatprep.subr.mxu0 0.0
    %2886 = vmatpush2.msra.mxu0 0.0
    %2887 = vmatprep.subr.mxu0 0.0
    %2888 = vmatpush2.msra.mxu0 0.0
    %2889 = vmatprep.subr.mxu0 0.0
    %2890 = vmatpush2.msra.mxu0 0.0
    %2891 = vmatprep.mubr.f32.mxu0 0.0
    %2892 = vmatmul.mubr.f32.gmra.mxu0 %v2822
    %v2893 = vpop.f32.mrf.mxu0
    %v2894 = vadd.f32 %v2820, %v2893
    %v2895 = vpop.f32.mrf.mxu0
    %2896 = vmatprep.mubr.f32.mxu0 0.0
    %2897 = vmatmul.mubr.f32.gmra.mxu0 %v2825
    %v2898 = vpop.f32.mrf.mxu0
    %v2899 = vadd.f32 %v2820, %v2898
    %v2900 = vpop.f32.mrf.mxu0
    %2901 = vdwg.mxu0
    %v2902 = vadd.f32 %v2714, %v2894
    %v2903 = vadd.f32 %v2715, %v2899
    %v2904 = vld [vmem:[#allocation7 + $0x350] sm:$0x1]
    %v2905 = vld [vmem:[#allocation7 + $0x358] sm:$0x1]
    %v2906 = vsel %vm76, %v2902, 0.0
    %2907 = vadd.xlane.f32.xlu0 %v2906
    %v2908 = vpop.xlane.xlu0 %2907
    %v2909 = vsel %vm76, %v2903, 0.0
    %2910 = vadd.xlane.f32.xlu0 %v2909
    %v2911 = vpop.xlane.xlu0 %2910
    %v2912 = vmul.f32 %v2908, %v1027
    %v2913 = vmul.f32 %v2911, %v1027
    %v2914 = vsub.f32 %v2902, %v2912
    %v2915 = vsub.f32 %v2903, %v2913
    %v2916 = vmul.f32 %v2914, %v2914
    %v2917 = vmul.f32 %v2915, %v2915
    %v2918 = vsel %vm76, %v2916, 0.0
    %2919 = vadd.xlane.f32.xlu0 %v2918
    %v2920 = vpop.xlane.xlu0 %2919
    %v2921 = vsel %vm76, %v2917, 0.0
    %2922 = vadd.xlane.f32.xlu0 %v2921
    %v2923 = vpop.xlane.xlu0 %2922
    %v2924 = vmul.f32 %v2920, %v1027
    %v2925 = vmul.f32 %v2923, %v1027
    %v2926 = vadd.f32 %v2924, 1e-05
    %v2927 = vadd.f32 %v2925, 1e-05
    %v2928 = vrsqrt.pop %v2926
    %v2929 = vrsqrt.pop %v2927
    %v2930 = vmul.f32 %v2914, %v2928
    %v2931 = vmul.f32 %v2915, %v2929
    %v2932 = vlaneseq
    %v2933 = vshrl.u32 %v2932, 7
    %v2934 = vsub.s32 0, %v2933
    %v2935 = vrot.slane %v2904, %v2934
    %v2936 = vmul.f32 %v2930, %v2935
    %v2937 = vmul.f32 %v2931, %v2935
    %v2938 = vlaneseq
    %v2939 = vshrl.u32 %v2938, 7
    %v2940 = vsub.s32 0, %v2939
    %v2941 = vrot.slane %v2905, %v2940
    %v2942 = vadd.f32 %v2936, %v2941
    %v2943 = vadd.f32 %v2937, %v2941
    %v2944 = vld [vmem:[#allocation7 + $0x360] sm:$0xff]
    %v2945 = vld [vmem:[#allocation7 + $0x368] sm:$0xff]
    %v2946 = vld [vmem:[#allocation7 + $0x370] sm:$0xff]
    %v2947 = vld [vmem:[#allocation7 + $0x378] sm:$0xff]
    %v2948 = vld [vmem:[#allocation7 + $0x380] sm:$0x1]
    %v2949 = vlaneseq
    %v2950 = vshrl.u32 %v2949, 7
    %v2951 = vsub.s32 0, %v2950
    %v2952 = vrot.slane %v2948, %v2951
    %v2954 = vsel %vm76, %v2942, 0
    %v2957 = vsel %vm76, %v2943, 0
    %2959 = vmatprep.subr.mxu0 0.0
    %2960 = vmatpush1.msra.mxu0 0.0
    %2961 = vmatprep.subr.mxu0 0.0
    %2962 = vmatpush1.msra.mxu0 0.0
    %2963 = vmatprep.subr.mxu0 0.0
    %2964 = vmatpush1.msra.mxu0 0.0
    %2965 = vmatprep.subr.mxu0 0.0
    %2966 = vmatpush1.msra.mxu0 0.0
    %2967 = vmatprep.subr.mxu0 0.0
    %2968 = vmatpush1.msra.mxu0 0.0
    %2969 = vmatprep.subr.mxu0 0.0
    %2970 = vmatpush1.msra.mxu0 0.0
    %2971 = vmatprep.subr.mxu0 0.0
    %2972 = vmatpush1.msra.mxu0 0.0
    %2973 = vmatprep.subr.mxu0 0.0
    %2974 = vmatpush1.msra.mxu0 0.0
    %2975 = vmatprep.subr.mxu0 0.0
    %2976 = vmatpush1.msra.mxu0 0.0
    %2977 = vmatprep.subr.mxu0 0.0
    %2978 = vmatpush1.msra.mxu0 0.0
    %2979 = vmatprep.subr.mxu0 0.0
    %2980 = vmatpush1.msra.mxu0 0.0
    %2981 = vmatprep.subr.mxu0 0.0
    %2982 = vmatpush1.msra.mxu0 0.0
    %2983 = vmatprep.subr.mxu0 0.0
    %2984 = vmatpush1.msra.mxu0 %v2947
    %2985 = vmatprep.subr.mxu0 0.0
    %2986 = vmatpush1.msra.mxu0 %v2946
    %2987 = vmatprep.subr.mxu0 0.0
    %2988 = vmatpush1.msra.mxu0 %v2945
    %2989 = vmatprep.subr.mxu0 0.0
    %2990 = vmatpush1.msra.mxu0 %v2944
    %2991 = vmatprep.subr.mxu0 0.0
    %2992 = vmatpush2.msra.mxu0 0.0
    %2993 = vmatprep.subr.mxu0 0.0
    %2994 = vmatpush2.msra.mxu0 0.0
    %2995 = vmatprep.subr.mxu0 0.0
    %2996 = vmatpush2.msra.mxu0 0.0
    %2997 = vmatprep.subr.mxu0 0.0
    %2998 = vmatpush2.msra.mxu0 0.0
    %2999 = vmatprep.subr.mxu0 0.0
    %3000 = vmatpush2.msra.mxu0 0.0
    %3001 = vmatprep.subr.mxu0 0.0
    %3002 = vmatpush2.msra.mxu0 0.0
    %3003 = vmatprep.subr.mxu0 0.0
    %3004 = vmatpush2.msra.mxu0 0.0
    %3005 = vmatprep.subr.mxu0 0.0
    %3006 = vmatpush2.msra.mxu0 0.0
    %3007 = vmatprep.subr.mxu0 0.0
    %3008 = vmatpush2.msra.mxu0 0.0
    %3009 = vmatprep.subr.mxu0 0.0
    %3010 = vmatpush2.msra.mxu0 0.0
    %3011 = vmatprep.subr.mxu0 0.0
    %3012 = vmatpush2.msra.mxu0 0.0
    %3013 = vmatprep.subr.mxu0 0.0
    %3014 = vmatpush2.msra.mxu0 0.0
    %3015 = vmatprep.subr.mxu0 0.0
    %3016 = vmatpush2.msra.mxu0 0.0
    %3017 = vmatprep.subr.mxu0 0.0
    %3018 = vmatpush2.msra.mxu0 0.0
    %3019 = vmatprep.subr.mxu0 0.0
    %3020 = vmatpush2.msra.mxu0 0.0
    %3021 = vmatprep.subr.mxu0 0.0
    %3022 = vmatpush2.msra.mxu0 0.0
    %3023 = vmatprep.mubr.f32.mxu0 0.0
    %3024 = vmatmul.mubr.f32.gmra.mxu0 %v2954
    %v3025 = vpop.f32.mrf.mxu0
    %v3026 = vadd.f32 %v2952, %v3025
    %v3027 = vpop.f32.mrf.mxu0
    %3028 = vmatprep.mubr.f32.mxu0 0.0
    %3029 = vmatmul.mubr.f32.gmra.mxu0 %v2957
    %v3030 = vpop.f32.mrf.mxu0
    %v3031 = vadd.f32 %v2952, %v3030
    %v3032 = vpop.f32.mrf.mxu0
    %3033 = vdwg.mxu0
    %3034 = vst [vmem:[#allocation8] sm:$0xff] %v3026
    %3035 = vst [vmem:[#allocation8 + $0x8] sm:$0xff] %v3031
    // Predicated region
    $region26: #{lstr_forward.1} parent=1 // pred_check
      _
    $region27: #{lstr_forward.1} parent=1 // pred_check_branch
      %3037 = sbr.rel (0) target = $region29
    $region28: #{lstr_forward.1} parent=1 // pred_region
      %s3039 = ssub.s32 256, 256
      %3040 = vsyncadd [#allocation4], %s3039
      %s3041 = sshll.u32 [#allocation8], 4
      %s3042 = int_to_ptr.vmem [resolvable:$true] %s3041
      %3047 = dma.vmem_to_hbm [thread:$0]  %s3042, 256, %s3, [#allocation4], 128, 128, 8
    $region29: #{lstr_forward.1} parent=1 // pred_fallthru
      _
    // Predicated region
    $region30: #{lstr_forward.1} parent=1 // pred_check
      _
    $region31: #{lstr_forward.1} parent=1 // pred_check_branch
      %3049 = sbr.rel (0) target = $region33
    $region32: #{lstr_forward.1} parent=1 // pred_region
      %3050 = dma.done [#allocation4], 256
    $region33: #{lstr_forward.1} parent=1 // pred_fallthru
      _
    %3051 = vsyncpa [#allocation3], 1
    %3052 = vsyncpa [#allocation6], 1
    %3053 = vsyncpa [#allocation4], 1

</llo_original>
